<compile_context>
chip_gen: v6e
topology: v6e:2x2x1
jax: 0.10.0
libtpu: 0.0.40
codegen_flags: <defaults>
</compile_context>

<pallas_src>
import functools

import jax
import jax.numpy as jnp
import numpy as np
from jax import lax
from jax.experimental import pallas as pl
from jax.experimental.pallas import tpu as pltpu


# ------------------------------ helpers -------------------------------------

def _round_up(x, m):
    return (x + m - 1) // m * m


def choose_time_block(T, Bp=8, target_rows=256, max_tb=64):
    """Pick Tb so the block input projection has M = Tb*Bp ~ target_rows MXU rows.

    T that is not a multiple of Tb is handled by padding the sequence (see
    lstm_model_forward); no divisor fallback is needed.
    """
    return max(1, min(T, max_tb, max(1, target_rows // Bp)))


def _vmem_limit(nbytes):
    """Explicit scoped-VMEM limit: 2x the static estimate, clamped to [8, 64] MiB."""
    return int(min(max(2 * nbytes, 8 * 1024 * 1024), 64 * 1024 * 1024))


# ----------------------------- Pallas kernels -------------------------------

def _load_weights_once(tb, wih_hbm, whh_hbm, wih_v, whh_v, dma_sems, h_scr, c_scr):
    """First grid step: DMA the layer weights into resident (single-buffer) VMEM
    scratch and zero the carried LSTM state."""
    @pl.when(tb == 0)
    def _():
        cp_ih = pltpu.make_async_copy(wih_hbm, wih_v, dma_sems.at[0])
        cp_hh = pltpu.make_async_copy(whh_hbm, whh_v, dma_sems.at[1])
        cp_ih.start()
        cp_hh.start()
        cp_ih.wait()
        cp_hh.wait()
        h_scr[...] = jnp.zeros_like(h_scr)
        c_scr[...] = jnp.zeros_like(c_scr)


def _lstm_step(h, c, g_x, whh_v, Hp):
    """One LSTM step: recurrent matmul (bf16 operands, f32 acc) + f32 gates.

    Gate order (PyTorch): i, f, g, o.  Gate slices are lane-aligned (Hp % 128 == 0).
    """
    g = g_x + jnp.dot(h.astype(jnp.bfloat16), whh_v[...],
                      preferred_element_type=jnp.float32)
    i_g = jax.nn.sigmoid(g[:, 0 * Hp:1 * Hp])
    f_g = jax.nn.sigmoid(g[:, 1 * Hp:2 * Hp])
    g_g = jnp.tanh(g[:, 2 * Hp:3 * Hp])
    o_g = jax.nn.sigmoid(g[:, 3 * Hp:4 * Hp])
    c = f_g * c + i_g * g_g
    h = o_g * jnp.tanh(c)
    return h, c


def lstm_seq_layer_kernel(x_ref, wih_hbm, whh_hbm, b_ref, hseq_ref,
                          wih_v, whh_v, gx_v, h_scr, c_scr, dma_sems,
                          *, Tb, Bp, Hp, unroll):
    """Intermediate LSTM layer: emits the full hidden sequence as a 2-D slab.

    x_ref   : (Tb*Bp, Din_p) f32   time block (time-major, batch padded)
    wih_hbm : (Din_p, 4Hp) bf16    HBM ref (copied once into wih_v)
    whh_hbm : (Hp, 4Hp)  bf16      HBM ref (copied once into whh_v)
    b_ref   : (1, 4Hp)   f32       combined bias (b_ih + b_hh), gate-padded
    hseq_ref: (Tb*Bp, Hp) f32      hidden-sequence output block
    """
    tb = pl.program_id(0)
    _load_weights_once(tb, wih_hbm, whh_hbm, wih_v, whh_v, dma_sems, h_scr, c_scr)

    # Whole-block input projection: ONE bf16 MXU matmul for all Tb steps.
    gx_v[...] = (
        jnp.dot(x_ref[...].astype(jnp.bfloat16), wih_v[...],
                preferred_element_type=jnp.float32)
        + b_ref[...]
    )

    def step(t, carry):
        h, c = carry
        off = pl.multiple_of(t * Bp, Bp)
        h, c = _lstm_step(h, c, gx_v[pl.ds(off, Bp), :], whh_v, Hp)
        hseq_ref[pl.ds(off, Bp), :] = h
        return h, c

    h, c = lax.fori_loop(0, Tb, step, (h_scr[...], c_scr[...]), unroll=unroll)
    h_scr[...] = h
    c_scr[...] = c


def lstm_last_layer_kernel(x_ref, wih_hbm, whh_hbm, b_ref, wfc_ref, bfc_ref,
                           out_ref, wih_v, whh_v, gx_v, h_scr, c_scr, dma_sems,
                           *, Tb, Bp, Hp, last_t):
    """Top LSTM layer with the fc projection fused in.

    The hidden sequence is never materialized.  In the final grid block the
    recurrent loop stops at the real last time step (sequence padding is only at
    the end), and out_ref = fc(h_{T-1}) is written once.
    """
    tb = pl.program_id(0)
    nb = pl.num_programs(0)
    _load_weights_once(tb, wih_hbm, whh_hbm, wih_v, whh_v, dma_sems, h_scr, c_scr)

    gx_v[...] = (
        jnp.dot(x_ref[...].astype(jnp.bfloat16), wih_v[...],
                preferred_element_type=jnp.float32)
        + b_ref[...]
    )

    # Only real (non-padded) time steps count in the final block.
    n_steps = jnp.where(tb == nb - 1, last_t + 1, Tb)

    def step(t, carry):
        h, c = carry
        off = pl.multiple_of(t * Bp, Bp)
        return _lstm_step(h, c, gx_v[pl.ds(off, Bp), :], whh_v, Hp)

    h, c = lax.fori_loop(0, n_steps, step, (h_scr[...], c_scr[...]))
    h_scr[...] = h
    c_scr[...] = c

    @pl.when(tb == nb - 1)
    def _():
        out_ref[...] = (
            jnp.dot(h.astype(jnp.bfloat16), wfc_ref[...],
                    preferred_element_type=jnp.float32)
            + bfc_ref[...]
        )


# ------------------------------ wrappers -------------------------------------

def run_lstm_seq_layer(x2d, w_ihT, w_hhT, b, Tb, Bp):
    """x2d: (Tp*Bp, Din_p) f32 -> (Tp*Bp, Hp) f32 hidden sequence slab."""
    TB, Dinp = x2d.shape
    Hp4 = w_ihT.shape[1]
    Hp = Hp4 // 4
    blk = Tb * Bp
    n_blocks = TB // blk

    need = (2 * blk * Dinp * 4 + 2 * blk * Hp * 4 + 2 * Hp4 * 4
            + Dinp * Hp4 * 2 + Hp * Hp4 * 2 + blk * Hp4 * 4 + 2 * Bp * Hp * 4)

    kernel = functools.partial(lstm_seq_layer_kernel, Tb=Tb, Bp=Bp, Hp=Hp,
                               unroll=(Tb <= 16))
    return pl.pallas_call(
        kernel,
        out_shape=jax.ShapeDtypeStruct((TB, Hp), jnp.float32),
        grid_spec=pltpu.PrefetchScalarGridSpec(
            num_scalar_prefetch=0,
            grid=(n_blocks,),
            in_specs=[
                pl.BlockSpec((blk, Dinp), lambda tb: (tb, 0)),
                pl.BlockSpec(memory_space=pl.ANY),     # w_ihT: resident, copied once
                pl.BlockSpec(memory_space=pl.ANY),     # w_hhT: resident, copied once
                pl.BlockSpec((1, Hp4), lambda tb: (0, 0)),
            ],
            out_specs=pl.BlockSpec((blk, Hp), lambda tb: (tb, 0)),
            scratch_shapes=[
                pltpu.VMEM((Dinp, Hp4), jnp.bfloat16),   # resident w_ihT
                pltpu.VMEM((Hp, Hp4), jnp.bfloat16),     # resident w_hhT
                pltpu.VMEM((blk, Hp4), jnp.float32),     # gx (block gate preacts)
                pltpu.VMEM((Bp, Hp), jnp.float32),       # h
                pltpu.VMEM((Bp, Hp), jnp.float32),       # c
                pltpu.SemaphoreType.DMA((2,)),
            ],
        ),
        compiler_params=pltpu.CompilerParams(
            dimension_semantics=("arbitrary",),          # recurrence is sequential
            vmem_limit_bytes=_vmem_limit(need),
        ),
    )(x2d, w_ihT, w_hhT, b)


def run_lstm_last_layer(x2d, w_ihT, w_hhT, b, w_fcT, b_fc, Tb, Bp, last_t):
    """x2d: (Tp*Bp, Din_p) f32 -> (Bp, Op) f32 = fc(hidden state at real step T-1)."""
    TB, Dinp = x2d.shape
    Hp4 = w_ihT.shape[1]
    Hp = Hp4 // 4
    Op = w_fcT.shape[1]
    blk = Tb * Bp
    n_blocks = TB // blk

    need = (2 * blk * Dinp * 4 + 2 * Bp * Op * 4 + 2 * Hp4 * 4
            + Dinp * Hp4 * 2 + Hp * Hp4 * 2 + 2 * Hp * Op * 2 + 2 * Op * 4
            + blk * Hp4 * 4 + 2 * Bp * Hp * 4)

    kernel = functools.partial(lstm_last_layer_kernel, Tb=Tb, Bp=Bp, Hp=Hp,
                               last_t=last_t)
    return pl.pallas_call(
        kernel,
        out_shape=jax.ShapeDtypeStruct((Bp, Op), jnp.float32),
        grid_spec=pltpu.PrefetchScalarGridSpec(
            num_scalar_prefetch=0,
            grid=(n_blocks,),
            in_specs=[
                pl.BlockSpec((blk, Dinp), lambda tb: (tb, 0)),
                pl.BlockSpec(memory_space=pl.ANY),     # w_ihT
                pl.BlockSpec(memory_space=pl.ANY),     # w_hhT
                pl.BlockSpec((1, Hp4), lambda tb: (0, 0)),
                pl.BlockSpec((Hp, Op), lambda tb: (0, 0)),
                pl.BlockSpec((1, Op), lambda tb: (0, 0)),
            ],
            out_specs=pl.BlockSpec((Bp, Op), lambda tb: (0, 0)),
            scratch_shapes=[
                pltpu.VMEM((Dinp, Hp4), jnp.bfloat16),
                pltpu.VMEM((Hp, Hp4), jnp.bfloat16),
                pltpu.VMEM((blk, Hp4), jnp.float32),
                pltpu.VMEM((Bp, Hp), jnp.float32),
                pltpu.VMEM((Bp, Hp), jnp.float32),
                pltpu.SemaphoreType.DMA((2,)),
            ],
        ),
        compiler_params=pltpu.CompilerParams(
            dimension_semantics=("arbitrary",),
            vmem_limit_bytes=_vmem_limit(need),
        ),
    )(x2d, w_ihT, w_hhT, b, w_fcT, b_fc)


@functools.partial(jax.jit, static_argnames=("num_layers", "Tb", "output_size"))
def lstm_model_forward(x_btd, kparams, num_layers, Tb, output_size):
    """Stacked LSTM over (B, T, D) batch-first input + fused fc on the last step."""
    B, T, _D = x_btd.shape
    Dp = kparams["lstm"][0]["w_ihT"].shape[0]
    Bp = _round_up(B, 8)
    Tp = _round_up(T, Tb)            # pad the sequence at the END; padded steps
    last_t = (T - 1) % Tb            # never influence the state at real step T-1.

    # Pad (time -> multiple of Tb, batch -> 8 sublanes, features -> 128 lanes) and
    # flatten to a time-major 2-D slab (Tp*Bp, Dp): all kernel blocks lane-dense.
    x_tbd = jnp.transpose(x_btd, (1, 0, 2))                       # (T, B, D)
    x_p = jnp.zeros((Tp, Bp, Dp), jnp.float32).at[:T, :B, :x_btd.shape[2]].set(x_tbd)
    x2d = x_p.reshape(Tp * Bp, Dp)

    for layer in range(num_layers - 1):
        p = kparams["lstm"][layer]
        x2d = run_lstm_seq_layer(x2d, p["w_ihT"], p["w_hhT"], p["b"], Tb, Bp)

    p = kparams["lstm"][num_layers - 1]
    out_p = run_lstm_last_layer(
        x2d, p["w_ihT"], p["w_hhT"], p["b"],
        kparams["fc"]["wT"], kparams["fc"]["b"], Tb, Bp, last_t)   # (Bp, Op)
    return out_p[:B, :output_size]


# --------------------------- reference (pure JAX) ----------------------------

def lstm_model_reference(x_btd, raw, num_layers):
    B, T, _ = x_btd.shape
    seq = x_btd
    for layer in range(num_layers):
        r = raw["lstm"][layer]
        H = r["w_hh"].shape[1]
        w_ihT = r["w_ih"].T
        w_hhT = r["w_hh"].T
        b = r["b_ih"] + r["b_hh"]
        h = jnp.zeros((B, H), jnp.float32)
        c = jnp.zeros((B, H), jnp.float32)
        outs = []
        for t in range(T):
            g = seq[:, t, :] @ w_ihT + h @ w_hhT + b
            i_g = jax.nn.sigmoid(g[:, 0 * H:1 * H])
            f_g = jax.nn.sigmoid(g[:, 1 * H:2 * H])
            g_g = jnp.tanh(g[:, 2 * H:3 * H])
            o_g = jax.nn.sigmoid(g[:, 3 * H:4 * H])
            c = f_g * c + i_g * g_g
            h = o_g * jnp.tanh(c)
            outs.append(h)
        seq = jnp.stack(outs, axis=1)
    return seq[:, -1, :] @ raw["fc"]["w"].T + raw["fc"]["b"]


# -------------------------------- params -------------------------------------

def init_raw_params(key, input_size, hidden_size, num_layers, output_size):
    """PyTorch-layout parameters (nn.LSTM / nn.Linear init ranges)."""
    raw = {"lstm": [], "fc": {}}
    k = 1.0 / np.sqrt(hidden_size)
    for layer in range(num_layers):
        d_in = input_size if layer == 0 else hidden_size
        key, k1, k2, k3, k4 = jax.random.split(key, 5)
        raw["lstm"].append({
            "w_ih": jax.random.uniform(k1, (4 * hidden_size, d_in), jnp.float32, -k, k),
            "w_hh": jax.random.uniform(k2, (4 * hidden_size, hidden_size), jnp.float32, -k, k),
            "b_ih": jax.random.uniform(k3, (4 * hidden_size,), jnp.float32, -k, k),
            "b_hh": jax.random.uniform(k4, (4 * hidden_size,), jnp.float32, -k, k),
        })
    key, k1, k2 = jax.random.split(key, 3)
    raw["fc"] = {
        "w": jax.random.uniform(k1, (output_size, hidden_size), jnp.float32, -k, k),
        "b": jax.random.uniform(k2, (output_size,), jnp.float32, -k, k),
    }
    return raw


def prepare_kernel_params(raw, input_size, hidden_size, num_layers, output_size):
    """Transpose + zero-pad weights so every gate slice is 128-lane aligned.

    Weight matrices are stored in bf16 (MXU-native); biases stay f32 (added to the
    f32 accumulator).  Zero padding keeps padded hidden lanes exactly zero.
    """
    H = hidden_size
    Hp = _round_up(H, 128)
    Dp0 = _round_up(input_size, 128)
    Op = _round_up(output_size, 128)

    kp = {"lstm": [], "fc": {}}
    for layer in range(num_layers):
        r = raw["lstm"][layer]
        d_in = input_size if layer == 0 else H
        d_in_p = Dp0 if layer == 0 else Hp
        w_ihT = r["w_ih"].T                       # (d_in, 4H)
        w_hhT = r["w_hh"].T                       # (H, 4H)
        b = (r["b_ih"] + r["b_hh"]).reshape(1, 4 * H)

        w_ihT_p = jnp.zeros((d_in_p, 4 * Hp), jnp.float32)
        w_hhT_p = jnp.zeros((Hp, 4 * Hp), jnp.float32)
        b_p = jnp.zeros((1, 4 * Hp), jnp.float32)
        for g in range(4):  # keep PyTorch gate order i, f, g, o; pad each gate to Hp
            w_ihT_p = w_ihT_p.at[:d_in, g * Hp:g * Hp + H].set(w_ihT[:, g * H:(g + 1) * H])
            w_hhT_p = w_hhT_p.at[:H, g * Hp:g * Hp + H].set(w_hhT[:, g * H:(g + 1) * H])
            b_p = b_p.at[:, g * Hp:g * Hp + H].set(b[:, g * H:(g + 1) * H])
        kp["lstm"].append({
            "w_ihT": w_ihT_p.astype(jnp.bfloat16),
            "w_hhT": w_hhT_p.astype(jnp.bfloat16),
            "b": b_p,
        })

    w_fcT = raw["fc"]["w"].T                      # (H, O)
    w_fcT_p = jnp.zeros((Hp, Op), jnp.float32).at[:H, :output_size].set(w_fcT)
    b_fc_p = jnp.zeros((1, Op), jnp.float32).at[0, :output_size].set(raw["fc"]["b"])
    kp["fc"] = {"wT": w_fcT_p.astype(jnp.bfloat16), "b": b_fc_p}
    return kp


# --------------------------------- main ---------------------------------------

if __name__ == "__main__":
    B, T = 2, 8
    input_size, hidden_size, num_layers, output_size = 4, 32, 2, 3

    key = jax.random.PRNGKey(0)
    key, kx = jax.random.split(key)
    x = jax.random.normal(kx, (B, T, input_size), jnp.float32)

    raw = init_raw_params(key, input_size, hidden_size, num_layers, output_size)
    kparams = prepare_kernel_params(raw, input_size, hidden_size, num_layers, output_size)
    Tb = choose_time_block(T, Bp=_round_up(B, 8))

    out = lstm_model_forward(x, kparams, num_layers=num_layers, Tb=Tb,
                             output_size=output_size)
    out = jax.block_until_ready(out)

    ref = lstm_model_reference(x, raw, num_layers)
    assert out.shape == (B, output_size)
    # bf16 matmul operands -> compare against the f32 reference with loose tolerance.
    np.testing.assert_allclose(np.asarray(out), np.asarray(ref), rtol=3e-2, atol=3e-2)

    print("KERNEL_OK")
</pallas_src>

<mosaic_0001>
module attributes {stable_mosaic.version = 11 : i64} {
  func.func @lstm_seq_layer_kernel(%arg0: i32, %arg1: memref<64x128xf32, #tpu.memory_space<vmem>>, %arg2: memref<128x512xbf16, #tpu.memory_space<any>>, %arg3: memref<128x512xbf16, #tpu.memory_space<any>>, %arg4: memref<1x512xf32, #tpu.memory_space<vmem>>, %arg5: memref<64x128xf32, #tpu.memory_space<vmem>>, %arg6: memref<128x512xbf16, #tpu.memory_space<vmem>>, %arg7: memref<128x512xbf16, #tpu.memory_space<vmem>>, %arg8: memref<64x512xf32, #tpu.memory_space<vmem>>, %arg9: memref<8x128xf32, #tpu.memory_space<vmem>>, %arg10: memref<8x128xf32, #tpu.memory_space<vmem>>, %arg11: memref<2x!tpu.dma_semaphore, #tpu.memory_space<semaphore_mem>>) attributes {dimension_semantics = [#tpu.dimension_semantics<arbitrary>], iteration_bounds = array<i64: 1>, scalar_prefetch = 0 : i64, scratch_operands = 6 : i64, tpu.core_type = #tpu.core_type<tc>, window_params = [{transform_indices = @transform_0, window_bounds = array<i64: 64, 128>}, {}, {}, {pipeline_mode = #tpu.pipeline_mode<synchronous>, transform_indices = @transform_3, window_bounds = array<i64: 1, 512>}, {transform_indices = @transform_4, window_bounds = array<i64: 64, 128>}]} {
    %c0_i32 = arith.constant 0 : i32
    %0 = arith.cmpi eq, %arg0, %c0_i32 : i32
    %1 = arith.extui %0 : i1 to i32
    %c0_i32_0 = arith.constant 0 : i32
    %2 = arith.cmpi ne, %1, %c0_i32_0 : i32
    scf.if %2 {
      %c0_i32_89 = arith.constant 0 : i32
      %295 = tpu.memref_slice %arg11[%c0_i32_89] : memref<2x!tpu.dma_semaphore, #tpu.memory_space<semaphore_mem>> -> memref<1x!tpu.dma_semaphore, #tpu.memory_space<semaphore_mem>>
      %296 = tpu.memref_squeeze %295 : memref<1x!tpu.dma_semaphore, #tpu.memory_space<semaphore_mem>> -> memref<!tpu.dma_semaphore, #tpu.memory_space<semaphore_mem>>
      tpu.enqueue_dma source(%arg2 : memref<128x512xbf16, #tpu.memory_space<any>>) target(%arg6 : memref<128x512xbf16, #tpu.memory_space<vmem>>) target_semaphore(%296 : memref<!tpu.dma_semaphore, #tpu.memory_space<semaphore_mem>>)
      %c1_i32_90 = arith.constant 1 : i32
      %297 = tpu.memref_slice %arg11[%c1_i32_90] : memref<2x!tpu.dma_semaphore, #tpu.memory_space<semaphore_mem>> -> memref<1x!tpu.dma_semaphore, #tpu.memory_space<semaphore_mem>>
      %298 = tpu.memref_squeeze %297 : memref<1x!tpu.dma_semaphore, #tpu.memory_space<semaphore_mem>> -> memref<!tpu.dma_semaphore, #tpu.memory_space<semaphore_mem>>
      tpu.enqueue_dma source(%arg3 : memref<128x512xbf16, #tpu.memory_space<any>>) target(%arg7 : memref<128x512xbf16, #tpu.memory_space<vmem>>) target_semaphore(%298 : memref<!tpu.dma_semaphore, #tpu.memory_space<semaphore_mem>>)
      %c0_i32_91 = arith.constant 0 : i32
      %299 = tpu.memref_slice %arg11[%c0_i32_91] : memref<2x!tpu.dma_semaphore, #tpu.memory_space<semaphore_mem>> -> memref<1x!tpu.dma_semaphore, #tpu.memory_space<semaphore_mem>>
      %300 = tpu.memref_squeeze %299 : memref<1x!tpu.dma_semaphore, #tpu.memory_space<semaphore_mem>> -> memref<!tpu.dma_semaphore, #tpu.memory_space<semaphore_mem>>
      tpu.wait_dma2 semaphore(%300 : memref<!tpu.dma_semaphore, #tpu.memory_space<semaphore_mem>>) src(%arg2 : memref<128x512xbf16, #tpu.memory_space<any>>) dst(%arg6 : memref<128x512xbf16, #tpu.memory_space<vmem>>)
      %c1_i32_92 = arith.constant 1 : i32
      %301 = tpu.memref_slice %arg11[%c1_i32_92] : memref<2x!tpu.dma_semaphore, #tpu.memory_space<semaphore_mem>> -> memref<1x!tpu.dma_semaphore, #tpu.memory_space<semaphore_mem>>
      %302 = tpu.memref_squeeze %301 : memref<1x!tpu.dma_semaphore, #tpu.memory_space<semaphore_mem>> -> memref<!tpu.dma_semaphore, #tpu.memory_space<semaphore_mem>>
      tpu.wait_dma2 semaphore(%302 : memref<!tpu.dma_semaphore, #tpu.memory_space<semaphore_mem>>) src(%arg3 : memref<128x512xbf16, #tpu.memory_space<any>>) dst(%arg7 : memref<128x512xbf16, #tpu.memory_space<vmem>>)
      %cst_93 = arith.constant 0.000000e+00 : f32
      %303 = vector.broadcast %cst_93 : f32 to vector<8x128xf32>
      %c0_94 = arith.constant 0 : index
      %c0_95 = arith.constant 0 : index
      %304 = vector.load %arg9[%c0_94, %c0_95] : memref<8x128xf32, #tpu.memory_space<vmem>>, vector<8x128xf32>
      tpu.vector_store %arg9[%c0_94, %c0_95], %303 {strides = array<i32>} : memref<8x128xf32, #tpu.memory_space<vmem>>, vector<8x128xf32>,
      %cst_96 = arith.constant 0.000000e+00 : f32
      %305 = vector.broadcast %cst_96 : f32 to vector<8x128xf32>
      %c0_97 = arith.constant 0 : index
      %c0_98 = arith.constant 0 : index
      %306 = vector.load %arg10[%c0_97, %c0_98] : memref<8x128xf32, #tpu.memory_space<vmem>>, vector<8x128xf32>
      tpu.vector_store %arg10[%c0_97, %c0_98], %305 {strides = array<i32>} : memref<8x128xf32, #tpu.memory_space<vmem>>, vector<8x128xf32>,
    } else {
    }
    %c0 = arith.constant 0 : index
    %c0_1 = arith.constant 0 : index
    %3 = vector.load %arg1[%c0, %c0_1] : memref<64x128xf32, #tpu.memory_space<vmem>>, vector<64x128xf32>
    %4 = arith.truncf %3 : vector<64x128xf32> to vector<64x128xbf16>
    %c0_2 = arith.constant 0 : index
    %c0_3 = arith.constant 0 : index
    %5 = vector.load %arg6[%c0_2, %c0_3] : memref<128x512xbf16, #tpu.memory_space<vmem>>, vector<128x512xbf16>
    %cst = arith.constant dense<0.000000e+00> : vector<64x512xf32>
    %6 = tpu.matmul %4, %5, %cst {dimension_numbers = #tpu.dot_dimension_numbers<[1], [0], [0], [1], [0, 0, 1, 1], [], []>} : vector<64x128xbf16>, vector<128x512xbf16>, vector<64x512xf32> -> vector<64x512xf32>
    %c0_4 = arith.constant 0 : index
    %c0_5 = arith.constant 0 : index
    %7 = vector.load %arg4[%c0_4, %c0_5] : memref<1x512xf32, #tpu.memory_space<vmem>>, vector<1x512xf32>
    %8 = vector.broadcast %7 : vector<1x512xf32> to vector<64x512xf32>
    %9 = arith.addf %6, %8 : vector<64x512xf32>
    %c0_6 = arith.constant 0 : index
    %c0_7 = arith.constant 0 : index
    %10 = vector.load %arg8[%c0_6, %c0_7] : memref<64x512xf32, #tpu.memory_space<vmem>>, vector<64x512xf32>
    tpu.vector_store %arg8[%c0_6, %c0_7], %9 {strides = array<i32>} : memref<64x512xf32, #tpu.memory_space<vmem>>, vector<64x512xf32>,
    %c0_8 = arith.constant 0 : index
    %c0_9 = arith.constant 0 : index
    %11 = vector.load %arg9[%c0_8, %c0_9] : memref<8x128xf32, #tpu.memory_space<vmem>>, vector<8x128xf32>
    %c0_10 = arith.constant 0 : index
    %c0_11 = arith.constant 0 : index
    %12 = vector.load %arg10[%c0_10, %c0_11] : memref<8x128xf32, #tpu.memory_space<vmem>>, vector<8x128xf32>
    %c0_i32_12 = arith.constant 0 : i32
    %c8_i32 = arith.constant 8 : i32
    %13 = arith.muli %c0_i32_12, %c8_i32 : i32
    %14 = tpu.assume_multiple %13, 8 : i32
    %15 = arith.index_cast %14 : i32 to index
    %c0_13 = arith.constant 0 : index
    %16 = vector.load %arg8[%15, %c0_13] : memref<64x512xf32, #tpu.memory_space<vmem>>, vector<8x512xf32>
    %17 = arith.truncf %11 : vector<8x128xf32> to vector<8x128xbf16>
    %c0_14 = arith.constant 0 : index
    %c0_15 = arith.constant 0 : index
    %18 = vector.load %arg7[%c0_14, %c0_15] : memref<128x512xbf16, #tpu.memory_space<vmem>>, vector<128x512xbf16>
    %cst_16 = arith.constant dense<0.000000e+00> : vector<8x512xf32>
    %19 = tpu.matmul %17, %18, %cst_16 {dimension_numbers = #tpu.dot_dimension_numbers<[1], [0], [0], [1], [0, 0, 1, 1], [], []>} : vector<8x128xbf16>, vector<128x512xbf16>, vector<8x512xf32> -> vector<8x512xf32>
    %20 = arith.addf %16, %19 : vector<8x512xf32>
    %21 = vector.extract_strided_slice %20 {offsets = [0, 0], sizes = [8, 128], strides = [1, 1]} : vector<8x512xf32> to vector<8x128xf32>
    %22 = arith.negf %21 : vector<8x128xf32>
    %23 = math.exp %22 : vector<8x128xf32>
    %cst_17 = arith.constant 1.000000e+00 : f32
    %24 = vector.broadcast %cst_17 : f32 to vector<8x128xf32>
    %25 = arith.addf %24, %23 : vector<8x128xf32>
    %26 = arith.divf %24, %25 : vector<8x128xf32>
    %27 = vector.extract_strided_slice %20 {offsets = [0, 128], sizes = [8, 128], strides = [1, 1]} : vector<8x512xf32> to vector<8x128xf32>
    %28 = arith.negf %27 : vector<8x128xf32>
    %29 = math.exp %28 : vector<8x128xf32>
    %cst_18 = arith.constant 1.000000e+00 : f32
    %30 = vector.broadcast %cst_18 : f32 to vector<8x128xf32>
    %31 = arith.addf %30, %29 : vector<8x128xf32>
    %32 = arith.divf %30, %31 : vector<8x128xf32>
    %33 = vector.extract_strided_slice %20 {offsets = [0, 256], sizes = [8, 128], strides = [1, 1]} : vector<8x512xf32> to vector<8x128xf32>
    %34 = math.tanh %33 : vector<8x128xf32>
    %35 = vector.extract_strided_slice %20 {offsets = [0, 384], sizes = [8, 128], strides = [1, 1]} : vector<8x512xf32> to vector<8x128xf32>
    %36 = arith.negf %35 : vector<8x128xf32>
    %37 = math.exp %36 : vector<8x128xf32>
    %cst_19 = arith.constant 1.000000e+00 : f32
    %38 = vector.broadcast %cst_19 : f32 to vector<8x128xf32>
    %39 = arith.addf %38, %37 : vector<8x128xf32>
    %40 = arith.divf %38, %39 : vector<8x128xf32>
    %41 = arith.mulf %32, %12 : vector<8x128xf32>
    %42 = arith.mulf %26, %34 : vector<8x128xf32>
    %43 = arith.addf %41, %42 : vector<8x128xf32>
    %44 = math.tanh %43 : vector<8x128xf32>
    %45 = arith.mulf %40, %44 : vector<8x128xf32>
    %46 = arith.index_cast %14 : i32 to index
    %c0_20 = arith.constant 0 : index
    %47 = vector.load %arg5[%46, %c0_20] : memref<64x128xf32, #tpu.memory_space<vmem>>, vector<8x128xf32>
    tpu.vector_store %arg5[%46, %c0_20], %45 {strides = array<i32>} : memref<64x128xf32, #tpu.memory_space<vmem>>, vector<8x128xf32>,
    %c1_i32 = arith.constant 1 : i32
    %c8_i32_21 = arith.constant 8 : i32
    %48 = arith.muli %c1_i32, %c8_i32_21 : i32
    %49 = tpu.assume_multiple %48, 8 : i32
    %50 = arith.index_cast %49 : i32 to index
    %c0_22 = arith.constant 0 : index
    %51 = vector.load %arg8[%50, %c0_22] : memref<64x512xf32, #tpu.memory_space<vmem>>, vector<8x512xf32>
    %52 = arith.truncf %45 : vector<8x128xf32> to vector<8x128xbf16>
    %c0_23 = arith.constant 0 : index
    %c0_24 = arith.constant 0 : index
    %53 = vector.load %arg7[%c0_23, %c0_24] : memref<128x512xbf16, #tpu.memory_space<vmem>>, vector<128x512xbf16>
    %cst_25 = arith.constant dense<0.000000e+00> : vector<8x512xf32>
    %54 = tpu.matmul %52, %53, %cst_25 {dimension_numbers = #tpu.dot_dimension_numbers<[1], [0], [0], [1], [0, 0, 1, 1], [], []>} : vector<8x128xbf16>, vector<128x512xbf16>, vector<8x512xf32> -> vector<8x512xf32>
    %55 = arith.addf %51, %54 : vector<8x512xf32>
    %56 = vector.extract_strided_slice %55 {offsets = [0, 0], sizes = [8, 128], strides = [1, 1]} : vector<8x512xf32> to vector<8x128xf32>
    %57 = arith.negf %56 : vector<8x128xf32>
    %58 = math.exp %57 : vector<8x128xf32>
    %cst_26 = arith.constant 1.000000e+00 : f32
    %59 = vector.broadcast %cst_26 : f32 to vector<8x128xf32>
    %60 = arith.addf %59, %58 : vector<8x128xf32>
    %61 = arith.divf %59, %60 : vector<8x128xf32>
    %62 = vector.extract_strided_slice %55 {offsets = [0, 128], sizes = [8, 128], strides = [1, 1]} : vector<8x512xf32> to vector<8x128xf32>
    %63 = arith.negf %62 : vector<8x128xf32>
    %64 = math.exp %63 : vector<8x128xf32>
    %cst_27 = arith.constant 1.000000e+00 : f32
    %65 = vector.broadcast %cst_27 : f32 to vector<8x128xf32>
    %66 = arith.addf %65, %64 : vector<8x128xf32>
    %67 = arith.divf %65, %66 : vector<8x128xf32>
    %68 = vector.extract_strided_slice %55 {offsets = [0, 256], sizes = [8, 128], strides = [1, 1]} : vector<8x512xf32> to vector<8x128xf32>
    %69 = math.tanh %68 : vector<8x128xf32>
    %70 = vector.extract_strided_slice %55 {offsets = [0, 384], sizes = [8, 128], strides = [1, 1]} : vector<8x512xf32> to vector<8x128xf32>
    %71 = arith.negf %70 : vector<8x128xf32>
    %72 = math.exp %71 : vector<8x128xf32>
    %cst_28 = arith.constant 1.000000e+00 : f32
    %73 = vector.broadcast %cst_28 : f32 to vector<8x128xf32>
    %74 = arith.addf %73, %72 : vector<8x128xf32>
    %75 = arith.divf %73, %74 : vector<8x128xf32>
    %76 = arith.mulf %67, %43 : vector<8x128xf32>
    %77 = arith.mulf %61, %69 : vector<8x128xf32>
    %78 = arith.addf %76, %77 : vector<8x128xf32>
    %79 = math.tanh %78 : vector<8x128xf32>
    %80 = arith.mulf %75, %79 : vector<8x128xf32>
    %81 = arith.index_cast %49 : i32 to index
    %c0_29 = arith.constant 0 : index
    %82 = vector.load %arg5[%81, %c0_29] : memref<64x128xf32, #tpu.memory_space<vmem>>, vector<8x128xf32>
    tpu.vector_store %arg5[%81, %c0_29], %80 {strides = array<i32>} : memref<64x128xf32, #tpu.memory_space<vmem>>, vector<8x128xf32>,
    %c2_i32 = arith.constant 2 : i32
    %c8_i32_30 = arith.constant 8 : i32
    %83 = arith.muli %c2_i32, %c8_i32_30 : i32
    %84 = tpu.assume_multiple %83, 8 : i32
    %85 = arith.index_cast %84 : i32 to index
    %c0_31 = arith.constant 0 : index
    %86 = vector.load %arg8[%85, %c0_31] : memref<64x512xf32, #tpu.memory_space<vmem>>, vector<8x512xf32>
    %87 = arith.truncf %80 : vector<8x128xf32> to vector<8x128xbf16>
    %c0_32 = arith.constant 0 : index
    %c0_33 = arith.constant 0 : index
    %88 = vector.load %arg7[%c0_32, %c0_33] : memref<128x512xbf16, #tpu.memory_space<vmem>>, vector<128x512xbf16>
    %cst_34 = arith.constant dense<0.000000e+00> : vector<8x512xf32>
    %89 = tpu.matmul %87, %88, %cst_34 {dimension_numbers = #tpu.dot_dimension_numbers<[1], [0], [0], [1], [0, 0, 1, 1], [], []>} : vector<8x128xbf16>, vector<128x512xbf16>, vector<8x512xf32> -> vector<8x512xf32>
    %90 = arith.addf %86, %89 : vector<8x512xf32>
    %91 = vector.extract_strided_slice %90 {offsets = [0, 0], sizes = [8, 128], strides = [1, 1]} : vector<8x512xf32> to vector<8x128xf32>
    %92 = arith.negf %91 : vector<8x128xf32>
    %93 = math.exp %92 : vector<8x128xf32>
    %cst_35 = arith.constant 1.000000e+00 : f32
    %94 = vector.broadcast %cst_35 : f32 to vector<8x128xf32>
    %95 = arith.addf %94, %93 : vector<8x128xf32>
    %96 = arith.divf %94, %95 : vector<8x128xf32>
    %97 = vector.extract_strided_slice %90 {offsets = [0, 128], sizes = [8, 128], strides = [1, 1]} : vector<8x512xf32> to vector<8x128xf32>
    %98 = arith.negf %97 : vector<8x128xf32>
    %99 = math.exp %98 : vector<8x128xf32>
    %cst_36 = arith.constant 1.000000e+00 : f32
    %100 = vector.broadcast %cst_36 : f32 to vector<8x128xf32>
    %101 = arith.addf %100, %99 : vector<8x128xf32>
    %102 = arith.divf %100, %101 : vector<8x128xf32>
    %103 = vector.extract_strided_slice %90 {offsets = [0, 256], sizes = [8, 128], strides = [1, 1]} : vector<8x512xf32> to vector<8x128xf32>
    %104 = math.tanh %103 : vector<8x128xf32>
    %105 = vector.extract_strided_slice %90 {offsets = [0, 384], sizes = [8, 128], strides = [1, 1]} : vector<8x512xf32> to vector<8x128xf32>
    %106 = arith.negf %105 : vector<8x128xf32>
    %107 = math.exp %106 : vector<8x128xf32>
    %cst_37 = arith.constant 1.000000e+00 : f32
    %108 = vector.broadcast %cst_37 : f32 to vector<8x128xf32>
    %109 = arith.addf %108, %107 : vector<8x128xf32>
    %110 = arith.divf %108, %109 : vector<8x128xf32>
    %111 = arith.mulf %102, %78 : vector<8x128xf32>
    %112 = arith.mulf %96, %104 : vector<8x128xf32>
    %113 = arith.addf %111, %112 : vector<8x128xf32>
    %114 = math.tanh %113 : vector<8x128xf32>
    %115 = arith.mulf %110, %114 : vector<8x128xf32>
    %116 = arith.index_cast %84 : i32 to index
    %c0_38 = arith.constant 0 : index
    %117 = vector.load %arg5[%116, %c0_38] : memref<64x128xf32, #tpu.memory_space<vmem>>, vector<8x128xf32>
    tpu.vector_store %arg5[%116, %c0_38], %115 {strides = array<i32>} : memref<64x128xf32, #tpu.memory_space<vmem>>, vector<8x128xf32>,
    %c3_i32 = arith.constant 3 : i32
    %c8_i32_39 = arith.constant 8 : i32
    %118 = arith.muli %c3_i32, %c8_i32_39 : i32
    %119 = tpu.assume_multiple %118, 8 : i32
    %120 = arith.index_cast %119 : i32 to index
    %c0_40 = arith.constant 0 : index
    %121 = vector.load %arg8[%120, %c0_40] : memref<64x512xf32, #tpu.memory_space<vmem>>, vector<8x512xf32>
    %122 = arith.truncf %115 : vector<8x128xf32> to vector<8x128xbf16>
    %c0_41 = arith.constant 0 : index
    %c0_42 = arith.constant 0 : index
    %123 = vector.load %arg7[%c0_41, %c0_42] : memref<128x512xbf16, #tpu.memory_space<vmem>>, vector<128x512xbf16>
    %cst_43 = arith.constant dense<0.000000e+00> : vector<8x512xf32>
    %124 = tpu.matmul %122, %123, %cst_43 {dimension_numbers = #tpu.dot_dimension_numbers<[1], [0], [0], [1], [0, 0, 1, 1], [], []>} : vector<8x128xbf16>, vector<128x512xbf16>, vector<8x512xf32> -> vector<8x512xf32>
    %125 = arith.addf %121, %124 : vector<8x512xf32>
    %126 = vector.extract_strided_slice %125 {offsets = [0, 0], sizes = [8, 128], strides = [1, 1]} : vector<8x512xf32> to vector<8x128xf32>
    %127 = arith.negf %126 : vector<8x128xf32>
    %128 = math.exp %127 : vector<8x128xf32>
    %cst_44 = arith.constant 1.000000e+00 : f32
    %129 = vector.broadcast %cst_44 : f32 to vector<8x128xf32>
    %130 = arith.addf %129, %128 : vector<8x128xf32>
    %131 = arith.divf %129, %130 : vector<8x128xf32>
    %132 = vector.extract_strided_slice %125 {offsets = [0, 128], sizes = [8, 128], strides = [1, 1]} : vector<8x512xf32> to vector<8x128xf32>
    %133 = arith.negf %132 : vector<8x128xf32>
    %134 = math.exp %133 : vector<8x128xf32>
    %cst_45 = arith.constant 1.000000e+00 : f32
    %135 = vector.broadcast %cst_45 : f32 to vector<8x128xf32>
    %136 = arith.addf %135, %134 : vector<8x128xf32>
    %137 = arith.divf %135, %136 : vector<8x128xf32>
    %138 = vector.extract_strided_slice %125 {offsets = [0, 256], sizes = [8, 128], strides = [1, 1]} : vector<8x512xf32> to vector<8x128xf32>
    %139 = math.tanh %138 : vector<8x128xf32>
    %140 = vector.extract_strided_slice %125 {offsets = [0, 384], sizes = [8, 128], strides = [1, 1]} : vector<8x512xf32> to vector<8x128xf32>
    %141 = arith.negf %140 : vector<8x128xf32>
    %142 = math.exp %141 : vector<8x128xf32>
    %cst_46 = arith.constant 1.000000e+00 : f32
    %143 = vector.broadcast %cst_46 : f32 to vector<8x128xf32>
    %144 = arith.addf %143, %142 : vector<8x128xf32>
    %145 = arith.divf %143, %144 : vector<8x128xf32>
    %146 = arith.mulf %137, %113 : vector<8x128xf32>
    %147 = arith.mulf %131, %139 : vector<8x128xf32>
    %148 = arith.addf %146, %147 : vector<8x128xf32>
    %149 = math.tanh %148 : vector<8x128xf32>
    %150 = arith.mulf %145, %149 : vector<8x128xf32>
    %151 = arith.index_cast %119 : i32 to index
    %c0_47 = arith.constant 0 : index
    %152 = vector.load %arg5[%151, %c0_47] : memref<64x128xf32, #tpu.memory_space<vmem>>, vector<8x128xf32>
    tpu.vector_store %arg5[%151, %c0_47], %150 {strides = array<i32>} : memref<64x128xf32, #tpu.memory_space<vmem>>, vector<8x128xf32>,
    %c4_i32 = arith.constant 4 : i32
    %c8_i32_48 = arith.constant 8 : i32
    %153 = arith.muli %c4_i32, %c8_i32_48 : i32
    %154 = tpu.assume_multiple %153, 8 : i32
    %155 = arith.index_cast %154 : i32 to index
    %c0_49 = arith.constant 0 : index
    %156 = vector.load %arg8[%155, %c0_49] : memref<64x512xf32, #tpu.memory_space<vmem>>, vector<8x512xf32>
    %157 = arith.truncf %150 : vector<8x128xf32> to vector<8x128xbf16>
    %c0_50 = arith.constant 0 : index
    %c0_51 = arith.constant 0 : index
    %158 = vector.load %arg7[%c0_50, %c0_51] : memref<128x512xbf16, #tpu.memory_space<vmem>>, vector<128x512xbf16>
    %cst_52 = arith.constant dense<0.000000e+00> : vector<8x512xf32>
    %159 = tpu.matmul %157, %158, %cst_52 {dimension_numbers = #tpu.dot_dimension_numbers<[1], [0], [0], [1], [0, 0, 1, 1], [], []>} : vector<8x128xbf16>, vector<128x512xbf16>, vector<8x512xf32> -> vector<8x512xf32>
    %160 = arith.addf %156, %159 : vector<8x512xf32>
    %161 = vector.extract_strided_slice %160 {offsets = [0, 0], sizes = [8, 128], strides = [1, 1]} : vector<8x512xf32> to vector<8x128xf32>
    %162 = arith.negf %161 : vector<8x128xf32>
    %163 = math.exp %162 : vector<8x128xf32>
    %cst_53 = arith.constant 1.000000e+00 : f32
    %164 = vector.broadcast %cst_53 : f32 to vector<8x128xf32>
    %165 = arith.addf %164, %163 : vector<8x128xf32>
    %166 = arith.divf %164, %165 : vector<8x128xf32>
    %167 = vector.extract_strided_slice %160 {offsets = [0, 128], sizes = [8, 128], strides = [1, 1]} : vector<8x512xf32> to vector<8x128xf32>
    %168 = arith.negf %167 : vector<8x128xf32>
    %169 = math.exp %168 : vector<8x128xf32>
    %cst_54 = arith.constant 1.000000e+00 : f32
    %170 = vector.broadcast %cst_54 : f32 to vector<8x128xf32>
    %171 = arith.addf %170, %169 : vector<8x128xf32>
    %172 = arith.divf %170, %171 : vector<8x128xf32>
    %173 = vector.extract_strided_slice %160 {offsets = [0, 256], sizes = [8, 128], strides = [1, 1]} : vector<8x512xf32> to vector<8x128xf32>
    %174 = math.tanh %173 : vector<8x128xf32>
    %175 = vector.extract_strided_slice %160 {offsets = [0, 384], sizes = [8, 128], strides = [1, 1]} : vector<8x512xf32> to vector<8x128xf32>
    %176 = arith.negf %175 : vector<8x128xf32>
    %177 = math.exp %176 : vector<8x128xf32>
    %cst_55 = arith.constant 1.000000e+00 : f32
    %178 = vector.broadcast %cst_55 : f32 to vector<8x128xf32>
    %179 = arith.addf %178, %177 : vector<8x128xf32>
    %180 = arith.divf %178, %179 : vector<8x128xf32>
    %181 = arith.mulf %172, %148 : vector<8x128xf32>
    %182 = arith.mulf %166, %174 : vector<8x128xf32>
    %183 = arith.addf %181, %182 : vector<8x128xf32>
    %184 = math.tanh %183 : vector<8x128xf32>
    %185 = arith.mulf %180, %184 : vector<8x128xf32>
    %186 = arith.index_cast %154 : i32 to index
    %c0_56 = arith.constant 0 : index
    %187 = vector.load %arg5[%186, %c0_56] : memref<64x128xf32, #tpu.memory_space<vmem>>, vector<8x128xf32>
    tpu.vector_store %arg5[%186, %c0_56], %185 {strides = array<i32>} : memref<64x128xf32, #tpu.memory_space<vmem>>, vector<8x128xf32>,
    %c5_i32 = arith.constant 5 : i32
    %c8_i32_57 = arith.constant 8 : i32
    %188 = arith.muli %c5_i32, %c8_i32_57 : i32
    %189 = tpu.assume_multiple %188, 8 : i32
    %190 = arith.index_cast %189 : i32 to index
    %c0_58 = arith.constant 0 : index
    %191 = vector.load %arg8[%190, %c0_58] : memref<64x512xf32, #tpu.memory_space<vmem>>, vector<8x512xf32>
    %192 = arith.truncf %185 : vector<8x128xf32> to vector<8x128xbf16>
    %c0_59 = arith.constant 0 : index
    %c0_60 = arith.constant 0 : index
    %193 = vector.load %arg7[%c0_59, %c0_60] : memref<128x512xbf16, #tpu.memory_space<vmem>>, vector<128x512xbf16>
    %cst_61 = arith.constant dense<0.000000e+00> : vector<8x512xf32>
    %194 = tpu.matmul %192, %193, %cst_61 {dimension_numbers = #tpu.dot_dimension_numbers<[1], [0], [0], [1], [0, 0, 1, 1], [], []>} : vector<8x128xbf16>, vector<128x512xbf16>, vector<8x512xf32> -> vector<8x512xf32>
    %195 = arith.addf %191, %194 : vector<8x512xf32>
    %196 = vector.extract_strided_slice %195 {offsets = [0, 0], sizes = [8, 128], strides = [1, 1]} : vector<8x512xf32> to vector<8x128xf32>
    %197 = arith.negf %196 : vector<8x128xf32>
    %198 = math.exp %197 : vector<8x128xf32>
    %cst_62 = arith.constant 1.000000e+00 : f32
    %199 = vector.broadcast %cst_62 : f32 to vector<8x128xf32>
    %200 = arith.addf %199, %198 : vector<8x128xf32>
    %201 = arith.divf %199, %200 : vector<8x128xf32>
    %202 = vector.extract_strided_slice %195 {offsets = [0, 128], sizes = [8, 128], strides = [1, 1]} : vector<8x512xf32> to vector<8x128xf32>
    %203 = arith.negf %202 : vector<8x128xf32>
    %204 = math.exp %203 : vector<8x128xf32>
    %cst_63 = arith.constant 1.000000e+00 : f32
    %205 = vector.broadcast %cst_63 : f32 to vector<8x128xf32>
    %206 = arith.addf %205, %204 : vector<8x128xf32>
    %207 = arith.divf %205, %206 : vector<8x128xf32>
    %208 = vector.extract_strided_slice %195 {offsets = [0, 256], sizes = [8, 128], strides = [1, 1]} : vector<8x512xf32> to vector<8x128xf32>
    %209 = math.tanh %208 : vector<8x128xf32>
    %210 = vector.extract_strided_slice %195 {offsets = [0, 384], sizes = [8, 128], strides = [1, 1]} : vector<8x512xf32> to vector<8x128xf32>
    %211 = arith.negf %210 : vector<8x128xf32>
    %212 = math.exp %211 : vector<8x128xf32>
    %cst_64 = arith.constant 1.000000e+00 : f32
    %213 = vector.broadcast %cst_64 : f32 to vector<8x128xf32>
    %214 = arith.addf %213, %212 : vector<8x128xf32>
    %215 = arith.divf %213, %214 : vector<8x128xf32>
    %216 = arith.mulf %207, %183 : vector<8x128xf32>
    %217 = arith.mulf %201, %209 : vector<8x128xf32>
    %218 = arith.addf %216, %217 : vector<8x128xf32>
    %219 = math.tanh %218 : vector<8x128xf32>
    %220 = arith.mulf %215, %219 : vector<8x128xf32>
    %221 = arith.index_cast %189 : i32 to index
    %c0_65 = arith.constant 0 : index
    %222 = vector.load %arg5[%221, %c0_65] : memref<64x128xf32, #tpu.memory_space<vmem>>, vector<8x128xf32>
    tpu.vector_store %arg5[%221, %c0_65], %220 {strides = array<i32>} : memref<64x128xf32, #tpu.memory_space<vmem>>, vector<8x128xf32>,
    %c6_i32 = arith.constant 6 : i32
    %c8_i32_66 = arith.constant 8 : i32
    %223 = arith.muli %c6_i32, %c8_i32_66 : i32
    %224 = tpu.assume_multiple %223, 8 : i32
    %225 = arith.index_cast %224 : i32 to index
    %c0_67 = arith.constant 0 : index
    %226 = vector.load %arg8[%225, %c0_67] : memref<64x512xf32, #tpu.memory_space<vmem>>, vector<8x512xf32>
    %227 = arith.truncf %220 : vector<8x128xf32> to vector<8x128xbf16>
    %c0_68 = arith.constant 0 : index
    %c0_69 = arith.constant 0 : index
    %228 = vector.load %arg7[%c0_68, %c0_69] : memref<128x512xbf16, #tpu.memory_space<vmem>>, vector<128x512xbf16>
    %cst_70 = arith.constant dense<0.000000e+00> : vector<8x512xf32>
    %229 = tpu.matmul %227, %228, %cst_70 {dimension_numbers = #tpu.dot_dimension_numbers<[1], [0], [0], [1], [0, 0, 1, 1], [], []>} : vector<8x128xbf16>, vector<128x512xbf16>, vector<8x512xf32> -> vector<8x512xf32>
    %230 = arith.addf %226, %229 : vector<8x512xf32>
    %231 = vector.extract_strided_slice %230 {offsets = [0, 0], sizes = [8, 128], strides = [1, 1]} : vector<8x512xf32> to vector<8x128xf32>
    %232 = arith.negf %231 : vector<8x128xf32>
    %233 = math.exp %232 : vector<8x128xf32>
    %cst_71 = arith.constant 1.000000e+00 : f32
    %234 = vector.broadcast %cst_71 : f32 to vector<8x128xf32>
    %235 = arith.addf %234, %233 : vector<8x128xf32>
    %236 = arith.divf %234, %235 : vector<8x128xf32>
    %237 = vector.extract_strided_slice %230 {offsets = [0, 128], sizes = [8, 128], strides = [1, 1]} : vector<8x512xf32> to vector<8x128xf32>
    %238 = arith.negf %237 : vector<8x128xf32>
    %239 = math.exp %238 : vector<8x128xf32>
    %cst_72 = arith.constant 1.000000e+00 : f32
    %240 = vector.broadcast %cst_72 : f32 to vector<8x128xf32>
    %241 = arith.addf %240, %239 : vector<8x128xf32>
    %242 = arith.divf %240, %241 : vector<8x128xf32>
    %243 = vector.extract_strided_slice %230 {offsets = [0, 256], sizes = [8, 128], strides = [1, 1]} : vector<8x512xf32> to vector<8x128xf32>
    %244 = math.tanh %243 : vector<8x128xf32>
    %245 = vector.extract_strided_slice %230 {offsets = [0, 384], sizes = [8, 128], strides = [1, 1]} : vector<8x512xf32> to vector<8x128xf32>
    %246 = arith.negf %245 : vector<8x128xf32>
    %247 = math.exp %246 : vector<8x128xf32>
    %cst_73 = arith.constant 1.000000e+00 : f32
    %248 = vector.broadcast %cst_73 : f32 to vector<8x128xf32>
    %249 = arith.addf %248, %247 : vector<8x128xf32>
    %250 = arith.divf %248, %249 : vector<8x128xf32>
    %251 = arith.mulf %242, %218 : vector<8x128xf32>
    %252 = arith.mulf %236, %244 : vector<8x128xf32>
    %253 = arith.addf %251, %252 : vector<8x128xf32>
    %254 = math.tanh %253 : vector<8x128xf32>
    %255 = arith.mulf %250, %254 : vector<8x128xf32>
    %256 = arith.index_cast %224 : i32 to index
    %c0_74 = arith.constant 0 : index
    %257 = vector.load %arg5[%256, %c0_74] : memref<64x128xf32, #tpu.memory_space<vmem>>, vector<8x128xf32>
    tpu.vector_store %arg5[%256, %c0_74], %255 {strides = array<i32>} : memref<64x128xf32, #tpu.memory_space<vmem>>, vector<8x128xf32>,
    %c7_i32 = arith.constant 7 : i32
    %c8_i32_75 = arith.constant 8 : i32
    %258 = arith.muli %c7_i32, %c8_i32_75 : i32
    %259 = tpu.assume_multiple %258, 8 : i32
    %260 = arith.index_cast %259 : i32 to index
    %c0_76 = arith.constant 0 : index
    %261 = vector.load %arg8[%260, %c0_76] : memref<64x512xf32, #tpu.memory_space<vmem>>, vector<8x512xf32>
    %262 = arith.truncf %255 : vector<8x128xf32> to vector<8x128xbf16>
    %c0_77 = arith.constant 0 : index
    %c0_78 = arith.constant 0 : index
    %263 = vector.load %arg7[%c0_77, %c0_78] : memref<128x512xbf16, #tpu.memory_space<vmem>>, vector<128x512xbf16>
    %cst_79 = arith.constant dense<0.000000e+00> : vector<8x512xf32>
    %264 = tpu.matmul %262, %263, %cst_79 {dimension_numbers = #tpu.dot_dimension_numbers<[1], [0], [0], [1], [0, 0, 1, 1], [], []>} : vector<8x128xbf16>, vector<128x512xbf16>, vector<8x512xf32> -> vector<8x512xf32>
    %265 = arith.addf %261, %264 : vector<8x512xf32>
    %266 = vector.extract_strided_slice %265 {offsets = [0, 0], sizes = [8, 128], strides = [1, 1]} : vector<8x512xf32> to vector<8x128xf32>
    %267 = arith.negf %266 : vector<8x128xf32>
    %268 = math.exp %267 : vector<8x128xf32>
    %cst_80 = arith.constant 1.000000e+00 : f32
    %269 = vector.broadcast %cst_80 : f32 to vector<8x128xf32>
    %270 = arith.addf %269, %268 : vector<8x128xf32>
    %271 = arith.divf %269, %270 : vector<8x128xf32>
    %272 = vector.extract_strided_slice %265 {offsets = [0, 128], sizes = [8, 128], strides = [1, 1]} : vector<8x512xf32> to vector<8x128xf32>
    %273 = arith.negf %272 : vector<8x128xf32>
    %274 = math.exp %273 : vector<8x128xf32>
    %cst_81 = arith.constant 1.000000e+00 : f32
    %275 = vector.broadcast %cst_81 : f32 to vector<8x128xf32>
    %276 = arith.addf %275, %274 : vector<8x128xf32>
    %277 = arith.divf %275, %276 : vector<8x128xf32>
    %278 = vector.extract_strided_slice %265 {offsets = [0, 256], sizes = [8, 128], strides = [1, 1]} : vector<8x512xf32> to vector<8x128xf32>
    %279 = math.tanh %278 : vector<8x128xf32>
    %280 = vector.extract_strided_slice %265 {offsets = [0, 384], sizes = [8, 128], strides = [1, 1]} : vector<8x512xf32> to vector<8x128xf32>
    %281 = arith.negf %280 : vector<8x128xf32>
    %282 = math.exp %281 : vector<8x128xf32>
    %cst_82 = arith.constant 1.000000e+00 : f32
    %283 = vector.broadcast %cst_82 : f32 to vector<8x128xf32>
    %284 = arith.addf %283, %282 : vector<8x128xf32>
    %285 = arith.divf %283, %284 : vector<8x128xf32>
    %286 = arith.mulf %277, %253 : vector<8x128xf32>
    %287 = arith.mulf %271, %279 : vector<8x128xf32>
    %288 = arith.addf %286, %287 : vector<8x128xf32>
    %289 = math.tanh %288 : vector<8x128xf32>
    %290 = arith.mulf %285, %289 : vector<8x128xf32>
    %291 = arith.index_cast %259 : i32 to index
    %c0_83 = arith.constant 0 : index
    %292 = vector.load %arg5[%291, %c0_83] : memref<64x128xf32, #tpu.memory_space<vmem>>, vector<8x128xf32>
    tpu.vector_store %arg5[%291, %c0_83], %290 {strides = array<i32>} : memref<64x128xf32, #tpu.memory_space<vmem>>, vector<8x128xf32>,
    %c8_i32_84 = arith.constant 8 : i32
    %c0_85 = arith.constant 0 : index
    %c0_86 = arith.constant 0 : index
    %293 = vector.load %arg9[%c0_85, %c0_86] : memref<8x128xf32, #tpu.memory_space<vmem>>, vector<8x128xf32>
    tpu.vector_store %arg9[%c0_85, %c0_86], %290 {strides = array<i32>} : memref<8x128xf32, #tpu.memory_space<vmem>>, vector<8x128xf32>,
    %c0_87 = arith.constant 0 : index
    %c0_88 = arith.constant 0 : index
    %294 = vector.load %arg10[%c0_87, %c0_88] : memref<8x128xf32, #tpu.memory_space<vmem>>, vector<8x128xf32>
    tpu.vector_store %arg10[%c0_87, %c0_88], %288 {strides = array<i32>} : memref<8x128xf32, #tpu.memory_space<vmem>>, vector<8x128xf32>,
    return
  }
  func.func @transform_0(%arg0: i32) -> (i32, i32) {
    %c0_i32 = arith.constant 0 : i32
    %c0_i32_0 = arith.constant 0 : i32
    return %arg0, %c0_i32 : i32, i32
  }
  func.func @transform_3(%arg0: i32) -> (i32, i32) {
    %c0_i32 = arith.constant 0 : i32
    %c0_i32_0 = arith.constant 0 : i32
    %c0_i32_1 = arith.constant 0 : i32
    return %c0_i32, %c0_i32_0 : i32, i32
  }
  func.func @transform_4(%arg0: i32) -> (i32, i32) {
    %c0_i32 = arith.constant 0 : i32
    %c0_i32_0 = arith.constant 0 : i32
    return %arg0, %c0_i32 : i32, i32
  }
}

module attributes {stable_mosaic.version = 11 : i64} {
  func.func @lstm_last_layer_kernel(%arg0: i32, %arg1: memref<64x128xf32, #tpu.memory_space<vmem>>, %arg2: memref<128x512xbf16, #tpu.memory_space<any>>, %arg3: memref<128x512xbf16, #tpu.memory_space<any>>, %arg4: memref<1x512xf32, #tpu.memory_space<vmem>>, %arg5: memref<128x128xbf16, #tpu.memory_space<vmem>>, %arg6: memref<1x128xf32, #tpu.memory_space<vmem>>, %arg7: memref<8x128xf32, #tpu.memory_space<vmem>>, %arg8: memref<128x512xbf16, #tpu.memory_space<vmem>>, %arg9: memref<128x512xbf16, #tpu.memory_space<vmem>>, %arg10: memref<64x512xf32, #tpu.memory_space<vmem>>, %arg11: memref<8x128xf32, #tpu.memory_space<vmem>>, %arg12: memref<8x128xf32, #tpu.memory_space<vmem>>, %arg13: memref<2x!tpu.dma_semaphore, #tpu.memory_space<semaphore_mem>>) attributes {dimension_semantics = [#tpu.dimension_semantics<arbitrary>], iteration_bounds = array<i64: 1>, scalar_prefetch = 0 : i64, scratch_operands = 6 : i64, tpu.core_type = #tpu.core_type<tc>, window_params = [{transform_indices = @transform_0, window_bounds = array<i64: 64, 128>}, {}, {}, {pipeline_mode = #tpu.pipeline_mode<synchronous>, transform_indices = @transform_3, window_bounds = array<i64: 1, 512>}, {pipeline_mode = #tpu.pipeline_mode<synchronous>, transform_indices = @transform_4, window_bounds = array<i64: 128, 128>}, {pipeline_mode = #tpu.pipeline_mode<synchronous>, transform_indices = @transform_5, window_bounds = array<i64: 1, 128>}, {pipeline_mode = #tpu.pipeline_mode<synchronous>, transform_indices = @transform_6, window_bounds = array<i64: 8, 128>}]} {
    %c0_i32 = arith.constant 0 : i32
    %0 = arith.cmpi eq, %arg0, %c0_i32 : i32
    %1 = arith.extui %0 : i1 to i32
    %c0_i32_0 = arith.constant 0 : i32
    %2 = arith.cmpi ne, %1, %c0_i32_0 : i32
    scf.if %2 {
      %c0_i32_21 = arith.constant 0 : i32
      %23 = tpu.memref_slice %arg13[%c0_i32_21] : memref<2x!tpu.dma_semaphore, #tpu.memory_space<semaphore_mem>> -> memref<1x!tpu.dma_semaphore, #tpu.memory_space<semaphore_mem>>
      %24 = tpu.memref_squeeze %23 : memref<1x!tpu.dma_semaphore, #tpu.memory_space<semaphore_mem>> -> memref<!tpu.dma_semaphore, #tpu.memory_space<semaphore_mem>>
      tpu.enqueue_dma source(%arg2 : memref<128x512xbf16, #tpu.memory_space<any>>) target(%arg8 : memref<128x512xbf16, #tpu.memory_space<vmem>>) target_semaphore(%24 : memref<!tpu.dma_semaphore, #tpu.memory_space<semaphore_mem>>)
      %c1_i32_22 = arith.constant 1 : i32
      %25 = tpu.memref_slice %arg13[%c1_i32_22] : memref<2x!tpu.dma_semaphore, #tpu.memory_space<semaphore_mem>> -> memref<1x!tpu.dma_semaphore, #tpu.memory_space<semaphore_mem>>
      %26 = tpu.memref_squeeze %25 : memref<1x!tpu.dma_semaphore, #tpu.memory_space<semaphore_mem>> -> memref<!tpu.dma_semaphore, #tpu.memory_space<semaphore_mem>>
      tpu.enqueue_dma source(%arg3 : memref<128x512xbf16, #tpu.memory_space<any>>) target(%arg9 : memref<128x512xbf16, #tpu.memory_space<vmem>>) target_semaphore(%26 : memref<!tpu.dma_semaphore, #tpu.memory_space<semaphore_mem>>)
      %c0_i32_23 = arith.constant 0 : i32
      %27 = tpu.memref_slice %arg13[%c0_i32_23] : memref<2x!tpu.dma_semaphore, #tpu.memory_space<semaphore_mem>> -> memref<1x!tpu.dma_semaphore, #tpu.memory_space<semaphore_mem>>
      %28 = tpu.memref_squeeze %27 : memref<1x!tpu.dma_semaphore, #tpu.memory_space<semaphore_mem>> -> memref<!tpu.dma_semaphore, #tpu.memory_space<semaphore_mem>>
      tpu.wait_dma2 semaphore(%28 : memref<!tpu.dma_semaphore, #tpu.memory_space<semaphore_mem>>) src(%arg2 : memref<128x512xbf16, #tpu.memory_space<any>>) dst(%arg8 : memref<128x512xbf16, #tpu.memory_space<vmem>>)
      %c1_i32_24 = arith.constant 1 : i32
      %29 = tpu.memref_slice %arg13[%c1_i32_24] : memref<2x!tpu.dma_semaphore, #tpu.memory_space<semaphore_mem>> -> memref<1x!tpu.dma_semaphore, #tpu.memory_space<semaphore_mem>>
      %30 = tpu.memref_squeeze %29 : memref<1x!tpu.dma_semaphore, #tpu.memory_space<semaphore_mem>> -> memref<!tpu.dma_semaphore, #tpu.memory_space<semaphore_mem>>
      tpu.wait_dma2 semaphore(%30 : memref<!tpu.dma_semaphore, #tpu.memory_space<semaphore_mem>>) src(%arg3 : memref<128x512xbf16, #tpu.memory_space<any>>) dst(%arg9 : memref<128x512xbf16, #tpu.memory_space<vmem>>)
      %cst_25 = arith.constant 0.000000e+00 : f32
      %31 = vector.broadcast %cst_25 : f32 to vector<8x128xf32>
      %c0_26 = arith.constant 0 : index
      %c0_27 = arith.constant 0 : index
      %32 = vector.load %arg11[%c0_26, %c0_27] : memref<8x128xf32, #tpu.memory_space<vmem>>, vector<8x128xf32>
      tpu.vector_store %arg11[%c0_26, %c0_27], %31 {strides = array<i32>} : memref<8x128xf32, #tpu.memory_space<vmem>>, vector<8x128xf32>,
      %cst_28 = arith.constant 0.000000e+00 : f32
      %33 = vector.broadcast %cst_28 : f32 to vector<8x128xf32>
      %c0_29 = arith.constant 0 : index
      %c0_30 = arith.constant 0 : index
      %34 = vector.load %arg12[%c0_29, %c0_30] : memref<8x128xf32, #tpu.memory_space<vmem>>, vector<8x128xf32>
      tpu.vector_store %arg12[%c0_29, %c0_30], %33 {strides = array<i32>} : memref<8x128xf32, #tpu.memory_space<vmem>>, vector<8x128xf32>,
    } else {
    }
    %c0 = arith.constant 0 : index
    %c0_1 = arith.constant 0 : index
    %3 = vector.load %arg1[%c0, %c0_1] : memref<64x128xf32, #tpu.memory_space<vmem>>, vector<64x128xf32>
    %4 = arith.truncf %3 : vector<64x128xf32> to vector<64x128xbf16>
    %c0_2 = arith.constant 0 : index
    %c0_3 = arith.constant 0 : index
    %5 = vector.load %arg8[%c0_2, %c0_3] : memref<128x512xbf16, #tpu.memory_space<vmem>>, vector<128x512xbf16>
    %cst = arith.constant dense<0.000000e+00> : vector<64x512xf32>
    %6 = tpu.matmul %4, %5, %cst {dimension_numbers = #tpu.dot_dimension_numbers<[1], [0], [0], [1], [0, 0, 1, 1], [], []>} : vector<64x128xbf16>, vector<128x512xbf16>, vector<64x512xf32> -> vector<64x512xf32>
    %c0_4 = arith.constant 0 : index
    %c0_5 = arith.constant 0 : index
    %7 = vector.load %arg4[%c0_4, %c0_5] : memref<1x512xf32, #tpu.memory_space<vmem>>, vector<1x512xf32>
    %8 = vector.broadcast %7 : vector<1x512xf32> to vector<64x512xf32>
    %9 = arith.addf %6, %8 : vector<64x512xf32>
    %c0_6 = arith.constant 0 : index
    %c0_7 = arith.constant 0 : index
    %10 = vector.load %arg10[%c0_6, %c0_7] : memref<64x512xf32, #tpu.memory_space<vmem>>, vector<64x512xf32>
    tpu.vector_store %arg10[%c0_6, %c0_7], %9 {strides = array<i32>} : memref<64x512xf32, #tpu.memory_space<vmem>>, vector<64x512xf32>,
    %c0_i32_8 = arith.constant 0 : i32
    %11 = arith.cmpi eq, %arg0, %c0_i32_8 : i32
    %c8_i32 = arith.constant 8 : i32
    %c8_i32_9 = arith.constant 8 : i32
    %12 = arith.select %11, %c8_i32, %c8_i32_9 : i32
    %c0_10 = arith.constant 0 : index
    %c0_11 = arith.constant 0 : index
    %13 = vector.load %arg11[%c0_10, %c0_11] : memref<8x128xf32, #tpu.memory_space<vmem>>, vector<8x128xf32>
    %c0_12 = arith.constant 0 : index
    %c0_13 = arith.constant 0 : index
    %14 = vector.load %arg12[%c0_12, %c0_13] : memref<8x128xf32, #tpu.memory_space<vmem>>, vector<8x128xf32>
    %c0_i32_14 = arith.constant 0 : i32
    %15 = arith.subi %12, %c0_i32_14 : i32
    %16 = arith.addi %c0_i32_14, %15 : i32
    %c1_i32 = arith.constant 1 : i32
    %17:2 = scf.for %arg14 = %c0_i32_14 to %16 step %c1_i32 iter_args(%arg15 = %13, %arg16 = %14) -> (vector<8x128xf32>, vector<8x128xf32>)  : i32 {
      %c8_i32_21 = arith.constant 8 : i32
      %23 = arith.muli %arg14, %c8_i32_21 : i32
      %24 = tpu.assume_multiple %23, 8 : i32
      %25 = arith.index_cast %24 : i32 to index
      %c0_22 = arith.constant 0 : index
      %26 = vector.load %arg10[%25, %c0_22] : memref<64x512xf32, #tpu.memory_space<vmem>>, vector<8x512xf32>
      %27 = arith.truncf %arg15 : vector<8x128xf32> to vector<8x128xbf16>
      %c0_23 = arith.constant 0 : index
      %c0_24 = arith.constant 0 : index
      %28 = vector.load %arg9[%c0_23, %c0_24] : memref<128x512xbf16, #tpu.memory_space<vmem>>, vector<128x512xbf16>
      %cst_25 = arith.constant dense<0.000000e+00> : vector<8x512xf32>
      %29 = tpu.matmul %27, %28, %cst_25 {dimension_numbers = #tpu.dot_dimension_numbers<[1], [0], [0], [1], [0, 0, 1, 1], [], []>} : vector<8x128xbf16>, vector<128x512xbf16>, vector<8x512xf32> -> vector<8x512xf32>
      %30 = arith.addf %26, %29 : vector<8x512xf32>
      %31 = vector.extract_strided_slice %30 {offsets = [0, 0], sizes = [8, 128], strides = [1, 1]} : vector<8x512xf32> to vector<8x128xf32>
      %32 = arith.negf %31 : vector<8x128xf32>
      %33 = math.exp %32 : vector<8x128xf32>
      %cst_26 = arith.constant 1.000000e+00 : f32
      %34 = vector.broadcast %cst_26 : f32 to vector<8x128xf32>
      %35 = arith.addf %34, %33 : vector<8x128xf32>
      %36 = arith.divf %34, %35 : vector<8x128xf32>
      %37 = vector.extract_strided_slice %30 {offsets = [0, 128], sizes = [8, 128], strides = [1, 1]} : vector<8x512xf32> to vector<8x128xf32>
      %38 = arith.negf %37 : vector<8x128xf32>
      %39 = math.exp %38 : vector<8x128xf32>
      %cst_27 = arith.constant 1.000000e+00 : f32
      %40 = vector.broadcast %cst_27 : f32 to vector<8x128xf32>
      %41 = arith.addf %40, %39 : vector<8x128xf32>
      %42 = arith.divf %40, %41 : vector<8x128xf32>
      %43 = vector.extract_strided_slice %30 {offsets = [0, 256], sizes = [8, 128], strides = [1, 1]} : vector<8x512xf32> to vector<8x128xf32>
      %44 = math.tanh %43 : vector<8x128xf32>
      %45 = vector.extract_strided_slice %30 {offsets = [0, 384], sizes = [8, 128], strides = [1, 1]} : vector<8x512xf32> to vector<8x128xf32>
      %46 = arith.negf %45 : vector<8x128xf32>
      %47 = math.exp %46 : vector<8x128xf32>
      %cst_28 = arith.constant 1.000000e+00 : f32
      %48 = vector.broadcast %cst_28 : f32 to vector<8x128xf32>
      %49 = arith.addf %48, %47 : vector<8x128xf32>
      %50 = arith.divf %48, %49 : vector<8x128xf32>
      %51 = arith.mulf %42, %arg16 : vector<8x128xf32>
      %52 = arith.mulf %36, %44 : vector<8x128xf32>
      %53 = arith.addf %51, %52 : vector<8x128xf32>
      %54 = math.tanh %53 : vector<8x128xf32>
      %55 = arith.mulf %50, %54 : vector<8x128xf32>
      scf.yield %55, %53 : vector<8x128xf32>, vector<8x128xf32>
    }
    %c0_15 = arith.constant 0 : index
    %c0_16 = arith.constant 0 : index
    %18 = vector.load %arg11[%c0_15, %c0_16] : memref<8x128xf32, #tpu.memory_space<vmem>>, vector<8x128xf32>
    tpu.vector_store %arg11[%c0_15, %c0_16], %17#0 {strides = array<i32>} : memref<8x128xf32, #tpu.memory_space<vmem>>, vector<8x128xf32>,
    %c0_17 = arith.constant 0 : index
    %c0_18 = arith.constant 0 : index
    %19 = vector.load %arg12[%c0_17, %c0_18] : memref<8x128xf32, #tpu.memory_space<vmem>>, vector<8x128xf32>
    tpu.vector_store %arg12[%c0_17, %c0_18], %17#1 {strides = array<i32>} : memref<8x128xf32, #tpu.memory_space<vmem>>, vector<8x128xf32>,
    %c0_i32_19 = arith.constant 0 : i32
    %20 = arith.cmpi eq, %arg0, %c0_i32_19 : i32
    %21 = arith.extui %20 : i1 to i32
    %c0_i32_20 = arith.constant 0 : i32
    %22 = arith.cmpi ne, %21, %c0_i32_20 : i32
    scf.if %22 {
      %23 = arith.truncf %17#0 : vector<8x128xf32> to vector<8x128xbf16>
      %c0_21 = arith.constant 0 : index
      %c0_22 = arith.constant 0 : index
      %24 = vector.load %arg5[%c0_21, %c0_22] : memref<128x128xbf16, #tpu.memory_space<vmem>>, vector<128x128xbf16>
      %cst_23 = arith.constant dense<0.000000e+00> : vector<8x128xf32>
      %25 = tpu.matmul %23, %24, %cst_23 {dimension_numbers = #tpu.dot_dimension_numbers<[1], [0], [0], [1], [0, 0, 1, 1], [], []>} : vector<8x128xbf16>, vector<128x128xbf16>, vector<8x128xf32> -> vector<8x128xf32>
      %c0_24 = arith.constant 0 : index
      %c0_25 = arith.constant 0 : index
      %26 = vector.load %arg6[%c0_24, %c0_25] : memref<1x128xf32, #tpu.memory_space<vmem>>, vector<1x128xf32>
      %27 = vector.broadcast %26 : vector<1x128xf32> to vector<8x128xf32>
      %28 = arith.addf %25, %27 : vector<8x128xf32>
      %c0_26 = arith.constant 0 : index
      %c0_27 = arith.constant 0 : index
      %29 = vector.load %arg7[%c0_26, %c0_27] : memref<8x128xf32, #tpu.memory_space<vmem>>, vector<8x128xf32>
      tpu.vector_store %arg7[%c0_26, %c0_27], %28 {strides = array<i32>} : memref<8x128xf32, #tpu.memory_space<vmem>>, vector<8x128xf32>,
    } else {
    }
    return
  }
  func.func @transform_0(%arg0: i32) -> (i32, i32) {
    %c0_i32 = arith.constant 0 : i32
    %c0_i32_0 = arith.constant 0 : i32
    return %arg0, %c0_i32 : i32, i32
  }
  func.func @transform_3(%arg0: i32) -> (i32, i32) {
    %c0_i32 = arith.constant 0 : i32
    %c0_i32_0 = arith.constant 0 : i32
    %c0_i32_1 = arith.constant 0 : i32
    return %c0_i32, %c0_i32_0 : i32, i32
  }
  func.func @transform_4(%arg0: i32) -> (i32, i32) {
    %c0_i32 = arith.constant 0 : i32
    %c0_i32_0 = arith.constant 0 : i32
    %c0_i32_1 = arith.constant 0 : i32
    return %c0_i32, %c0_i32_0 : i32, i32
  }
  func.func @transform_5(%arg0: i32) -> (i32, i32) {
    %c0_i32 = arith.constant 0 : i32
    %c0_i32_0 = arith.constant 0 : i32
    %c0_i32_1 = arith.constant 0 : i32
    return %c0_i32, %c0_i32_0 : i32, i32
  }
  func.func @transform_6(%arg0: i32) -> (i32, i32) {
    %c0_i32 = arith.constant 0 : i32
    %c0_i32_0 = arith.constant 0 : i32
    %c0_i32_1 = arith.constant 0 : i32
    return %c0_i32, %c0_i32_0 : i32, i32
  }
}

</mosaic_0001>

<llo_original>
// kernel: lstm_model_forward.3
$region0: #{lstm_model_forward.3}
  #allocation0 [shape = 'u32[]', space=smem, size = 0x4, offset = 0x4, fixed_abs, tag = 'smem constant byte address 0x4 - core index']
  #allocation1 [shape = 'u32[144,128]{1,0:T(1,128)}', space=vmem, size = 0x12000, scoped, tag = 'internal scratch']
  #allocation2 [shape = 'bf16[128,512]{1,0:T(8,128)(2,1)}', space=vmem, size = 0x20000, scoped, tag = 'scratch operand']
  #allocation3 [shape = 'bf16[128,512]{1,0:T(8,128)(2,1)}', space=vmem, size = 0x20000, scoped, tag = 'scratch operand']
  #allocation4 [shape = 'f32[64,512]{1,0:T(8,128)}', space=vmem, size = 0x20000, scoped, tag = 'scratch operand']
  #allocation5 [shape = 'f32[8,128]{1,0:T(8,128)}', space=vmem, size = 0x1000, scoped, tag = 'scratch operand']
  #allocation6 [shape = 'f32[8,128]{1,0:T(8,128)}', space=vmem, size = 0x1000, scoped, tag = 'scratch operand']
  #allocation7 [shape = 's32[2]{0}', space=sflag, size = 0x8, scoped, tag = 'scratch operand']
  #allocation8 [shape = 's32[]', space=sflag, size = 0x4, offset = 0, fixed_abs, tag = 'sflag constant byte address 0x0 - dummy sync flag']
  #allocation9 [shape = 's32[]', space=sflag, size = 0x4, offset = 0, fixed_abs, tag = 'sflag constant byte address 0x0 - dummy sync flag']
  %s0 = inlined_call_operand.vmem [shape: f32[64,128], index: 0, kind: input, shape index: {}]
  %s1 = inlined_call_operand.vmem [shape: bf16[128,512], index: 1, kind: input, shape index: {}]
  %s2 = inlined_call_operand.vmem [shape: bf16[128,512], index: 2, kind: input, shape index: {}]
  %s3 = inlined_call_operand.vmem [shape: f32[1,512], index: 3, kind: input, shape index: {}]
  %s4 = inlined_call_operand.vmem [shape: bf16[128,128], index: 4, kind: input, shape index: {}]
  %s5 = inlined_call_operand.vmem [shape: f32[1,128], index: 5, kind: input, shape index: {}]
  %s6 = inlined_call_operand.vmem [shape: f32[8,128], index: 6, kind: output, shape index: {}]
  %s7 = sld [smem:[#allocation0]]
  $region109: #{lstm_model_forward.3} parent=0
    _
  %s9 = ssub.s32 1, %s7
  %s10 = scalar_select 0, %s9, %s7
  // Predicated region
  $region2: #{lstm_model_forward.3} parent=0 // pred_check
    _
  $region3: #{lstm_model_forward.3} parent=0 // pred_check_branch
    %12 = sbr.rel (0) target = $region5
  $region4: #{lstm_model_forward.3} parent=0 // pred_region
    _
  $region5: #{lstm_model_forward.3} parent=0 // pred_fallthru
    _
  // Predicated region
  $region6: #{lstm_model_forward.3} parent=0 // pred_check
    _
  $region7: #{lstm_model_forward.3} parent=0 // pred_check_branch
    %14 = sbr.rel (0) target = $region9
  $region8: #{lstm_model_forward.3} parent=0 // pred_region
    _
  $region9: #{lstm_model_forward.3} parent=0 // pred_fallthru
    _
  // Predicated region
  $region10: #{lstm_model_forward.3} parent=0 // pred_check
    _
  $region11: #{lstm_model_forward.3} parent=0 // pred_check_branch
    %16 = sbr.rel (0) target = $region13
  $region12: #{lstm_model_forward.3} parent=0 // pred_region
    _
  $region13: #{lstm_model_forward.3} parent=0 // pred_fallthru
    _
  // Predicated region
  $region14: #{lstm_model_forward.3} parent=0 // pred_check
    _
  $region15: #{lstm_model_forward.3} parent=0 // pred_check_branch
    %18 = sbr.rel (0) target = $region17
  $region16: #{lstm_model_forward.3} parent=0 // pred_region
    _
  $region17: #{lstm_model_forward.3} parent=0 // pred_fallthru
    _
  %p20 = scmp.eq.s32.totalorder 0, 0
  // Predicated region
  $region18: #{lstm_model_forward.3} parent=0 // pred_check
    %p21 = pneg %p20
  $region19: #{lstm_model_forward.3} parent=0 // pred_check_branch
    %23 = sbr.rel (%p21) target = $region21
  $region20: #{lstm_model_forward.3} parent=0 // pred_region
    %p25 = scmp.lt.u32.totalorder 256, 8
    %p26 = pneg %p25
    // Predicated region
    $region22: #{lstm_model_forward.3} parent=20 // pred_check
      _
    $region23: #{lstm_model_forward.3} parent=20 // pred_check_branch
      %28 = sbr.rel (%p25) target = $region25
    $region24: #{lstm_model_forward.3} parent=20 // pred_region
      %s44 = sand.u32 256, 7
      %p45 = scmp.eq.s32.totalorder %s44, 0
      // Predicated region
      $region37: #{lstm_model_forward.3} parent=24 // pred_check
        %p46 = pneg %p45
      $region38: #{lstm_model_forward.3} parent=24 // pred_check_branch
        %48 = sbr.rel (%p46) target = $region40
      $region39: #{lstm_model_forward.3} parent=24 // pred_region
        loop: start=0, step=1, limit=1
        $region41: #{lstm_model_forward.3} parent=39 // loop_pre_header
          _
        $region42: #{lstm_model_forward.3} parent=39 // loop_header
          %s50 = sphi 0, %s54
          %p51 = scmp.ge.s32.totalorder %s50, 1
          %s55 = sphi %s1, %s1
          %s56 = sphi [#allocation2], [#allocation2]
        $region43: #{lstm_model_forward.3} parent=39 // loop_header_branch
          %53 = sbr.rel (%p51) target = $region47
        $region44: #{lstm_model_forward.3} parent=39 // loop_body
          %v57 = vld [vmem:[%s55] sm:$0xff]
          %58 = vst [vmem:[%s56] sm:$0xff] %v57
          %v59 = vld [vmem:[%s55 + $0x8] sm:$0xff]
          %60 = vst [vmem:[%s56 + $0x8] sm:$0xff] %v59
          %v61 = vld [vmem:[%s55 + $0x10] sm:$0xff]
          %62 = vst [vmem:[%s56 + $0x10] sm:$0xff] %v61
          %v63 = vld [vmem:[%s55 + $0x18] sm:$0xff]
          %64 = vst [vmem:[%s56 + $0x18] sm:$0xff] %v63
          %v65 = vld [vmem:[%s55 + $0x20] sm:$0xff]
          %66 = vst [vmem:[%s56 + $0x20] sm:$0xff] %v65
          %v67 = vld [vmem:[%s55 + $0x28] sm:$0xff]
          %68 = vst [vmem:[%s56 + $0x28] sm:$0xff] %v67
          %v69 = vld [vmem:[%s55 + $0x30] sm:$0xff]
          %70 = vst [vmem:[%s56 + $0x30] sm:$0xff] %v69
          %v71 = vld [vmem:[%s55 + $0x38] sm:$0xff]
          %72 = vst [vmem:[%s56 + $0x38] sm:$0xff] %v71
          %v73 = vld [vmem:[%s55 + $0x40] sm:$0xff]
          %74 = vst [vmem:[%s56 + $0x40] sm:$0xff] %v73
          %v75 = vld [vmem:[%s55 + $0x48] sm:$0xff]
          %76 = vst [vmem:[%s56 + $0x48] sm:$0xff] %v75
          %v77 = vld [vmem:[%s55 + $0x50] sm:$0xff]
          %78 = vst [vmem:[%s56 + $0x50] sm:$0xff] %v77
          %v79 = vld [vmem:[%s55 + $0x58] sm:$0xff]
          %80 = vst [vmem:[%s56 + $0x58] sm:$0xff] %v79
          %v81 = vld [vmem:[%s55 + $0x60] sm:$0xff]
          %82 = vst [vmem:[%s56 + $0x60] sm:$0xff] %v81
          %v83 = vld [vmem:[%s55 + $0x68] sm:$0xff]
          %84 = vst [vmem:[%s56 + $0x68] sm:$0xff] %v83
          %v85 = vld [vmem:[%s55 + $0x70] sm:$0xff]
          %86 = vst [vmem:[%s56 + $0x70] sm:$0xff] %v85
          %v87 = vld [vmem:[%s55 + $0x78] sm:$0xff]
          %88 = vst [vmem:[%s56 + $0x78] sm:$0xff] %v87
          %v89 = vld [vmem:[%s55 + $0x80] sm:$0xff]
          %90 = vst [vmem:[%s56 + $0x80] sm:$0xff] %v89
          %v91 = vld [vmem:[%s55 + $0x88] sm:$0xff]
          %92 = vst [vmem:[%s56 + $0x88] sm:$0xff] %v91
          %v93 = vld [vmem:[%s55 + $0x90] sm:$0xff]
          %94 = vst [vmem:[%s56 + $0x90] sm:$0xff] %v93
          %v95 = vld [vmem:[%s55 + $0x98] sm:$0xff]
          %96 = vst [vmem:[%s56 + $0x98] sm:$0xff] %v95
          %v97 = vld [vmem:[%s55 + $0xa0] sm:$0xff]
          %98 = vst [vmem:[%s56 + $0xa0] sm:$0xff] %v97
          %v99 = vld [vmem:[%s55 + $0xa8] sm:$0xff]
          %100 = vst [vmem:[%s56 + $0xa8] sm:$0xff] %v99
          %v101 = vld [vmem:[%s55 + $0xb0] sm:$0xff]
          %102 = vst [vmem:[%s56 + $0xb0] sm:$0xff] %v101
          %v103 = vld [vmem:[%s55 + $0xb8] sm:$0xff]
          %104 = vst [vmem:[%s56 + $0xb8] sm:$0xff] %v103
          %v105 = vld [vmem:[%s55 + $0xc0] sm:$0xff]
          %106 = vst [vmem:[%s56 + $0xc0] sm:$0xff] %v105
          %v107 = vld [vmem:[%s55 + $0xc8] sm:$0xff]
          %108 = vst [vmem:[%s56 + $0xc8] sm:$0xff] %v107
          %v109 = vld [vmem:[%s55 + $0xd0] sm:$0xff]
          %110 = vst [vmem:[%s56 + $0xd0] sm:$0xff] %v109
          %v111 = vld [vmem:[%s55 + $0xd8] sm:$0xff]
          %112 = vst [vmem:[%s56 + $0xd8] sm:$0xff] %v111
          %v113 = vld [vmem:[%s55 + $0xe0] sm:$0xff]
          %114 = vst [vmem:[%s56 + $0xe0] sm:$0xff] %v113
          %v115 = vld [vmem:[%s55 + $0xe8] sm:$0xff]
          %116 = vst [vmem:[%s56 + $0xe8] sm:$0xff] %v115
          %v117 = vld [vmem:[%s55 + $0xf0] sm:$0xff]
          %118 = vst [vmem:[%s56 + $0xf0] sm:$0xff] %v117
          %v119 = vld [vmem:[%s55 + $0xf8] sm:$0xff]
          %120 = vst [vmem:[%s56 + $0xf8] sm:$0xff] %v119
        $region45: #{lstm_model_forward.3} parent=39 // loop_footer
          %s54 = sadd.s32 1, %s50
        $region46: #{lstm_model_forward.3} parent=39 // loop_footer_branch
          %49 = sbr.rel target = $region42
        $region47: #{lstm_model_forward.3} parent=39 // loop_exit
          _
      $region40: #{lstm_model_forward.3} parent=24 // pred_fallthru
        _
      %p121 = pneg %p45
      // Predicated region
      $region48: #{lstm_model_forward.3} parent=24 // pred_check
        _
      $region49: #{lstm_model_forward.3} parent=24 // pred_check_branch
        %123 = sbr.rel (%p45) target = $region51
      $region50: #{lstm_model_forward.3} parent=24 // pred_region
        %s124 = sand.u32 256, 7
      $region51: #{lstm_model_forward.3} parent=24 // pred_fallthru
        _
    $region25: #{lstm_model_forward.3} parent=20 // pred_fallthru
      _
    // Predicated region
    $region26: #{lstm_model_forward.3} parent=20 // pred_check
      %p29 = pneg %p25
    $region27: #{lstm_model_forward.3} parent=20 // pred_check_branch
      %31 = sbr.rel (%p29) target = $region29
    $region28: #{lstm_model_forward.3} parent=20 // pred_region
      %s32 = sshll.u32 1, 256
      %s33 = ssub.s32 %s32, 1
      loop: start=0, step=1, limit=1
      $region30: #{lstm_model_forward.3} parent=28 // loop_pre_header
        _
      $region31: #{lstm_model_forward.3} parent=28 // loop_header
        %s35 = sphi 0, %s39
        %p36 = scmp.ge.s32.totalorder %s35, 1
        %s40 = sphi %s1, %s1
        %s41 = sphi [#allocation2], [#allocation2]
      $region32: #{lstm_model_forward.3} parent=28 // loop_header_branch
        %38 = sbr.rel (%p36) target = $region36
      $region33: #{lstm_model_forward.3} parent=28 // loop_body
        %v42 = vld [vmem:[%s40] sm:%s33]
        %43 = vst [vmem:[%s41] sm:%s33] %v42
      $region34: #{lstm_model_forward.3} parent=28 // loop_footer
        %s39 = sadd.s32 1, %s35
      $region35: #{lstm_model_forward.3} parent=28 // loop_footer_branch
        %34 = sbr.rel target = $region31
      $region36: #{lstm_model_forward.3} parent=28 // loop_exit
        _
    $region29: #{lstm_model_forward.3} parent=20 // pred_fallthru
      _
    // Predicated region
    $region52: #{lstm_model_forward.3} parent=20 // pred_check
      _
    $region53: #{lstm_model_forward.3} parent=20 // pred_check_branch
      %127 = sbr.rel (0) target = $region55
    $region54: #{lstm_model_forward.3} parent=20 // pred_region
      %128 = vsyncadd [#allocation7], 4096
    $region55: #{lstm_model_forward.3} parent=20 // pred_fallthru
      _
    %s129 = scalar_lea.sflag [#allocation7], 1
    %p131 = scmp.lt.u32.totalorder 256, 8
    %p132 = pneg %p131
    // Predicated region
    $region56: #{lstm_model_forward.3} parent=20 // pred_check
      _
    $region57: #{lstm_model_forward.3} parent=20 // pred_check_branch
      %134 = sbr.rel (%p131) target = $region59
    $region58: #{lstm_model_forward.3} parent=20 // pred_region
      %s150 = sand.u32 256, 7
      %p151 = scmp.eq.s32.totalorder %s150, 0
      // Predicated region
      $region71: #{lstm_model_forward.3} parent=58 // pred_check
        %p152 = pneg %p151
      $region72: #{lstm_model_forward.3} parent=58 // pred_check_branch
        %154 = sbr.rel (%p152) target = $region74
      $region73: #{lstm_model_forward.3} parent=58 // pred_region
        loop: start=0, step=1, limit=1
        $region75: #{lstm_model_forward.3} parent=73 // loop_pre_header
          _
        $region76: #{lstm_model_forward.3} parent=73 // loop_header
          %s156 = sphi 0, %s160
          %p157 = scmp.ge.s32.totalorder %s156, 1
          %s161 = sphi %s2, %s2
          %s162 = sphi [#allocation3], [#allocation3]
        $region77: #{lstm_model_forward.3} parent=73 // loop_header_branch
          %159 = sbr.rel (%p157) target = $region81
        $region78: #{lstm_model_forward.3} parent=73 // loop_body
          %v163 = vld [vmem:[%s161] sm:$0xff]
          %164 = vst [vmem:[%s162] sm:$0xff] %v163
          %v165 = vld [vmem:[%s161 + $0x8] sm:$0xff]
          %166 = vst [vmem:[%s162 + $0x8] sm:$0xff] %v165
          %v167 = vld [vmem:[%s161 + $0x10] sm:$0xff]
          %168 = vst [vmem:[%s162 + $0x10] sm:$0xff] %v167
          %v169 = vld [vmem:[%s161 + $0x18] sm:$0xff]
          %170 = vst [vmem:[%s162 + $0x18] sm:$0xff] %v169
          %v171 = vld [vmem:[%s161 + $0x20] sm:$0xff]
          %172 = vst [vmem:[%s162 + $0x20] sm:$0xff] %v171
          %v173 = vld [vmem:[%s161 + $0x28] sm:$0xff]
          %174 = vst [vmem:[%s162 + $0x28] sm:$0xff] %v173
          %v175 = vld [vmem:[%s161 + $0x30] sm:$0xff]
          %176 = vst [vmem:[%s162 + $0x30] sm:$0xff] %v175
          %v177 = vld [vmem:[%s161 + $0x38] sm:$0xff]
          %178 = vst [vmem:[%s162 + $0x38] sm:$0xff] %v177
          %v179 = vld [vmem:[%s161 + $0x40] sm:$0xff]
          %180 = vst [vmem:[%s162 + $0x40] sm:$0xff] %v179
          %v181 = vld [vmem:[%s161 + $0x48] sm:$0xff]
          %182 = vst [vmem:[%s162 + $0x48] sm:$0xff] %v181
          %v183 = vld [vmem:[%s161 + $0x50] sm:$0xff]
          %184 = vst [vmem:[%s162 + $0x50] sm:$0xff] %v183
          %v185 = vld [vmem:[%s161 + $0x58] sm:$0xff]
          %186 = vst [vmem:[%s162 + $0x58] sm:$0xff] %v185
          %v187 = vld [vmem:[%s161 + $0x60] sm:$0xff]
          %188 = vst [vmem:[%s162 + $0x60] sm:$0xff] %v187
          %v189 = vld [vmem:[%s161 + $0x68] sm:$0xff]
          %190 = vst [vmem:[%s162 + $0x68] sm:$0xff] %v189
          %v191 = vld [vmem:[%s161 + $0x70] sm:$0xff]
          %192 = vst [vmem:[%s162 + $0x70] sm:$0xff] %v191
          %v193 = vld [vmem:[%s161 + $0x78] sm:$0xff]
          %194 = vst [vmem:[%s162 + $0x78] sm:$0xff] %v193
          %v195 = vld [vmem:[%s161 + $0x80] sm:$0xff]
          %196 = vst [vmem:[%s162 + $0x80] sm:$0xff] %v195
          %v197 = vld [vmem:[%s161 + $0x88] sm:$0xff]
          %198 = vst [vmem:[%s162 + $0x88] sm:$0xff] %v197
          %v199 = vld [vmem:[%s161 + $0x90] sm:$0xff]
          %200 = vst [vmem:[%s162 + $0x90] sm:$0xff] %v199
          %v201 = vld [vmem:[%s161 + $0x98] sm:$0xff]
          %202 = vst [vmem:[%s162 + $0x98] sm:$0xff] %v201
          %v203 = vld [vmem:[%s161 + $0xa0] sm:$0xff]
          %204 = vst [vmem:[%s162 + $0xa0] sm:$0xff] %v203
          %v205 = vld [vmem:[%s161 + $0xa8] sm:$0xff]
          %206 = vst [vmem:[%s162 + $0xa8] sm:$0xff] %v205
          %v207 = vld [vmem:[%s161 + $0xb0] sm:$0xff]
          %208 = vst [vmem:[%s162 + $0xb0] sm:$0xff] %v207
          %v209 = vld [vmem:[%s161 + $0xb8] sm:$0xff]
          %210 = vst [vmem:[%s162 + $0xb8] sm:$0xff] %v209
          %v211 = vld [vmem:[%s161 + $0xc0] sm:$0xff]
          %212 = vst [vmem:[%s162 + $0xc0] sm:$0xff] %v211
          %v213 = vld [vmem:[%s161 + $0xc8] sm:$0xff]
          %214 = vst [vmem:[%s162 + $0xc8] sm:$0xff] %v213
          %v215 = vld [vmem:[%s161 + $0xd0] sm:$0xff]
          %216 = vst [vmem:[%s162 + $0xd0] sm:$0xff] %v215
          %v217 = vld [vmem:[%s161 + $0xd8] sm:$0xff]
          %218 = vst [vmem:[%s162 + $0xd8] sm:$0xff] %v217
          %v219 = vld [vmem:[%s161 + $0xe0] sm:$0xff]
          %220 = vst [vmem:[%s162 + $0xe0] sm:$0xff] %v219
          %v221 = vld [vmem:[%s161 + $0xe8] sm:$0xff]
          %222 = vst [vmem:[%s162 + $0xe8] sm:$0xff] %v221
          %v223 = vld [vmem:[%s161 + $0xf0] sm:$0xff]
          %224 = vst [vmem:[%s162 + $0xf0] sm:$0xff] %v223
          %v225 = vld [vmem:[%s161 + $0xf8] sm:$0xff]
          %226 = vst [vmem:[%s162 + $0xf8] sm:$0xff] %v225
        $region79: #{lstm_model_forward.3} parent=73 // loop_footer
          %s160 = sadd.s32 1, %s156
        $region80: #{lstm_model_forward.3} parent=73 // loop_footer_branch
          %155 = sbr.rel target = $region76
        $region81: #{lstm_model_forward.3} parent=73 // loop_exit
          _
      $region74: #{lstm_model_forward.3} parent=58 // pred_fallthru
        _
      %p227 = pneg %p151
      // Predicated region
      $region82: #{lstm_model_forward.3} parent=58 // pred_check
        _
      $region83: #{lstm_model_forward.3} parent=58 // pred_check_branch
        %229 = sbr.rel (%p151) target = $region85
      $region84: #{lstm_model_forward.3} parent=58 // pred_region
        %s230 = sand.u32 256, 7
      $region85: #{lstm_model_forward.3} parent=58 // pred_fallthru
        _
    $region59: #{lstm_model_forward.3} parent=20 // pred_fallthru
      _
    // Predicated region
    $region60: #{lstm_model_forward.3} parent=20 // pred_check
      %p135 = pneg %p131
    $region61: #{lstm_model_forward.3} parent=20 // pred_check_branch
      %137 = sbr.rel (%p135) target = $region63
    $region62: #{lstm_model_forward.3} parent=20 // pred_region
      %s138 = sshll.u32 1, 256
      %s139 = ssub.s32 %s138, 1
      loop: start=0, step=1, limit=1
      $region64: #{lstm_model_forward.3} parent=62 // loop_pre_header
        _
      $region65: #{lstm_model_forward.3} parent=62 // loop_header
        %s141 = sphi 0, %s145
        %p142 = scmp.ge.s32.totalorder %s141, 1
        %s146 = sphi %s2, %s2
        %s147 = sphi [#allocation3], [#allocation3]
      $region66: #{lstm_model_forward.3} parent=62 // loop_header_branch
        %144 = sbr.rel (%p142) target = $region70
      $region67: #{lstm_model_forward.3} parent=62 // loop_body
        %v148 = vld [vmem:[%s146] sm:%s139]
        %149 = vst [vmem:[%s147] sm:%s139] %v148
      $region68: #{lstm_model_forward.3} parent=62 // loop_footer
        %s145 = sadd.s32 1, %s141
      $region69: #{lstm_model_forward.3} parent=62 // loop_footer_branch
        %140 = sbr.rel target = $region65
      $region70: #{lstm_model_forward.3} parent=62 // loop_exit
        _
    $region63: #{lstm_model_forward.3} parent=20 // pred_fallthru
      _
    // Predicated region
    $region86: #{lstm_model_forward.3} parent=20 // pred_check
      _
    $region87: #{lstm_model_forward.3} parent=20 // pred_check_branch
      %233 = sbr.rel (0) target = $region89
    $region88: #{lstm_model_forward.3} parent=20 // pred_region
      %234 = vsyncadd %s129, 4096
    $region89: #{lstm_model_forward.3} parent=20 // pred_fallthru
      _
    %s235 = smul.u32 4, 16
    %s236 = smul.u32 %s235, 4
    %s237 = sshll.u32 %s236, 4
    %238 = dma.done [#allocation7], %s237
    %s239 = sshll.u32 %s236, 4
    %240 = dma.done %s129, %s239
    %241 = vst [vmem:[#allocation5] sm:$0xff] 0.0
    %242 = vst [vmem:[#allocation6] sm:$0xff] 0.0
  $region21: #{lstm_model_forward.3} parent=0 // pred_fallthru
    _
  %v243 = vld [vmem:[%s0] sm:$0xff]
  %v244 = vld [vmem:[%s0 + $0x8] sm:$0xff]
  %v245 = vld [vmem:[%s0 + $0x10] sm:$0xff]
  %v246 = vld [vmem:[%s0 + $0x18] sm:$0xff]
  %v247 = vld [vmem:[%s0 + $0x20] sm:$0xff]
  %v248 = vld [vmem:[%s0 + $0x28] sm:$0xff]
  %v249 = vld [vmem:[%s0 + $0x30] sm:$0xff]
  %v250 = vld [vmem:[%s0 + $0x38] sm:$0xff]
  %v251 = vpack.c.bf16 %v244, %v243
  %v252 = vpack.c.bf16 %v246, %v245
  %v253 = vpack.c.bf16 %v248, %v247
  %v254 = vpack.c.bf16 %v250, %v249
  %v255 = vld [vmem:[#allocation2] sm:$0xff]
  %v256 = vld [vmem:[#allocation2 + $0x8] sm:$0xff]
  %v257 = vld [vmem:[#allocation2 + $0x10] sm:$0xff]
  %v258 = vld [vmem:[#allocation2 + $0x18] sm:$0xff]
  %v259 = vld [vmem:[#allocation2 + $0x20] sm:$0xff]
  %v260 = vld [vmem:[#allocation2 + $0x28] sm:$0xff]
  %v261 = vld [vmem:[#allocation2 + $0x30] sm:$0xff]
  %v262 = vld [vmem:[#allocation2 + $0x38] sm:$0xff]
  %v263 = vld [vmem:[#allocation2 + $0x40] sm:$0xff]
  %v264 = vld [vmem:[#allocation2 + $0x48] sm:$0xff]
  %v265 = vld [vmem:[#allocation2 + $0x50] sm:$0xff]
  %v266 = vld [vmem:[#allocation2 + $0x58] sm:$0xff]
  %v267 = vld [vmem:[#allocation2 + $0x60] sm:$0xff]
  %v268 = vld [vmem:[#allocation2 + $0x68] sm:$0xff]
  %v269 = vld [vmem:[#allocation2 + $0x70] sm:$0xff]
  %v270 = vld [vmem:[#allocation2 + $0x78] sm:$0xff]
  %v271 = vld [vmem:[#allocation2 + $0x80] sm:$0xff]
  %v272 = vld [vmem:[#allocation2 + $0x88] sm:$0xff]
  %v273 = vld [vmem:[#allocation2 + $0x90] sm:$0xff]
  %v274 = vld [vmem:[#allocation2 + $0x98] sm:$0xff]
  %v275 = vld [vmem:[#allocation2 + $0xa0] sm:$0xff]
  %v276 = vld [vmem:[#allocation2 + $0xa8] sm:$0xff]
  %v277 = vld [vmem:[#allocation2 + $0xb0] sm:$0xff]
  %v278 = vld [vmem:[#allocation2 + $0xb8] sm:$0xff]
  %v279 = vld [vmem:[#allocation2 + $0xc0] sm:$0xff]
  %v280 = vld [vmem:[#allocation2 + $0xc8] sm:$0xff]
  %v281 = vld [vmem:[#allocation2 + $0xd0] sm:$0xff]
  %v282 = vld [vmem:[#allocation2 + $0xd8] sm:$0xff]
  %v283 = vld [vmem:[#allocation2 + $0xe0] sm:$0xff]
  %v284 = vld [vmem:[#allocation2 + $0xe8] sm:$0xff]
  %v285 = vld [vmem:[#allocation2 + $0xf0] sm:$0xff]
  %v286 = vld [vmem:[#allocation2 + $0xf8] sm:$0xff]
  %v287 = vld [vmem:[%s3] sm:$0xf]
  %v289 = vlaneseq
  %v290 = vshrl.u32 %v289, 7
  %v291 = vsub.s32 0, %v290
  %v292 = vrot.slane %v287, %v291
  %v293 = vlaneseq
  %v294 = vshrl.u32 %v293, 7
  %v295 = vsub.s32 1, %v294
  %v296 = vrot.slane %v287, %v295
  %v297 = vlaneseq
  %v298 = vshrl.u32 %v297, 7
  %v299 = vsub.s32 2, %v298
  %v300 = vrot.slane %v287, %v299
  %v301 = vlaneseq
  %v302 = vshrl.u32 %v301, 7
  %v303 = vsub.s32 3, %v302
  %v304 = vrot.slane %v287, %v303
  %v341 = vunpack.c.l.b16 %v255
  %v342 = vunpack.c.h.b16 %v255
  %v343 = vunpack.c.l.b16 %v256
  %v344 = vunpack.c.h.b16 %v256
  %v345 = vunpack.c.l.b16 %v257
  %v346 = vunpack.c.h.b16 %v257
  %v347 = vunpack.c.l.b16 %v258
  %v348 = vunpack.c.h.b16 %v258
  %v349 = vunpack.c.l.b16 %v259
  %v350 = vunpack.c.h.b16 %v259
  %v351 = vunpack.c.l.b16 %v260
  %v352 = vunpack.c.h.b16 %v260
  %v353 = vunpack.c.l.b16 %v261
  %v354 = vunpack.c.h.b16 %v261
  %v355 = vunpack.c.l.b16 %v262
  %v356 = vunpack.c.h.b16 %v262
  %v357 = vunpack.c.l.b16 %v263
  %v358 = vunpack.c.h.b16 %v263
  %v359 = vunpack.c.l.b16 %v264
  %v360 = vunpack.c.h.b16 %v264
  %v361 = vunpack.c.l.b16 %v265
  %v362 = vunpack.c.h.b16 %v265
  %v363 = vunpack.c.l.b16 %v266
  %v364 = vunpack.c.h.b16 %v266
  %v365 = vunpack.c.l.b16 %v267
  %v366 = vunpack.c.h.b16 %v267
  %v367 = vunpack.c.l.b16 %v268
  %v368 = vunpack.c.h.b16 %v268
  %v369 = vunpack.c.l.b16 %v269
  %v370 = vunpack.c.h.b16 %v269
  %v371 = vunpack.c.l.b16 %v270
  %v372 = vunpack.c.h.b16 %v270
  %v373 = vunpack.c.l.b16 %v271
  %v374 = vunpack.c.h.b16 %v271
  %v375 = vunpack.c.l.b16 %v272
  %v376 = vunpack.c.h.b16 %v272
  %v377 = vunpack.c.l.b16 %v273
  %v378 = vunpack.c.h.b16 %v273
  %v379 = vunpack.c.l.b16 %v274
  %v380 = vunpack.c.h.b16 %v274
  %v381 = vunpack.c.l.b16 %v275
  %v382 = vunpack.c.h.b16 %v275
  %v383 = vunpack.c.l.b16 %v276
  %v384 = vunpack.c.h.b16 %v276
  %v385 = vunpack.c.l.b16 %v277
  %v386 = vunpack.c.h.b16 %v277
  %v387 = vunpack.c.l.b16 %v278
  %v388 = vunpack.c.h.b16 %v278
  %v389 = vunpack.c.l.b16 %v279
  %v390 = vunpack.c.h.b16 %v279
  %v391 = vunpack.c.l.b16 %v280
  %v392 = vunpack.c.h.b16 %v280
  %v393 = vunpack.c.l.b16 %v281
  %v394 = vunpack.c.h.b16 %v281
  %v395 = vunpack.c.l.b16 %v282
  %v396 = vunpack.c.h.b16 %v282
  %v397 = vunpack.c.l.b16 %v283
  %v398 = vunpack.c.h.b16 %v283
  %v399 = vunpack.c.l.b16 %v284
  %v400 = vunpack.c.h.b16 %v284
  %v401 = vunpack.c.l.b16 %v285
  %v402 = vunpack.c.h.b16 %v285
  %v403 = vunpack.c.l.b16 %v286
  %v404 = vunpack.c.h.b16 %v286
  %v405 = vpack.c.b16 %v345, %v341
  %v406 = vpack.c.b16 %v346, %v342
  %v407 = vpack.c.b16 %v347, %v343
  %v408 = vpack.c.b16 %v348, %v344
  %v409 = vpack.c.b16 %v353, %v349
  %v410 = vpack.c.b16 %v354, %v350
  %v411 = vpack.c.b16 %v355, %v351
  %v412 = vpack.c.b16 %v356, %v352
  %v413 = vpack.c.b16 %v361, %v357
  %v414 = vpack.c.b16 %v362, %v358
  %v415 = vpack.c.b16 %v363, %v359
  %v416 = vpack.c.b16 %v364, %v360
  %v417 = vpack.c.b16 %v369, %v365
  %v418 = vpack.c.b16 %v370, %v366
  %v419 = vpack.c.b16 %v371, %v367
  %v420 = vpack.c.b16 %v372, %v368
  %v421 = vpack.c.b16 %v377, %v373
  %v422 = vpack.c.b16 %v378, %v374
  %v423 = vpack.c.b16 %v379, %v375
  %v424 = vpack.c.b16 %v380, %v376
  %v425 = vpack.c.b16 %v385, %v381
  %v426 = vpack.c.b16 %v386, %v382
  %v427 = vpack.c.b16 %v387, %v383
  %v428 = vpack.c.b16 %v388, %v384
  %v429 = vpack.c.b16 %v393, %v389
  %v430 = vpack.c.b16 %v394, %v390
  %v431 = vpack.c.b16 %v395, %v391
  %v432 = vpack.c.b16 %v396, %v392
  %v433 = vpack.c.b16 %v401, %v397
  %v434 = vpack.c.b16 %v402, %v398
  %v435 = vpack.c.b16 %v403, %v399
  %v436 = vpack.c.b16 %v404, %v400
  %469 = vmatprep.subr.bf16.mxu0 %v434
  %470 = vmatpush1.bf16.msra.mxu0 %v433
  %471 = vmatprep.subr.bf16.mxu0 %v430
  %472 = vmatpush1.bf16.msra.mxu0 %v429
  %473 = vmatprep.subr.bf16.mxu0 %v426
  %474 = vmatpush1.bf16.msra.mxu0 %v425
  %475 = vmatprep.subr.bf16.mxu0 %v422
  %476 = vmatpush1.bf16.msra.mxu0 %v421
  %477 = vmatprep.subr.bf16.mxu0 %v418
  %478 = vmatpush1.bf16.msra.mxu0 %v417
  %479 = vmatprep.subr.bf16.mxu0 %v414
  %480 = vmatpush1.bf16.msra.mxu0 %v413
  %481 = vmatprep.subr.bf16.mxu0 %v410
  %482 = vmatpush1.bf16.msra.mxu0 %v409
  %483 = vmatprep.subr.bf16.mxu0 %v406
  %484 = vmatpush1.bf16.msra.mxu0 %v405
  %485 = vmatprep.subr.bf16.mxu0 0
  %486 = vmatpush2.bf16.msra.mxu0 0
  %487 = vmatprep.subr.bf16.mxu0 0
  %488 = vmatpush2.bf16.msra.mxu0 0
  %489 = vmatprep.subr.bf16.mxu0 0
  %490 = vmatpush2.bf16.msra.mxu0 0
  %491 = vmatprep.subr.bf16.mxu0 0
  %492 = vmatpush2.bf16.msra.mxu0 0
  %493 = vmatprep.subr.bf16.mxu0 0
  %494 = vmatpush2.bf16.msra.mxu0 0
  %495 = vmatprep.subr.bf16.mxu0 0
  %496 = vmatpush2.bf16.msra.mxu0 0
  %497 = vmatprep.subr.bf16.mxu0 0
  %498 = vmatpush2.bf16.msra.mxu0 0
  %499 = vmatprep.subr.bf16.mxu0 0
  %500 = vmatpush2.bf16.msra.mxu0 0
  %501 = vmatprep.mubr.bf16.mxu0 0
  %502 = vmatmul.mubr.bf16.gmra.mxu0 %v251
  %v503 = vpop.f32.mrf.mxu0
  %v504 = vadd.f32 %v292, %v503
  %v505 = vpop.f32.mrf.mxu0
  %v506 = vadd.f32 %v296, %v505
  %v507 = vpop.f32.mrf.mxu0
  %v508 = vadd.f32 %v292, %v507
  %v509 = vpop.f32.mrf.mxu0
  %v510 = vadd.f32 %v296, %v509
  %511 = vmatprep.mubr.bf16.mxu0 0
  %512 = vmatmul.mubr.bf16.gmra.mxu0 %v252
  %v513 = vpop.f32.mrf.mxu0
  %v514 = vadd.f32 %v292, %v513
  %v515 = vpop.f32.mrf.mxu0
  %v516 = vadd.f32 %v296, %v515
  %v517 = vpop.f32.mrf.mxu0
  %v518 = vadd.f32 %v292, %v517
  %v519 = vpop.f32.mrf.mxu0
  %v520 = vadd.f32 %v296, %v519
  %521 = vmatprep.mubr.bf16.mxu0 0
  %522 = vmatmul.mubr.bf16.gmra.mxu0 %v253
  %v523 = vpop.f32.mrf.mxu0
  %v524 = vadd.f32 %v292, %v523
  %v525 = vpop.f32.mrf.mxu0
  %v526 = vadd.f32 %v296, %v525
  %v527 = vpop.f32.mrf.mxu0
  %v528 = vadd.f32 %v292, %v527
  %v529 = vpop.f32.mrf.mxu0
  %v530 = vadd.f32 %v296, %v529
  %531 = vmatprep.mubr.bf16.mxu0 0
  %532 = vmatmul.mubr.bf16.gmra.mxu0 %v254
  %v533 = vpop.f32.mrf.mxu0
  %v534 = vadd.f32 %v292, %v533
  %v535 = vpop.f32.mrf.mxu0
  %v536 = vadd.f32 %v296, %v535
  %v537 = vpop.f32.mrf.mxu0
  %v538 = vadd.f32 %v292, %v537
  %v539 = vpop.f32.mrf.mxu0
  %v540 = vadd.f32 %v296, %v539
  %541 = vdwg.mxu0
  %542 = vmatprep.subr.bf16.mxu0 %v436
  %543 = vmatpush1.bf16.msra.mxu0 %v435
  %544 = vmatprep.subr.bf16.mxu0 %v432
  %545 = vmatpush1.bf16.msra.mxu0 %v431
  %546 = vmatprep.subr.bf16.mxu0 %v428
  %547 = vmatpush1.bf16.msra.mxu0 %v427
  %548 = vmatprep.subr.bf16.mxu0 %v424
  %549 = vmatpush1.bf16.msra.mxu0 %v423
  %550 = vmatprep.subr.bf16.mxu0 %v420
  %551 = vmatpush1.bf16.msra.mxu0 %v419
  %552 = vmatprep.subr.bf16.mxu0 %v416
  %553 = vmatpush1.bf16.msra.mxu0 %v415
  %554 = vmatprep.subr.bf16.mxu0 %v412
  %555 = vmatpush1.bf16.msra.mxu0 %v411
  %556 = vmatprep.subr.bf16.mxu0 %v408
  %557 = vmatpush1.bf16.msra.mxu0 %v407
  %558 = vmatprep.subr.bf16.mxu0 0
  %559 = vmatpush2.bf16.msra.mxu0 0
  %560 = vmatprep.subr.bf16.mxu0 0
  %561 = vmatpush2.bf16.msra.mxu0 0
  %562 = vmatprep.subr.bf16.mxu0 0
  %563 = vmatpush2.bf16.msra.mxu0 0
  %564 = vmatprep.subr.bf16.mxu0 0
  %565 = vmatpush2.bf16.msra.mxu0 0
  %566 = vmatprep.subr.bf16.mxu0 0
  %567 = vmatpush2.bf16.msra.mxu0 0
  %568 = vmatprep.subr.bf16.mxu0 0
  %569 = vmatpush2.bf16.msra.mxu0 0
  %570 = vmatprep.subr.bf16.mxu0 0
  %571 = vmatpush2.bf16.msra.mxu0 0
  %572 = vmatprep.subr.bf16.mxu0 0
  %573 = vmatpush2.bf16.msra.mxu0 0
  %574 = vmatprep.mubr.bf16.mxu0 0
  %575 = vmatmul.mubr.bf16.gmra.mxu0 %v251
  %v576 = vpop.f32.mrf.mxu0
  %v577 = vadd.f32 %v300, %v576
  %v578 = vpop.f32.mrf.mxu0
  %v579 = vadd.f32 %v304, %v578
  %v580 = vpop.f32.mrf.mxu0
  %v581 = vadd.f32 %v300, %v580
  %v582 = vpop.f32.mrf.mxu0
  %v583 = vadd.f32 %v304, %v582
  %584 = vmatprep.mubr.bf16.mxu0 0
  %585 = vmatmul.mubr.bf16.gmra.mxu0 %v252
  %v586 = vpop.f32.mrf.mxu0
  %v587 = vadd.f32 %v300, %v586
  %v588 = vpop.f32.mrf.mxu0
  %v589 = vadd.f32 %v304, %v588
  %v590 = vpop.f32.mrf.mxu0
  %v591 = vadd.f32 %v300, %v590
  %v592 = vpop.f32.mrf.mxu0
  %v593 = vadd.f32 %v304, %v592
  %594 = vmatprep.mubr.bf16.mxu0 0
  %595 = vmatmul.mubr.bf16.gmra.mxu0 %v253
  %v596 = vpop.f32.mrf.mxu0
  %v597 = vadd.f32 %v300, %v596
  %v598 = vpop.f32.mrf.mxu0
  %v599 = vadd.f32 %v304, %v598
  %v600 = vpop.f32.mrf.mxu0
  %v601 = vadd.f32 %v300, %v600
  %v602 = vpop.f32.mrf.mxu0
  %v603 = vadd.f32 %v304, %v602
  %604 = vmatprep.mubr.bf16.mxu0 0
  %605 = vmatmul.mubr.bf16.gmra.mxu0 %v254
  %v606 = vpop.f32.mrf.mxu0
  %v607 = vadd.f32 %v300, %v606
  %v608 = vpop.f32.mrf.mxu0
  %v609 = vadd.f32 %v304, %v608
  %v610 = vpop.f32.mrf.mxu0
  %v611 = vadd.f32 %v300, %v610
  %v612 = vpop.f32.mrf.mxu0
  %v613 = vadd.f32 %v304, %v612
  %614 = vdwg.mxu0
  %615 = vst [vmem:[#allocation4] sm:$0xff] %v504
  %616 = vst [vmem:[#allocation4 + $0x8] sm:$0xff] %v506
  %617 = vst [vmem:[#allocation4 + $0x10] sm:$0xff] %v577
  %618 = vst [vmem:[#allocation4 + $0x18] sm:$0xff] %v579
  %619 = vst [vmem:[#allocation4 + $0x20] sm:$0xff] %v508
  %620 = vst [vmem:[#allocation4 + $0x28] sm:$0xff] %v510
  %621 = vst [vmem:[#allocation4 + $0x30] sm:$0xff] %v581
  %622 = vst [vmem:[#allocation4 + $0x38] sm:$0xff] %v583
  %623 = vst [vmem:[#allocation4 + $0x40] sm:$0xff] %v514
  %624 = vst [vmem:[#allocation4 + $0x48] sm:$0xff] %v516
  %625 = vst [vmem:[#allocation4 + $0x50] sm:$0xff] %v587
  %626 = vst [vmem:[#allocation4 + $0x58] sm:$0xff] %v589
  %627 = vst [vmem:[#allocation4 + $0x60] sm:$0xff] %v518
  %628 = vst [vmem:[#allocation4 + $0x68] sm:$0xff] %v520
  %629 = vst [vmem:[#allocation4 + $0x70] sm:$0xff] %v591
  %630 = vst [vmem:[#allocation4 + $0x78] sm:$0xff] %v593
  %631 = vst [vmem:[#allocation4 + $0x80] sm:$0xff] %v524
  %632 = vst [vmem:[#allocation4 + $0x88] sm:$0xff] %v526
  %633 = vst [vmem:[#allocation4 + $0x90] sm:$0xff] %v597
  %634 = vst [vmem:[#allocation4 + $0x98] sm:$0xff] %v599
  %635 = vst [vmem:[#allocation4 + $0xa0] sm:$0xff] %v528
  %636 = vst [vmem:[#allocation4 + $0xa8] sm:$0xff] %v530
  %637 = vst [vmem:[#allocation4 + $0xb0] sm:$0xff] %v601
  %638 = vst [vmem:[#allocation4 + $0xb8] sm:$0xff] %v603
  %639 = vst [vmem:[#allocation4 + $0xc0] sm:$0xff] %v534
  %640 = vst [vmem:[#allocation4 + $0xc8] sm:$0xff] %v536
  %641 = vst [vmem:[#allocation4 + $0xd0] sm:$0xff] %v607
  %642 = vst [vmem:[#allocation4 + $0xd8] sm:$0xff] %v609
  %643 = vst [vmem:[#allocation4 + $0xe0] sm:$0xff] %v538
  %644 = vst [vmem:[#allocation4 + $0xe8] sm:$0xff] %v540
  %645 = vst [vmem:[#allocation4 + $0xf0] sm:$0xff] %v611
  %646 = vst [vmem:[#allocation4 + $0xf8] sm:$0xff] %v613
  %v647 = vld [vmem:[#allocation5] sm:$0xff]
  %v648 = vld [vmem:[#allocation6] sm:$0xff]
  loop: start=0, step=1, limit=8
  $region90: #{lstm_model_forward.3} parent=0 // loop_pre_header
    _
  $region91: #{lstm_model_forward.3} parent=0 // loop_header
    %s650 = sphi 0, %s654
    %p651 = scmp.ge.s32.totalorder %s650, 8
    %v655 = vphi %v647, %v969
    %v656 = vphi %v648, %v967
  $region92: #{lstm_model_forward.3} parent=0 // loop_header_branch
    %653 = sbr.rel (%p651) target = $region96
  $region93: #{lstm_model_forward.3} parent=0 // loop_body
    %s657 = smul.u32 %s650, 8
    %s658 = sshra.s32 %s657, 3
    %s659 = sand.u32 %s657, 7
    %s660 = smul.u32 %s658, 4
    %s661 = smul.addr %s660, 8
    %s662 = scalar_lea.vmem [#allocation4], %s661
    %v663 = vld [vmem:[%s662] sm:$0xff]
    %v664 = vld [vmem:[%s662 + $0x8] sm:$0xff]
    %v665 = vld [vmem:[%s662 + $0x10] sm:$0xff]
    %v666 = vld [vmem:[%s662 + $0x18] sm:$0xff]
    %v667 = vpack.c.bf16 %v655, %v655
    %v668 = vld [vmem:[#allocation3] sm:$0xff]
    %v669 = vld [vmem:[#allocation3 + $0x8] sm:$0xff]
    %v670 = vld [vmem:[#allocation3 + $0x10] sm:$0xff]
    %v671 = vld [vmem:[#allocation3 + $0x18] sm:$0xff]
    %v672 = vld [vmem:[#allocation3 + $0x20] sm:$0xff]
    %v673 = vld [vmem:[#allocation3 + $0x28] sm:$0xff]
    %v674 = vld [vmem:[#allocation3 + $0x30] sm:$0xff]
    %v675 = vld [vmem:[#allocation3 + $0x38] sm:$0xff]
    %v676 = vld [vmem:[#allocation3 + $0x40] sm:$0xff]
    %v677 = vld [vmem:[#allocation3 + $0x48] sm:$0xff]
    %v678 = vld [vmem:[#allocation3 + $0x50] sm:$0xff]
    %v679 = vld [vmem:[#allocation3 + $0x58] sm:$0xff]
    %v680 = vld [vmem:[#allocation3 + $0x60] sm:$0xff]
    %v681 = vld [vmem:[#allocation3 + $0x68] sm:$0xff]
    %v682 = vld [vmem:[#allocation3 + $0x70] sm:$0xff]
    %v683 = vld [vmem:[#allocation3 + $0x78] sm:$0xff]
    %v684 = vld [vmem:[#allocation3 + $0x80] sm:$0xff]
    %v685 = vld [vmem:[#allocation3 + $0x88] sm:$0xff]
    %v686 = vld [vmem:[#allocation3 + $0x90] sm:$0xff]
    %v687 = vld [vmem:[#allocation3 + $0x98] sm:$0xff]
    %v688 = vld [vmem:[#allocation3 + $0xa0] sm:$0xff]
    %v689 = vld [vmem:[#allocation3 + $0xa8] sm:$0xff]
    %v690 = vld [vmem:[#allocation3 + $0xb0] sm:$0xff]
    %v691 = vld [vmem:[#allocation3 + $0xb8] sm:$0xff]
    %v692 = vld [vmem:[#allocation3 + $0xc0] sm:$0xff]
    %v693 = vld [vmem:[#allocation3 + $0xc8] sm:$0xff]
    %v694 = vld [vmem:[#allocation3 + $0xd0] sm:$0xff]
    %v695 = vld [vmem:[#allocation3 + $0xd8] sm:$0xff]
    %v696 = vld [vmem:[#allocation3 + $0xe0] sm:$0xff]
    %v697 = vld [vmem:[#allocation3 + $0xe8] sm:$0xff]
    %v698 = vld [vmem:[#allocation3 + $0xf0] sm:$0xff]
    %v699 = vld [vmem:[#allocation3 + $0xf8] sm:$0xff]
    %v732 = vunpack.c.l.b16 %v668
    %v733 = vunpack.c.h.b16 %v668
    %v734 = vunpack.c.l.b16 %v669
    %v735 = vunpack.c.h.b16 %v669
    %v736 = vunpack.c.l.b16 %v670
    %v737 = vunpack.c.h.b16 %v670
    %v738 = vunpack.c.l.b16 %v671
    %v739 = vunpack.c.h.b16 %v671
    %v740 = vunpack.c.l.b16 %v672
    %v741 = vunpack.c.h.b16 %v672
    %v742 = vunpack.c.l.b16 %v673
    %v743 = vunpack.c.h.b16 %v673
    %v744 = vunpack.c.l.b16 %v674
    %v745 = vunpack.c.h.b16 %v674
    %v746 = vunpack.c.l.b16 %v675
    %v747 = vunpack.c.h.b16 %v675
    %v748 = vunpack.c.l.b16 %v676
    %v749 = vunpack.c.h.b16 %v676
    %v750 = vunpack.c.l.b16 %v677
    %v751 = vunpack.c.h.b16 %v677
    %v752 = vunpack.c.l.b16 %v678
    %v753 = vunpack.c.h.b16 %v678
    %v754 = vunpack.c.l.b16 %v679
    %v755 = vunpack.c.h.b16 %v679
    %v756 = vunpack.c.l.b16 %v680
    %v757 = vunpack.c.h.b16 %v680
    %v758 = vunpack.c.l.b16 %v681
    %v759 = vunpack.c.h.b16 %v681
    %v760 = vunpack.c.l.b16 %v682
    %v761 = vunpack.c.h.b16 %v682
    %v762 = vunpack.c.l.b16 %v683
    %v763 = vunpack.c.h.b16 %v683
    %v764 = vunpack.c.l.b16 %v684
    %v765 = vunpack.c.h.b16 %v684
    %v766 = vunpack.c.l.b16 %v685
    %v767 = vunpack.c.h.b16 %v685
    %v768 = vunpack.c.l.b16 %v686
    %v769 = vunpack.c.h.b16 %v686
    %v770 = vunpack.c.l.b16 %v687
    %v771 = vunpack.c.h.b16 %v687
    %v772 = vunpack.c.l.b16 %v688
    %v773 = vunpack.c.h.b16 %v688
    %v774 = vunpack.c.l.b16 %v689
    %v775 = vunpack.c.h.b16 %v689
    %v776 = vunpack.c.l.b16 %v690
    %v777 = vunpack.c.h.b16 %v690
    %v778 = vunpack.c.l.b16 %v691
    %v779 = vunpack.c.h.b16 %v691
    %v780 = vunpack.c.l.b16 %v692
    %v781 = vunpack.c.h.b16 %v692
    %v782 = vunpack.c.l.b16 %v693
    %v783 = vunpack.c.h.b16 %v693
    %v784 = vunpack.c.l.b16 %v694
    %v785 = vunpack.c.h.b16 %v694
    %v786 = vunpack.c.l.b16 %v695
    %v787 = vunpack.c.h.b16 %v695
    %v788 = vunpack.c.l.b16 %v696
    %v789 = vunpack.c.h.b16 %v696
    %v790 = vunpack.c.l.b16 %v697
    %v791 = vunpack.c.h.b16 %v697
    %v792 = vunpack.c.l.b16 %v698
    %v793 = vunpack.c.h.b16 %v698
    %v794 = vunpack.c.l.b16 %v699
    %v795 = vunpack.c.h.b16 %v699
    %v796 = vpack.c.b16 %v736, %v732
    %v797 = vpack.c.b16 %v737, %v733
    %v798 = vpack.c.b16 %v738, %v734
    %v799 = vpack.c.b16 %v739, %v735
    %v800 = vpack.c.b16 %v744, %v740
    %v801 = vpack.c.b16 %v745, %v741
    %v802 = vpack.c.b16 %v746, %v742
    %v803 = vpack.c.b16 %v747, %v743
    %v804 = vpack.c.b16 %v752, %v748
    %v805 = vpack.c.b16 %v753, %v749
    %v806 = vpack.c.b16 %v754, %v750
    %v807 = vpack.c.b16 %v755, %v751
    %v808 = vpack.c.b16 %v760, %v756
    %v809 = vpack.c.b16 %v761, %v757
    %v810 = vpack.c.b16 %v762, %v758
    %v811 = vpack.c.b16 %v763, %v759
    %v812 = vpack.c.b16 %v768, %v764
    %v813 = vpack.c.b16 %v769, %v765
    %v814 = vpack.c.b16 %v770, %v766
    %v815 = vpack.c.b16 %v771, %v767
    %v816 = vpack.c.b16 %v776, %v772
    %v817 = vpack.c.b16 %v777, %v773
    %v818 = vpack.c.b16 %v778, %v774
    %v819 = vpack.c.b16 %v779, %v775
    %v820 = vpack.c.b16 %v784, %v780
    %v821 = vpack.c.b16 %v785, %v781
    %v822 = vpack.c.b16 %v786, %v782
    %v823 = vpack.c.b16 %v787, %v783
    %v824 = vpack.c.b16 %v792, %v788
    %v825 = vpack.c.b16 %v793, %v789
    %v826 = vpack.c.b16 %v794, %v790
    %v827 = vpack.c.b16 %v795, %v791
    %860 = vmatprep.subr.bf16.mxu0 %v825
    %861 = vmatpush1.bf16.msra.mxu0 %v824
    %862 = vmatprep.subr.bf16.mxu0 %v821
    %863 = vmatpush1.bf16.msra.mxu0 %v820
    %864 = vmatprep.subr.bf16.mxu0 %v817
    %865 = vmatpush1.bf16.msra.mxu0 %v816
    %866 = vmatprep.subr.bf16.mxu0 %v813
    %867 = vmatpush1.bf16.msra.mxu0 %v812
    %868 = vmatprep.subr.bf16.mxu0 %v809
    %869 = vmatpush1.bf16.msra.mxu0 %v808
    %870 = vmatprep.subr.bf16.mxu0 %v805
    %871 = vmatpush1.bf16.msra.mxu0 %v804
    %872 = vmatprep.subr.bf16.mxu0 %v801
    %873 = vmatpush1.bf16.msra.mxu0 %v800
    %874 = vmatprep.subr.bf16.mxu0 %v797
    %875 = vmatpush1.bf16.msra.mxu0 %v796
    %876 = vmatprep.subr.bf16.mxu0 0
    %877 = vmatpush2.bf16.msra.mxu0 0
    %878 = vmatprep.subr.bf16.mxu0 0
    %879 = vmatpush2.bf16.msra.mxu0 0
    %880 = vmatprep.subr.bf16.mxu0 0
    %881 = vmatpush2.bf16.msra.mxu0 0
    %882 = vmatprep.subr.bf16.mxu0 0
    %883 = vmatpush2.bf16.msra.mxu0 0
    %884 = vmatprep.subr.bf16.mxu0 0
    %885 = vmatpush2.bf16.msra.mxu0 0
    %886 = vmatprep.subr.bf16.mxu0 0
    %887 = vmatpush2.bf16.msra.mxu0 0
    %888 = vmatprep.subr.bf16.mxu0 0
    %889 = vmatpush2.bf16.msra.mxu0 0
    %890 = vmatprep.subr.bf16.mxu0 0
    %891 = vmatpush2.bf16.msra.mxu0 0
    %892 = vmatprep.mubr.bf16.mxu0 0
    %893 = vmatmul.mubr.bf16.gmra.mxu0 %v667
    %v894 = vpop.f32.mrf.mxu0
    %v895 = vadd.f32 0.0, %v894
    %v896 = vpop.f32.mrf.mxu0
    %v897 = vadd.f32 0.0, %v896
    %v898 = vpop.f32.mrf.mxu0
    %v899 = vpop.f32.mrf.mxu0
    %900 = vdwg.mxu0
    %901 = vmatprep.subr.bf16.mxu0 %v827
    %902 = vmatpush1.bf16.msra.mxu0 %v826
    %903 = vmatprep.subr.bf16.mxu0 %v823
    %904 = vmatpush1.bf16.msra.mxu0 %v822
    %905 = vmatprep.subr.bf16.mxu0 %v819
    %906 = vmatpush1.bf16.msra.mxu0 %v818
    %907 = vmatprep.subr.bf16.mxu0 %v815
    %908 = vmatpush1.bf16.msra.mxu0 %v814
    %909 = vmatprep.subr.bf16.mxu0 %v811
    %910 = vmatpush1.bf16.msra.mxu0 %v810
    %911 = vmatprep.subr.bf16.mxu0 %v807
    %912 = vmatpush1.bf16.msra.mxu0 %v806
    %913 = vmatprep.subr.bf16.mxu0 %v803
    %914 = vmatpush1.bf16.msra.mxu0 %v802
    %915 = vmatprep.subr.bf16.mxu0 %v799
    %916 = vmatpush1.bf16.msra.mxu0 %v798
    %917 = vmatprep.subr.bf16.mxu0 0
    %918 = vmatpush2.bf16.msra.mxu0 0
    %919 = vmatprep.subr.bf16.mxu0 0
    %920 = vmatpush2.bf16.msra.mxu0 0
    %921 = vmatprep.subr.bf16.mxu0 0
    %922 = vmatpush2.bf16.msra.mxu0 0
    %923 = vmatprep.subr.bf16.mxu0 0
    %924 = vmatpush2.bf16.msra.mxu0 0
    %925 = vmatprep.subr.bf16.mxu0 0
    %926 = vmatpush2.bf16.msra.mxu0 0
    %927 = vmatprep.subr.bf16.mxu0 0
    %928 = vmatpush2.bf16.msra.mxu0 0
    %929 = vmatprep.subr.bf16.mxu0 0
    %930 = vmatpush2.bf16.msra.mxu0 0
    %931 = vmatprep.subr.bf16.mxu0 0
    %932 = vmatpush2.bf16.msra.mxu0 0
    %933 = vmatprep.mubr.bf16.mxu0 0
    %934 = vmatmul.mubr.bf16.gmra.mxu0 %v667
    %v935 = vpop.f32.mrf.mxu0
    %v936 = vadd.f32 0.0, %v935
    %v937 = vpop.f32.mrf.mxu0
    %v938 = vadd.f32 0.0, %v937
    %v939 = vpop.f32.mrf.mxu0
    %v940 = vpop.f32.mrf.mxu0
    %941 = vdwg.mxu0
    %v942 = vadd.f32 %v663, %v895
    %v943 = vadd.f32 %v664, %v897
    %v944 = vadd.f32 %v665, %v936
    %v945 = vadd.f32 %v666, %v938
    %v946 = vxor.u32 %v942, 2147483648
    %v947 = vmul.f32 %v946, 1.442695
    %v948 = vpow.pop %v947
    %v949 = vadd.f32 %v948, 1.0
    %v950 = vrcp.pop %v949
    %v951 = vmul.f32 1.0, %v950
    %v952 = vxor.u32 %v943, 2147483648
    %v953 = vmul.f32 %v952, 1.442695
    %v954 = vpow.pop %v953
    %v955 = vadd.f32 %v954, 1.0
    %v956 = vrcp.pop %v955
    %v957 = vmul.f32 1.0, %v956
    %v958 = vtanh.pop %v944
    %v959 = vxor.u32 %v945, 2147483648
    %v960 = vmul.f32 %v959, 1.442695
    %v961 = vpow.pop %v960
    %v962 = vadd.f32 %v961, 1.0
    %v963 = vrcp.pop %v962
    %v964 = vmul.f32 1.0, %v963
    %v965 = vmul.f32 %v957, %v656
    %v966 = vmul.f32 %v951, %v958
    %v967 = vadd.f32 %v965, %v966
    %v968 = vtanh.pop %v967
    %v969 = vmul.f32 %v964, %v968
  $region94: #{lstm_model_forward.3} parent=0 // loop_footer
    %s654 = sadd.s32 1, %s650
  $region95: #{lstm_model_forward.3} parent=0 // loop_footer_branch
    %649 = sbr.rel target = $region91
  $region96: #{lstm_model_forward.3} parent=0 // loop_exit
    _
  %970 = vst [vmem:[#allocation5] sm:$0xff] %v655
  %971 = vst [vmem:[#allocation6] sm:$0xff] %v656
  // Predicated region
  $region97: #{lstm_model_forward.3} parent=0 // pred_check
    %p972 = pneg %p20
  $region98: #{lstm_model_forward.3} parent=0 // pred_check_branch
    %974 = sbr.rel (%p972) target = $region100
  $region99: #{lstm_model_forward.3} parent=0 // pred_region
    %v975 = vpack.c.bf16 %v655, %v655
    %v976 = vld [vmem:[%s4] sm:$0xf]
    %v977 = vld [vmem:[%s4 + $0x4] sm:$0xf]
    %v978 = vld [vmem:[%s4 + $0x8] sm:$0xf]
    %v979 = vld [vmem:[%s4 + $0xc] sm:$0xf]
    %v980 = vld [vmem:[%s4 + $0x10] sm:$0xf]
    %v981 = vld [vmem:[%s4 + $0x14] sm:$0xf]
    %v982 = vld [vmem:[%s4 + $0x18] sm:$0xf]
    %v983 = vld [vmem:[%s4 + $0x1c] sm:$0xf]
    %v984 = vld [vmem:[%s4 + $0x20] sm:$0xf]
    %v985 = vld [vmem:[%s4 + $0x24] sm:$0xf]
    %v986 = vld [vmem:[%s4 + $0x28] sm:$0xf]
    %v987 = vld [vmem:[%s4 + $0x2c] sm:$0xf]
    %v988 = vld [vmem:[%s4 + $0x30] sm:$0xf]
    %v989 = vld [vmem:[%s4 + $0x34] sm:$0xf]
    %v990 = vld [vmem:[%s4 + $0x38] sm:$0xf]
    %v991 = vld [vmem:[%s4 + $0x3c] sm:$0xf]
    %v992 = vld [vmem:[%s5] sm:$0x1]
    %v994 = vlaneseq
    %v995 = vshrl.u32 %v994, 7
    %v996 = vsub.s32 0, %v995
    %v997 = vrot.slane %v992, %v996
    %v1015 = vunpack.c.l.b16 %v976
    %v1016 = vunpack.c.l.b16 %v977
    %v1017 = vunpack.c.l.b16 %v978
    %v1018 = vunpack.c.l.b16 %v979
    %v1019 = vunpack.c.l.b16 %v980
    %v1020 = vunpack.c.l.b16 %v981
    %v1021 = vunpack.c.l.b16 %v982
    %v1022 = vunpack.c.l.b16 %v983
    %v1023 = vunpack.c.l.b16 %v984
    %v1024 = vunpack.c.l.b16 %v985
    %v1025 = vunpack.c.l.b16 %v986
    %v1026 = vunpack.c.l.b16 %v987
    %v1027 = vunpack.c.l.b16 %v988
    %v1028 = vunpack.c.l.b16 %v989
    %v1029 = vunpack.c.l.b16 %v990
    %v1030 = vunpack.c.l.b16 %v991
    %v1031 = vpack.c.b16 %v1016, %v1015
    %v1032 = vpack.c.b16 %v1018, %v1017
    %v1033 = vpack.c.b16 %v1020, %v1019
    %v1034 = vpack.c.b16 %v1022, %v1021
    %v1035 = vpack.c.b16 %v1024, %v1023
    %v1036 = vpack.c.b16 %v1026, %v1025
    %v1037 = vpack.c.b16 %v1028, %v1027
    %v1038 = vpack.c.b16 %v1030, %v1029
    %1047 = vmatprep.subr.bf16.mxu0 0
    %1048 = vmatpush1.bf16.msra.mxu0 %v1038
    %1049 = vmatprep.subr.bf16.mxu0 0
    %1050 = vmatpush1.bf16.msra.mxu0 %v1037
    %1051 = vmatprep.subr.bf16.mxu0 0
    %1052 = vmatpush1.bf16.msra.mxu0 %v1036
    %1053 = vmatprep.subr.bf16.mxu0 0
    %1054 = vmatpush1.bf16.msra.mxu0 %v1035
    %1055 = vmatprep.subr.bf16.mxu0 0
    %1056 = vmatpush1.bf16.msra.mxu0 %v1034
    %1057 = vmatprep.subr.bf16.mxu0 0
    %1058 = vmatpush1.bf16.msra.mxu0 %v1033
    %1059 = vmatprep.subr.bf16.mxu0 0
    %1060 = vmatpush1.bf16.msra.mxu0 %v1032
    %1061 = vmatprep.subr.bf16.mxu0 0
    %1062 = vmatpush1.bf16.msra.mxu0 %v1031
    %1063 = vmatprep.subr.bf16.mxu0 0
    %1064 = vmatpush2.bf16.msra.mxu0 0
    %1065 = vmatprep.subr.bf16.mxu0 0
    %1066 = vmatpush2.bf16.msra.mxu0 0
    %1067 = vmatprep.subr.bf16.mxu0 0
    %1068 = vmatpush2.bf16.msra.mxu0 0
    %1069 = vmatprep.subr.bf16.mxu0 0
    %1070 = vmatpush2.bf16.msra.mxu0 0
    %1071 = vmatprep.subr.bf16.mxu0 0
    %1072 = vmatpush2.bf16.msra.mxu0 0
    %1073 = vmatprep.subr.bf16.mxu0 0
    %1074 = vmatpush2.bf16.msra.mxu0 0
    %1075 = vmatprep.subr.bf16.mxu0 0
    %1076 = vmatpush2.bf16.msra.mxu0 0
    %1077 = vmatprep.subr.bf16.mxu0 0
    %1078 = vmatpush2.bf16.msra.mxu0 0
    %1079 = vmatprep.mubr.bf16.mxu0 0
    %1080 = vmatmul.mubr.bf16.gmra.mxu0 %v975
    %v1081 = vpop.f32.mrf.mxu0
    %v1082 = vadd.f32 %v997, %v1081
    %v1083 = vpop.f32.mrf.mxu0
    %v1084 = vpop.f32.mrf.mxu0
    %v1085 = vpop.f32.mrf.mxu0
    %1086 = vdwg.mxu0
    %1087 = vst [vmem:[%s6] sm:$0xff] %v1082
  $region100: #{lstm_model_forward.3} parent=0 // pred_fallthru
    _
  // Predicated region
  $region101: #{lstm_model_forward.3} parent=0 // pred_check
    _
  $region102: #{lstm_model_forward.3} parent=0 // pred_check_branch
    %1089 = sbr.rel (0) target = $region104
  $region103: #{lstm_model_forward.3} parent=0 // pred_region
    _
  $region104: #{lstm_model_forward.3} parent=0 // pred_fallthru
    _
  // Predicated region
  $region105: #{lstm_model_forward.3} parent=0 // pred_check
    _
  $region106: #{lstm_model_forward.3} parent=0 // pred_check_branch
    %1091 = sbr.rel (0) target = $region108
  $region107: #{lstm_model_forward.3} parent=0 // pred_region
    _
  $region108: #{lstm_model_forward.3} parent=0 // pred_fallthru
    _
  %1092 = vsyncmov [#allocation7]
  %s1093 = vpop.sfrf %1092
  %p1094 = scmp.eq.s32.totalorder %s1093, 0
  %p1095 = pneg %p1094
  %1097 = shalt.err (%p1095)
  %s1098 = scalar_lea.sflag [#allocation7], 1
  %1099 = vsyncmov %s1098
  %s1100 = vpop.sfrf %1099
  %p1101 = scmp.eq.s32.totalorder %s1100, 0
  %p1102 = pneg %p1101
  %1104 = shalt.err (%p1102)

// kernel: lstm_model_forward.2
$region0: #{lstm_model_forward.2}
  #allocation0 [shape = 'u32[]', space=smem, size = 0x4, offset = 0x4, fixed_abs, tag = 'smem constant byte address 0x4 - core index']
  #allocation1 [shape = 'u32[144,128]{1,0:T(1,128)}', space=vmem, size = 0x12000, scoped, tag = 'internal scratch']
  #allocation2 [shape = 'bf16[128,512]{1,0:T(8,128)(2,1)}', space=vmem, size = 0x20000, scoped, tag = 'scratch operand']
  #allocation3 [shape = 'bf16[128,512]{1,0:T(8,128)(2,1)}', space=vmem, size = 0x20000, scoped, tag = 'scratch operand']
  #allocation4 [shape = 'f32[64,512]{1,0:T(8,128)}', space=vmem, size = 0x20000, scoped, tag = 'scratch operand']
  #allocation5 [shape = 'f32[8,128]{1,0:T(8,128)}', space=vmem, size = 0x1000, scoped, tag = 'scratch operand']
  #allocation6 [shape = 'f32[8,128]{1,0:T(8,128)}', space=vmem, size = 0x1000, scoped, tag = 'scratch operand']
  #allocation7 [shape = 's32[2]{0}', space=sflag, size = 0x8, scoped, tag = 'scratch operand']
  #allocation8 [shape = 's32[]', space=sflag, size = 0x4, offset = 0, fixed_abs, tag = 'sflag constant byte address 0x0 - dummy sync flag']
  #allocation9 [shape = 's32[]', space=sflag, size = 0x4, offset = 0, fixed_abs, tag = 'sflag constant byte address 0x0 - dummy sync flag']
  #allocation10 [shape = 'u32[]', space=smem, size = 0x4, offset = 0x44, fixed_abs, tag = 'smem constant byte address 0x44 - assertion arg 0']
  #allocation11 [shape = 'u32[]', space=smem, size = 0x4, offset = 0x48, fixed_abs, tag = 'smem constant byte address 0x48 - assertion arg 1']
  #allocation12 [shape = 's32[]', space=sflag, size = 0x4, offset = 0, fixed_abs, tag = 'sflag constant byte address 0x0 - dummy sync flag']
  #allocation13 [shape = 's32[]', space=sflag, size = 0x4, offset = 0, fixed_abs, tag = 'sflag constant byte address 0x0 - dummy sync flag']
  %s0 = inlined_call_operand.vmem [shape: f32[64,128], index: 0, kind: input, shape index: {}]
  %s1 = inlined_call_operand.hbm [shape: bf16[128,512], index: 1, kind: input, shape index: {}]
  %s2 = inlined_call_operand.hbm [shape: bf16[128,512], index: 2, kind: input, shape index: {}]
  %s3 = inlined_call_operand.vmem [shape: f32[1,512], index: 3, kind: input, shape index: {}]
  %s4 = inlined_call_operand.vmem [shape: f32[64,128], index: 4, kind: output, shape index: {}]
  %s5 = sld [smem:[#allocation0]]
  $region30: #{lstm_model_forward.2} parent=0
    _
  %s7 = ssub.s32 1, %s5
  %s8 = scalar_select 0, %s7, %s5
  // Predicated region
  $region2: #{lstm_model_forward.2} parent=0 // pred_check
    _
  $region3: #{lstm_model_forward.2} parent=0 // pred_check_branch
    %10 = sbr.rel (0) target = $region5
  $region4: #{lstm_model_forward.2} parent=0 // pred_region
    _
  $region5: #{lstm_model_forward.2} parent=0 // pred_fallthru
    _
  // Predicated region
  $region6: #{lstm_model_forward.2} parent=0 // pred_check
    _
  $region7: #{lstm_model_forward.2} parent=0 // pred_check_branch
    %12 = sbr.rel (0) target = $region9
  $region8: #{lstm_model_forward.2} parent=0 // pred_region
    _
  $region9: #{lstm_model_forward.2} parent=0 // pred_fallthru
    _
  %p14 = scmp.eq.s32.totalorder 0, 0
  // Predicated region
  $region10: #{lstm_model_forward.2} parent=0 // pred_check
    %p15 = pneg %p14
  $region11: #{lstm_model_forward.2} parent=0 // pred_check_branch
    %17 = sbr.rel (%p15) target = $region13
  $region12: #{lstm_model_forward.2} parent=0 // pred_region
    // Predicated region
    $region14: #{lstm_model_forward.2} parent=12 // pred_check
      _
    $region15: #{lstm_model_forward.2} parent=12 // pred_check_branch
      %19 = sbr.rel target = $region17
    $region16: #{lstm_model_forward.2} parent=12 // pred_region
      %20 = sst [smem:[#allocation10]] [#allocation9]
      %21 = sst [smem:[#allocation11]] [#allocation8]
    $region17: #{lstm_model_forward.2} parent=12 // pred_fallthru
      _
    %23 = shalt.err (0)
    %s25 = sshll.u32 [#allocation2], 4
    %s26 = int_to_ptr.vmem [resolvable:$true] %s25
    %28 = dma.hbm_to_vmem [thread:$0]  %s1, 4096, %s26, [#allocation7]
    %s29 = scalar_lea.sflag [#allocation7], 1
    // Predicated region
    $region18: #{lstm_model_forward.2} parent=12 // pred_check
      _
    $region19: #{lstm_model_forward.2} parent=12 // pred_check_branch
      %31 = sbr.rel target = $region21
    $region20: #{lstm_model_forward.2} parent=12 // pred_region
      %32 = sst [smem:[#allocation10]] [#allocation13]
      %33 = sst [smem:[#allocation11]] [#allocation12]
    $region21: #{lstm_model_forward.2} parent=12 // pred_fallthru
      _
    %35 = shalt.err (0)
    %s37 = sshll.u32 [#allocation3], 4
    %s38 = int_to_ptr.vmem [resolvable:$true] %s37
    %40 = dma.hbm_to_vmem [thread:$0]  %s2, 4096, %s38, %s29
    %s41 = smul.u32 4, 16
    %s42 = smul.u32 %s41, 4
    %s43 = sshll.u32 %s42, 4
    %44 = dma.done [#allocation7], %s43
    %s45 = sshll.u32 %s42, 4
    %46 = dma.done %s29, %s45
    %47 = vst [vmem:[#allocation5] sm:$0xff] 0.0
    %48 = vst [vmem:[#allocation6] sm:$0xff] 0.0
  $region13: #{lstm_model_forward.2} parent=0 // pred_fallthru
    _
  %v49 = vld [vmem:[%s0] sm:$0xff]
  %v50 = vld [vmem:[%s0 + $0x8] sm:$0xff]
  %v51 = vld [vmem:[%s0 + $0x10] sm:$0xff]
  %v52 = vld [vmem:[%s0 + $0x18] sm:$0xff]
  %v53 = vld [vmem:[%s0 + $0x20] sm:$0xff]
  %v54 = vld [vmem:[%s0 + $0x28] sm:$0xff]
  %v55 = vld [vmem:[%s0 + $0x30] sm:$0xff]
  %v56 = vld [vmem:[%s0 + $0x38] sm:$0xff]
  %v57 = vpack.c.bf16 %v50, %v49
  %v58 = vpack.c.bf16 %v52, %v51
  %v59 = vpack.c.bf16 %v54, %v53
  %v60 = vpack.c.bf16 %v56, %v55
  %v61 = vld [vmem:[#allocation2] sm:$0xff]
  %v62 = vld [vmem:[#allocation2 + $0x8] sm:$0xff]
  %v63 = vld [vmem:[#allocation2 + $0x10] sm:$0xff]
  %v64 = vld [vmem:[#allocation2 + $0x18] sm:$0xff]
  %v65 = vld [vmem:[#allocation2 + $0x20] sm:$0xff]
  %v66 = vld [vmem:[#allocation2 + $0x28] sm:$0xff]
  %v67 = vld [vmem:[#allocation2 + $0x30] sm:$0xff]
  %v68 = vld [vmem:[#allocation2 + $0x38] sm:$0xff]
  %v69 = vld [vmem:[#allocation2 + $0x40] sm:$0xff]
  %v70 = vld [vmem:[#allocation2 + $0x48] sm:$0xff]
  %v71 = vld [vmem:[#allocation2 + $0x50] sm:$0xff]
  %v72 = vld [vmem:[#allocation2 + $0x58] sm:$0xff]
  %v73 = vld [vmem:[#allocation2 + $0x60] sm:$0xff]
  %v74 = vld [vmem:[#allocation2 + $0x68] sm:$0xff]
  %v75 = vld [vmem:[#allocation2 + $0x70] sm:$0xff]
  %v76 = vld [vmem:[#allocation2 + $0x78] sm:$0xff]
  %v77 = vld [vmem:[#allocation2 + $0x80] sm:$0xff]
  %v78 = vld [vmem:[#allocation2 + $0x88] sm:$0xff]
  %v79 = vld [vmem:[#allocation2 + $0x90] sm:$0xff]
  %v80 = vld [vmem:[#allocation2 + $0x98] sm:$0xff]
  %v81 = vld [vmem:[#allocation2 + $0xa0] sm:$0xff]
  %v82 = vld [vmem:[#allocation2 + $0xa8] sm:$0xff]
  %v83 = vld [vmem:[#allocation2 + $0xb0] sm:$0xff]
  %v84 = vld [vmem:[#allocation2 + $0xb8] sm:$0xff]
  %v85 = vld [vmem:[#allocation2 + $0xc0] sm:$0xff]
  %v86 = vld [vmem:[#allocation2 + $0xc8] sm:$0xff]
  %v87 = vld [vmem:[#allocation2 + $0xd0] sm:$0xff]
  %v88 = vld [vmem:[#allocation2 + $0xd8] sm:$0xff]
  %v89 = vld [vmem:[#allocation2 + $0xe0] sm:$0xff]
  %v90 = vld [vmem:[#allocation2 + $0xe8] sm:$0xff]
  %v91 = vld [vmem:[#allocation2 + $0xf0] sm:$0xff]
  %v92 = vld [vmem:[#allocation2 + $0xf8] sm:$0xff]
  %v93 = vld [vmem:[%s3] sm:$0xf]
  %v95 = vlaneseq
  %v96 = vshrl.u32 %v95, 7
  %v97 = vsub.s32 0, %v96
  %v98 = vrot.slane %v93, %v97
  %v99 = vlaneseq
  %v100 = vshrl.u32 %v99, 7
  %v101 = vsub.s32 1, %v100
  %v102 = vrot.slane %v93, %v101
  %v103 = vlaneseq
  %v104 = vshrl.u32 %v103, 7
  %v105 = vsub.s32 2, %v104
  %v106 = vrot.slane %v93, %v105
  %v107 = vlaneseq
  %v108 = vshrl.u32 %v107, 7
  %v109 = vsub.s32 3, %v108
  %v110 = vrot.slane %v93, %v109
  %v147 = vunpack.c.l.b16 %v61
  %v148 = vunpack.c.h.b16 %v61
  %v149 = vunpack.c.l.b16 %v62
  %v150 = vunpack.c.h.b16 %v62
  %v151 = vunpack.c.l.b16 %v63
  %v152 = vunpack.c.h.b16 %v63
  %v153 = vunpack.c.l.b16 %v64
  %v154 = vunpack.c.h.b16 %v64
  %v155 = vunpack.c.l.b16 %v65
  %v156 = vunpack.c.h.b16 %v65
  %v157 = vunpack.c.l.b16 %v66
  %v158 = vunpack.c.h.b16 %v66
  %v159 = vunpack.c.l.b16 %v67
  %v160 = vunpack.c.h.b16 %v67
  %v161 = vunpack.c.l.b16 %v68
  %v162 = vunpack.c.h.b16 %v68
  %v163 = vunpack.c.l.b16 %v69
  %v164 = vunpack.c.h.b16 %v69
  %v165 = vunpack.c.l.b16 %v70
  %v166 = vunpack.c.h.b16 %v70
  %v167 = vunpack.c.l.b16 %v71
  %v168 = vunpack.c.h.b16 %v71
  %v169 = vunpack.c.l.b16 %v72
  %v170 = vunpack.c.h.b16 %v72
  %v171 = vunpack.c.l.b16 %v73
  %v172 = vunpack.c.h.b16 %v73
  %v173 = vunpack.c.l.b16 %v74
  %v174 = vunpack.c.h.b16 %v74
  %v175 = vunpack.c.l.b16 %v75
  %v176 = vunpack.c.h.b16 %v75
  %v177 = vunpack.c.l.b16 %v76
  %v178 = vunpack.c.h.b16 %v76
  %v179 = vunpack.c.l.b16 %v77
  %v180 = vunpack.c.h.b16 %v77
  %v181 = vunpack.c.l.b16 %v78
  %v182 = vunpack.c.h.b16 %v78
  %v183 = vunpack.c.l.b16 %v79
  %v184 = vunpack.c.h.b16 %v79
  %v185 = vunpack.c.l.b16 %v80
  %v186 = vunpack.c.h.b16 %v80
  %v187 = vunpack.c.l.b16 %v81
  %v188 = vunpack.c.h.b16 %v81
  %v189 = vunpack.c.l.b16 %v82
  %v190 = vunpack.c.h.b16 %v82
  %v191 = vunpack.c.l.b16 %v83
  %v192 = vunpack.c.h.b16 %v83
  %v193 = vunpack.c.l.b16 %v84
  %v194 = vunpack.c.h.b16 %v84
  %v195 = vunpack.c.l.b16 %v85
  %v196 = vunpack.c.h.b16 %v85
  %v197 = vunpack.c.l.b16 %v86
  %v198 = vunpack.c.h.b16 %v86
  %v199 = vunpack.c.l.b16 %v87
  %v200 = vunpack.c.h.b16 %v87
  %v201 = vunpack.c.l.b16 %v88
  %v202 = vunpack.c.h.b16 %v88
  %v203 = vunpack.c.l.b16 %v89
  %v204 = vunpack.c.h.b16 %v89
  %v205 = vunpack.c.l.b16 %v90
  %v206 = vunpack.c.h.b16 %v90
  %v207 = vunpack.c.l.b16 %v91
  %v208 = vunpack.c.h.b16 %v91
  %v209 = vunpack.c.l.b16 %v92
  %v210 = vunpack.c.h.b16 %v92
  %v211 = vpack.c.b16 %v151, %v147
  %v212 = vpack.c.b16 %v152, %v148
  %v213 = vpack.c.b16 %v153, %v149
  %v214 = vpack.c.b16 %v154, %v150
  %v215 = vpack.c.b16 %v159, %v155
  %v216 = vpack.c.b16 %v160, %v156
  %v217 = vpack.c.b16 %v161, %v157
  %v218 = vpack.c.b16 %v162, %v158
  %v219 = vpack.c.b16 %v167, %v163
  %v220 = vpack.c.b16 %v168, %v164
  %v221 = vpack.c.b16 %v169, %v165
  %v222 = vpack.c.b16 %v170, %v166
  %v223 = vpack.c.b16 %v175, %v171
  %v224 = vpack.c.b16 %v176, %v172
  %v225 = vpack.c.b16 %v177, %v173
  %v226 = vpack.c.b16 %v178, %v174
  %v227 = vpack.c.b16 %v183, %v179
  %v228 = vpack.c.b16 %v184, %v180
  %v229 = vpack.c.b16 %v185, %v181
  %v230 = vpack.c.b16 %v186, %v182
  %v231 = vpack.c.b16 %v191, %v187
  %v232 = vpack.c.b16 %v192, %v188
  %v233 = vpack.c.b16 %v193, %v189
  %v234 = vpack.c.b16 %v194, %v190
  %v235 = vpack.c.b16 %v199, %v195
  %v236 = vpack.c.b16 %v200, %v196
  %v237 = vpack.c.b16 %v201, %v197
  %v238 = vpack.c.b16 %v202, %v198
  %v239 = vpack.c.b16 %v207, %v203
  %v240 = vpack.c.b16 %v208, %v204
  %v241 = vpack.c.b16 %v209, %v205
  %v242 = vpack.c.b16 %v210, %v206
  %275 = vmatprep.subr.bf16.mxu0 %v240
  %276 = vmatpush1.bf16.msra.mxu0 %v239
  %277 = vmatprep.subr.bf16.mxu0 %v236
  %278 = vmatpush1.bf16.msra.mxu0 %v235
  %279 = vmatprep.subr.bf16.mxu0 %v232
  %280 = vmatpush1.bf16.msra.mxu0 %v231
  %281 = vmatprep.subr.bf16.mxu0 %v228
  %282 = vmatpush1.bf16.msra.mxu0 %v227
  %283 = vmatprep.subr.bf16.mxu0 %v224
  %284 = vmatpush1.bf16.msra.mxu0 %v223
  %285 = vmatprep.subr.bf16.mxu0 %v220
  %286 = vmatpush1.bf16.msra.mxu0 %v219
  %287 = vmatprep.subr.bf16.mxu0 %v216
  %288 = vmatpush1.bf16.msra.mxu0 %v215
  %289 = vmatprep.subr.bf16.mxu0 %v212
  %290 = vmatpush1.bf16.msra.mxu0 %v211
  %291 = vmatprep.subr.bf16.mxu0 0
  %292 = vmatpush2.bf16.msra.mxu0 0
  %293 = vmatprep.subr.bf16.mxu0 0
  %294 = vmatpush2.bf16.msra.mxu0 0
  %295 = vmatprep.subr.bf16.mxu0 0
  %296 = vmatpush2.bf16.msra.mxu0 0
  %297 = vmatprep.subr.bf16.mxu0 0
  %298 = vmatpush2.bf16.msra.mxu0 0
  %299 = vmatprep.subr.bf16.mxu0 0
  %300 = vmatpush2.bf16.msra.mxu0 0
  %301 = vmatprep.subr.bf16.mxu0 0
  %302 = vmatpush2.bf16.msra.mxu0 0
  %303 = vmatprep.subr.bf16.mxu0 0
  %304 = vmatpush2.bf16.msra.mxu0 0
  %305 = vmatprep.subr.bf16.mxu0 0
  %306 = vmatpush2.bf16.msra.mxu0 0
  %307 = vmatprep.mubr.bf16.mxu0 0
  %308 = vmatmul.mubr.bf16.gmra.mxu0 %v57
  %v309 = vpop.f32.mrf.mxu0
  %v310 = vadd.f32 %v98, %v309
  %v311 = vpop.f32.mrf.mxu0
  %v312 = vadd.f32 %v102, %v311
  %v313 = vpop.f32.mrf.mxu0
  %v314 = vadd.f32 %v98, %v313
  %v315 = vpop.f32.mrf.mxu0
  %v316 = vadd.f32 %v102, %v315
  %317 = vmatprep.mubr.bf16.mxu0 0
  %318 = vmatmul.mubr.bf16.gmra.mxu0 %v58
  %v319 = vpop.f32.mrf.mxu0
  %v320 = vadd.f32 %v98, %v319
  %v321 = vpop.f32.mrf.mxu0
  %v322 = vadd.f32 %v102, %v321
  %v323 = vpop.f32.mrf.mxu0
  %v324 = vadd.f32 %v98, %v323
  %v325 = vpop.f32.mrf.mxu0
  %v326 = vadd.f32 %v102, %v325
  %327 = vmatprep.mubr.bf16.mxu0 0
  %328 = vmatmul.mubr.bf16.gmra.mxu0 %v59
  %v329 = vpop.f32.mrf.mxu0
  %v330 = vadd.f32 %v98, %v329
  %v331 = vpop.f32.mrf.mxu0
  %v332 = vadd.f32 %v102, %v331
  %v333 = vpop.f32.mrf.mxu0
  %v334 = vadd.f32 %v98, %v333
  %v335 = vpop.f32.mrf.mxu0
  %v336 = vadd.f32 %v102, %v335
  %337 = vmatprep.mubr.bf16.mxu0 0
  %338 = vmatmul.mubr.bf16.gmra.mxu0 %v60
  %v339 = vpop.f32.mrf.mxu0
  %v340 = vadd.f32 %v98, %v339
  %v341 = vpop.f32.mrf.mxu0
  %v342 = vadd.f32 %v102, %v341
  %v343 = vpop.f32.mrf.mxu0
  %v344 = vadd.f32 %v98, %v343
  %v345 = vpop.f32.mrf.mxu0
  %v346 = vadd.f32 %v102, %v345
  %347 = vdwg.mxu0
  %348 = vmatprep.subr.bf16.mxu0 %v242
  %349 = vmatpush1.bf16.msra.mxu0 %v241
  %350 = vmatprep.subr.bf16.mxu0 %v238
  %351 = vmatpush1.bf16.msra.mxu0 %v237
  %352 = vmatprep.subr.bf16.mxu0 %v234
  %353 = vmatpush1.bf16.msra.mxu0 %v233
  %354 = vmatprep.subr.bf16.mxu0 %v230
  %355 = vmatpush1.bf16.msra.mxu0 %v229
  %356 = vmatprep.subr.bf16.mxu0 %v226
  %357 = vmatpush1.bf16.msra.mxu0 %v225
  %358 = vmatprep.subr.bf16.mxu0 %v222
  %359 = vmatpush1.bf16.msra.mxu0 %v221
  %360 = vmatprep.subr.bf16.mxu0 %v218
  %361 = vmatpush1.bf16.msra.mxu0 %v217
  %362 = vmatprep.subr.bf16.mxu0 %v214
  %363 = vmatpush1.bf16.msra.mxu0 %v213
  %364 = vmatprep.subr.bf16.mxu0 0
  %365 = vmatpush2.bf16.msra.mxu0 0
  %366 = vmatprep.subr.bf16.mxu0 0
  %367 = vmatpush2.bf16.msra.mxu0 0
  %368 = vmatprep.subr.bf16.mxu0 0
  %369 = vmatpush2.bf16.msra.mxu0 0
  %370 = vmatprep.subr.bf16.mxu0 0
  %371 = vmatpush2.bf16.msra.mxu0 0
  %372 = vmatprep.subr.bf16.mxu0 0
  %373 = vmatpush2.bf16.msra.mxu0 0
  %374 = vmatprep.subr.bf16.mxu0 0
  %375 = vmatpush2.bf16.msra.mxu0 0
  %376 = vmatprep.subr.bf16.mxu0 0
  %377 = vmatpush2.bf16.msra.mxu0 0
  %378 = vmatprep.subr.bf16.mxu0 0
  %379 = vmatpush2.bf16.msra.mxu0 0
  %380 = vmatprep.mubr.bf16.mxu0 0
  %381 = vmatmul.mubr.bf16.gmra.mxu0 %v57
  %v382 = vpop.f32.mrf.mxu0
  %v383 = vadd.f32 %v106, %v382
  %v384 = vpop.f32.mrf.mxu0
  %v385 = vadd.f32 %v110, %v384
  %v386 = vpop.f32.mrf.mxu0
  %v387 = vadd.f32 %v106, %v386
  %v388 = vpop.f32.mrf.mxu0
  %v389 = vadd.f32 %v110, %v388
  %390 = vmatprep.mubr.bf16.mxu0 0
  %391 = vmatmul.mubr.bf16.gmra.mxu0 %v58
  %v392 = vpop.f32.mrf.mxu0
  %v393 = vadd.f32 %v106, %v392
  %v394 = vpop.f32.mrf.mxu0
  %v395 = vadd.f32 %v110, %v394
  %v396 = vpop.f32.mrf.mxu0
  %v397 = vadd.f32 %v106, %v396
  %v398 = vpop.f32.mrf.mxu0
  %v399 = vadd.f32 %v110, %v398
  %400 = vmatprep.mubr.bf16.mxu0 0
  %401 = vmatmul.mubr.bf16.gmra.mxu0 %v59
  %v402 = vpop.f32.mrf.mxu0
  %v403 = vadd.f32 %v106, %v402
  %v404 = vpop.f32.mrf.mxu0
  %v405 = vadd.f32 %v110, %v404
  %v406 = vpop.f32.mrf.mxu0
  %v407 = vadd.f32 %v106, %v406
  %v408 = vpop.f32.mrf.mxu0
  %v409 = vadd.f32 %v110, %v408
  %410 = vmatprep.mubr.bf16.mxu0 0
  %411 = vmatmul.mubr.bf16.gmra.mxu0 %v60
  %v412 = vpop.f32.mrf.mxu0
  %v413 = vadd.f32 %v106, %v412
  %v414 = vpop.f32.mrf.mxu0
  %v415 = vadd.f32 %v110, %v414
  %v416 = vpop.f32.mrf.mxu0
  %v417 = vadd.f32 %v106, %v416
  %v418 = vpop.f32.mrf.mxu0
  %v419 = vadd.f32 %v110, %v418
  %420 = vdwg.mxu0
  %421 = vst [vmem:[#allocation4] sm:$0xff] %v310
  %422 = vst [vmem:[#allocation4 + $0x8] sm:$0xff] %v312
  %423 = vst [vmem:[#allocation4 + $0x10] sm:$0xff] %v383
  %424 = vst [vmem:[#allocation4 + $0x18] sm:$0xff] %v385
  %425 = vst [vmem:[#allocation4 + $0x20] sm:$0xff] %v314
  %426 = vst [vmem:[#allocation4 + $0x28] sm:$0xff] %v316
  %427 = vst [vmem:[#allocation4 + $0x30] sm:$0xff] %v387
  %428 = vst [vmem:[#allocation4 + $0x38] sm:$0xff] %v389
  %429 = vst [vmem:[#allocation4 + $0x40] sm:$0xff] %v320
  %430 = vst [vmem:[#allocation4 + $0x48] sm:$0xff] %v322
  %431 = vst [vmem:[#allocation4 + $0x50] sm:$0xff] %v393
  %432 = vst [vmem:[#allocation4 + $0x58] sm:$0xff] %v395
  %433 = vst [vmem:[#allocation4 + $0x60] sm:$0xff] %v324
  %434 = vst [vmem:[#allocation4 + $0x68] sm:$0xff] %v326
  %435 = vst [vmem:[#allocation4 + $0x70] sm:$0xff] %v397
  %436 = vst [vmem:[#allocation4 + $0x78] sm:$0xff] %v399
  %437 = vst [vmem:[#allocation4 + $0x80] sm:$0xff] %v330
  %438 = vst [vmem:[#allocation4 + $0x88] sm:$0xff] %v332
  %439 = vst [vmem:[#allocation4 + $0x90] sm:$0xff] %v403
  %440 = vst [vmem:[#allocation4 + $0x98] sm:$0xff] %v405
  %441 = vst [vmem:[#allocation4 + $0xa0] sm:$0xff] %v334
  %442 = vst [vmem:[#allocation4 + $0xa8] sm:$0xff] %v336
  %443 = vst [vmem:[#allocation4 + $0xb0] sm:$0xff] %v407
  %444 = vst [vmem:[#allocation4 + $0xb8] sm:$0xff] %v409
  %445 = vst [vmem:[#allocation4 + $0xc0] sm:$0xff] %v340
  %446 = vst [vmem:[#allocation4 + $0xc8] sm:$0xff] %v342
  %447 = vst [vmem:[#allocation4 + $0xd0] sm:$0xff] %v413
  %448 = vst [vmem:[#allocation4 + $0xd8] sm:$0xff] %v415
  %449 = vst [vmem:[#allocation4 + $0xe0] sm:$0xff] %v344
  %450 = vst [vmem:[#allocation4 + $0xe8] sm:$0xff] %v346
  %451 = vst [vmem:[#allocation4 + $0xf0] sm:$0xff] %v417
  %452 = vst [vmem:[#allocation4 + $0xf8] sm:$0xff] %v419
  %v453 = vld [vmem:[#allocation5] sm:$0xff]
  %v454 = vld [vmem:[#allocation6] sm:$0xff]
  %s455 = smul.u32 0, 4
  %s456 = smul.addr %s455, 8
  %s457 = scalar_lea.vmem [#allocation4], %s456
  %v458 = vld [vmem:[%s457] sm:$0xff]
  %v459 = vld [vmem:[%s457 + $0x8] sm:$0xff]
  %v460 = vld [vmem:[%s457 + $0x10] sm:$0xff]
  %v461 = vld [vmem:[%s457 + $0x18] sm:$0xff]
  %v462 = vpack.c.bf16 %v453, %v453
  %v463 = vld [vmem:[#allocation3] sm:$0xff]
  %v464 = vld [vmem:[#allocation3 + $0x8] sm:$0xff]
  %v465 = vld [vmem:[#allocation3 + $0x10] sm:$0xff]
  %v466 = vld [vmem:[#allocation3 + $0x18] sm:$0xff]
  %v467 = vld [vmem:[#allocation3 + $0x20] sm:$0xff]
  %v468 = vld [vmem:[#allocation3 + $0x28] sm:$0xff]
  %v469 = vld [vmem:[#allocation3 + $0x30] sm:$0xff]
  %v470 = vld [vmem:[#allocation3 + $0x38] sm:$0xff]
  %v471 = vld [vmem:[#allocation3 + $0x40] sm:$0xff]
  %v472 = vld [vmem:[#allocation3 + $0x48] sm:$0xff]
  %v473 = vld [vmem:[#allocation3 + $0x50] sm:$0xff]
  %v474 = vld [vmem:[#allocation3 + $0x58] sm:$0xff]
  %v475 = vld [vmem:[#allocation3 + $0x60] sm:$0xff]
  %v476 = vld [vmem:[#allocation3 + $0x68] sm:$0xff]
  %v477 = vld [vmem:[#allocation3 + $0x70] sm:$0xff]
  %v478 = vld [vmem:[#allocation3 + $0x78] sm:$0xff]
  %v479 = vld [vmem:[#allocation3 + $0x80] sm:$0xff]
  %v480 = vld [vmem:[#allocation3 + $0x88] sm:$0xff]
  %v481 = vld [vmem:[#allocation3 + $0x90] sm:$0xff]
  %v482 = vld [vmem:[#allocation3 + $0x98] sm:$0xff]
  %v483 = vld [vmem:[#allocation3 + $0xa0] sm:$0xff]
  %v484 = vld [vmem:[#allocation3 + $0xa8] sm:$0xff]
  %v485 = vld [vmem:[#allocation3 + $0xb0] sm:$0xff]
  %v486 = vld [vmem:[#allocation3 + $0xb8] sm:$0xff]
  %v487 = vld [vmem:[#allocation3 + $0xc0] sm:$0xff]
  %v488 = vld [vmem:[#allocation3 + $0xc8] sm:$0xff]
  %v489 = vld [vmem:[#allocation3 + $0xd0] sm:$0xff]
  %v490 = vld [vmem:[#allocation3 + $0xd8] sm:$0xff]
  %v491 = vld [vmem:[#allocation3 + $0xe0] sm:$0xff]
  %v492 = vld [vmem:[#allocation3 + $0xe8] sm:$0xff]
  %v493 = vld [vmem:[#allocation3 + $0xf0] sm:$0xff]
  %v494 = vld [vmem:[#allocation3 + $0xf8] sm:$0xff]
  %v527 = vunpack.c.l.b16 %v463
  %v528 = vunpack.c.h.b16 %v463
  %v529 = vunpack.c.l.b16 %v464
  %v530 = vunpack.c.h.b16 %v464
  %v531 = vunpack.c.l.b16 %v465
  %v532 = vunpack.c.h.b16 %v465
  %v533 = vunpack.c.l.b16 %v466
  %v534 = vunpack.c.h.b16 %v466
  %v535 = vunpack.c.l.b16 %v467
  %v536 = vunpack.c.h.b16 %v467
  %v537 = vunpack.c.l.b16 %v468
  %v538 = vunpack.c.h.b16 %v468
  %v539 = vunpack.c.l.b16 %v469
  %v540 = vunpack.c.h.b16 %v469
  %v541 = vunpack.c.l.b16 %v470
  %v542 = vunpack.c.h.b16 %v470
  %v543 = vunpack.c.l.b16 %v471
  %v544 = vunpack.c.h.b16 %v471
  %v545 = vunpack.c.l.b16 %v472
  %v546 = vunpack.c.h.b16 %v472
  %v547 = vunpack.c.l.b16 %v473
  %v548 = vunpack.c.h.b16 %v473
  %v549 = vunpack.c.l.b16 %v474
  %v550 = vunpack.c.h.b16 %v474
  %v551 = vunpack.c.l.b16 %v475
  %v552 = vunpack.c.h.b16 %v475
  %v553 = vunpack.c.l.b16 %v476
  %v554 = vunpack.c.h.b16 %v476
  %v555 = vunpack.c.l.b16 %v477
  %v556 = vunpack.c.h.b16 %v477
  %v557 = vunpack.c.l.b16 %v478
  %v558 = vunpack.c.h.b16 %v478
  %v559 = vunpack.c.l.b16 %v479
  %v560 = vunpack.c.h.b16 %v479
  %v561 = vunpack.c.l.b16 %v480
  %v562 = vunpack.c.h.b16 %v480
  %v563 = vunpack.c.l.b16 %v481
  %v564 = vunpack.c.h.b16 %v481
  %v565 = vunpack.c.l.b16 %v482
  %v566 = vunpack.c.h.b16 %v482
  %v567 = vunpack.c.l.b16 %v483
  %v568 = vunpack.c.h.b16 %v483
  %v569 = vunpack.c.l.b16 %v484
  %v570 = vunpack.c.h.b16 %v484
  %v571 = vunpack.c.l.b16 %v485
  %v572 = vunpack.c.h.b16 %v485
  %v573 = vunpack.c.l.b16 %v486
  %v574 = vunpack.c.h.b16 %v486
  %v575 = vunpack.c.l.b16 %v487
  %v576 = vunpack.c.h.b16 %v487
  %v577 = vunpack.c.l.b16 %v488
  %v578 = vunpack.c.h.b16 %v488
  %v579 = vunpack.c.l.b16 %v489
  %v580 = vunpack.c.h.b16 %v489
  %v581 = vunpack.c.l.b16 %v490
  %v582 = vunpack.c.h.b16 %v490
  %v583 = vunpack.c.l.b16 %v491
  %v584 = vunpack.c.h.b16 %v491
  %v585 = vunpack.c.l.b16 %v492
  %v586 = vunpack.c.h.b16 %v492
  %v587 = vunpack.c.l.b16 %v493
  %v588 = vunpack.c.h.b16 %v493
  %v589 = vunpack.c.l.b16 %v494
  %v590 = vunpack.c.h.b16 %v494
  %v591 = vpack.c.b16 %v531, %v527
  %v592 = vpack.c.b16 %v532, %v528
  %v593 = vpack.c.b16 %v533, %v529
  %v594 = vpack.c.b16 %v534, %v530
  %v595 = vpack.c.b16 %v539, %v535
  %v596 = vpack.c.b16 %v540, %v536
  %v597 = vpack.c.b16 %v541, %v537
  %v598 = vpack.c.b16 %v542, %v538
  %v599 = vpack.c.b16 %v547, %v543
  %v600 = vpack.c.b16 %v548, %v544
  %v601 = vpack.c.b16 %v549, %v545
  %v602 = vpack.c.b16 %v550, %v546
  %v603 = vpack.c.b16 %v555, %v551
  %v604 = vpack.c.b16 %v556, %v552
  %v605 = vpack.c.b16 %v557, %v553
  %v606 = vpack.c.b16 %v558, %v554
  %v607 = vpack.c.b16 %v563, %v559
  %v608 = vpack.c.b16 %v564, %v560
  %v609 = vpack.c.b16 %v565, %v561
  %v610 = vpack.c.b16 %v566, %v562
  %v611 = vpack.c.b16 %v571, %v567
  %v612 = vpack.c.b16 %v572, %v568
  %v613 = vpack.c.b16 %v573, %v569
  %v614 = vpack.c.b16 %v574, %v570
  %v615 = vpack.c.b16 %v579, %v575
  %v616 = vpack.c.b16 %v580, %v576
  %v617 = vpack.c.b16 %v581, %v577
  %v618 = vpack.c.b16 %v582, %v578
  %v619 = vpack.c.b16 %v587, %v583
  %v620 = vpack.c.b16 %v588, %v584
  %v621 = vpack.c.b16 %v589, %v585
  %v622 = vpack.c.b16 %v590, %v586
  %655 = vmatprep.subr.bf16.mxu0 %v620
  %656 = vmatpush1.bf16.msra.mxu0 %v619
  %657 = vmatprep.subr.bf16.mxu0 %v616
  %658 = vmatpush1.bf16.msra.mxu0 %v615
  %659 = vmatprep.subr.bf16.mxu0 %v612
  %660 = vmatpush1.bf16.msra.mxu0 %v611
  %661 = vmatprep.subr.bf16.mxu0 %v608
  %662 = vmatpush1.bf16.msra.mxu0 %v607
  %663 = vmatprep.subr.bf16.mxu0 %v604
  %664 = vmatpush1.bf16.msra.mxu0 %v603
  %665 = vmatprep.subr.bf16.mxu0 %v600
  %666 = vmatpush1.bf16.msra.mxu0 %v599
  %667 = vmatprep.subr.bf16.mxu0 %v596
  %668 = vmatpush1.bf16.msra.mxu0 %v595
  %669 = vmatprep.subr.bf16.mxu0 %v592
  %670 = vmatpush1.bf16.msra.mxu0 %v591
  %671 = vmatprep.subr.bf16.mxu0 0
  %672 = vmatpush2.bf16.msra.mxu0 0
  %673 = vmatprep.subr.bf16.mxu0 0
  %674 = vmatpush2.bf16.msra.mxu0 0
  %675 = vmatprep.subr.bf16.mxu0 0
  %676 = vmatpush2.bf16.msra.mxu0 0
  %677 = vmatprep.subr.bf16.mxu0 0
  %678 = vmatpush2.bf16.msra.mxu0 0
  %679 = vmatprep.subr.bf16.mxu0 0
  %680 = vmatpush2.bf16.msra.mxu0 0
  %681 = vmatprep.subr.bf16.mxu0 0
  %682 = vmatpush2.bf16.msra.mxu0 0
  %683 = vmatprep.subr.bf16.mxu0 0
  %684 = vmatpush2.bf16.msra.mxu0 0
  %685 = vmatprep.subr.bf16.mxu0 0
  %686 = vmatpush2.bf16.msra.mxu0 0
  %687 = vmatprep.mubr.bf16.mxu0 0
  %688 = vmatmul.mubr.bf16.gmra.mxu0 %v462
  %v689 = vpop.f32.mrf.mxu0
  %v690 = vadd.f32 0.0, %v689
  %v691 = vpop.f32.mrf.mxu0
  %v692 = vadd.f32 0.0, %v691
  %v693 = vpop.f32.mrf.mxu0
  %v694 = vpop.f32.mrf.mxu0
  %695 = vdwg.mxu0
  %696 = vmatprep.subr.bf16.mxu0 %v622
  %697 = vmatpush1.bf16.msra.mxu0 %v621
  %698 = vmatprep.subr.bf16.mxu0 %v618
  %699 = vmatpush1.bf16.msra.mxu0 %v617
  %700 = vmatprep.subr.bf16.mxu0 %v614
  %701 = vmatpush1.bf16.msra.mxu0 %v613
  %702 = vmatprep.subr.bf16.mxu0 %v610
  %703 = vmatpush1.bf16.msra.mxu0 %v609
  %704 = vmatprep.subr.bf16.mxu0 %v606
  %705 = vmatpush1.bf16.msra.mxu0 %v605
  %706 = vmatprep.subr.bf16.mxu0 %v602
  %707 = vmatpush1.bf16.msra.mxu0 %v601
  %708 = vmatprep.subr.bf16.mxu0 %v598
  %709 = vmatpush1.bf16.msra.mxu0 %v597
  %710 = vmatprep.subr.bf16.mxu0 %v594
  %711 = vmatpush1.bf16.msra.mxu0 %v593
  %712 = vmatprep.subr.bf16.mxu0 0
  %713 = vmatpush2.bf16.msra.mxu0 0
  %714 = vmatprep.subr.bf16.mxu0 0
  %715 = vmatpush2.bf16.msra.mxu0 0
  %716 = vmatprep.subr.bf16.mxu0 0
  %717 = vmatpush2.bf16.msra.mxu0 0
  %718 = vmatprep.subr.bf16.mxu0 0
  %719 = vmatpush2.bf16.msra.mxu0 0
  %720 = vmatprep.subr.bf16.mxu0 0
  %721 = vmatpush2.bf16.msra.mxu0 0
  %722 = vmatprep.subr.bf16.mxu0 0
  %723 = vmatpush2.bf16.msra.mxu0 0
  %724 = vmatprep.subr.bf16.mxu0 0
  %725 = vmatpush2.bf16.msra.mxu0 0
  %726 = vmatprep.subr.bf16.mxu0 0
  %727 = vmatpush2.bf16.msra.mxu0 0
  %728 = vmatprep.mubr.bf16.mxu0 0
  %729 = vmatmul.mubr.bf16.gmra.mxu0 %v462
  %v730 = vpop.f32.mrf.mxu0
  %v731 = vadd.f32 0.0, %v730
  %v732 = vpop.f32.mrf.mxu0
  %v733 = vadd.f32 0.0, %v732
  %v734 = vpop.f32.mrf.mxu0
  %v735 = vpop.f32.mrf.mxu0
  %736 = vdwg.mxu0
  %v737 = vadd.f32 %v458, %v690
  %v738 = vadd.f32 %v459, %v692
  %v739 = vadd.f32 %v460, %v731
  %v740 = vadd.f32 %v461, %v733
  %v741 = vxor.u32 %v737, 2147483648
  %v742 = vmul.f32 %v741, 1.442695
  %v743 = vpow.pop %v742
  %v744 = vadd.f32 %v743, 1.0
  %v745 = vrcp.pop %v744
  %v746 = vmul.f32 1.0, %v745
  %v747 = vxor.u32 %v738, 2147483648
  %v748 = vmul.f32 %v747, 1.442695
  %v749 = vpow.pop %v748
  %v750 = vadd.f32 %v749, 1.0
  %v751 = vrcp.pop %v750
  %v752 = vmul.f32 1.0, %v751
  %v753 = vtanh.pop %v739
  %v754 = vxor.u32 %v740, 2147483648
  %v755 = vmul.f32 %v754, 1.442695
  %v756 = vpow.pop %v755
  %v757 = vadd.f32 %v756, 1.0
  %v758 = vrcp.pop %v757
  %v759 = vmul.f32 1.0, %v758
  %v760 = vmul.f32 %v752, %v454
  %v761 = vmul.f32 %v746, %v753
  %v762 = vadd.f32 %v760, %v761
  %v763 = vtanh.pop %v762
  %v764 = vmul.f32 %v759, %v763
  %765 = vst [vmem:[%s4] sm:$0xff] %v764
  %s766 = smul.u32 1, 4
  %s767 = smul.addr %s766, 8
  %s768 = scalar_lea.vmem [#allocation4], %s767
  %v769 = vld [vmem:[%s768] sm:$0xff]
  %v770 = vld [vmem:[%s768 + $0x8] sm:$0xff]
  %v771 = vld [vmem:[%s768 + $0x10] sm:$0xff]
  %v772 = vld [vmem:[%s768 + $0x18] sm:$0xff]
  %v773 = vpack.c.bf16 %v764, %v764
  %v774 = vld [vmem:[#allocation3] sm:$0xff]
  %v775 = vld [vmem:[#allocation3 + $0x8] sm:$0xff]
  %v776 = vld [vmem:[#allocation3 + $0x10] sm:$0xff]
  %v777 = vld [vmem:[#allocation3 + $0x18] sm:$0xff]
  %v778 = vld [vmem:[#allocation3 + $0x20] sm:$0xff]
  %v779 = vld [vmem:[#allocation3 + $0x28] sm:$0xff]
  %v780 = vld [vmem:[#allocation3 + $0x30] sm:$0xff]
  %v781 = vld [vmem:[#allocation3 + $0x38] sm:$0xff]
  %v782 = vld [vmem:[#allocation3 + $0x40] sm:$0xff]
  %v783 = vld [vmem:[#allocation3 + $0x48] sm:$0xff]
  %v784 = vld [vmem:[#allocation3 + $0x50] sm:$0xff]
  %v785 = vld [vmem:[#allocation3 + $0x58] sm:$0xff]
  %v786 = vld [vmem:[#allocation3 + $0x60] sm:$0xff]
  %v787 = vld [vmem:[#allocation3 + $0x68] sm:$0xff]
  %v788 = vld [vmem:[#allocation3 + $0x70] sm:$0xff]
  %v789 = vld [vmem:[#allocation3 + $0x78] sm:$0xff]
  %v790 = vld [vmem:[#allocation3 + $0x80] sm:$0xff]
  %v791 = vld [vmem:[#allocation3 + $0x88] sm:$0xff]
  %v792 = vld [vmem:[#allocation3 + $0x90] sm:$0xff]
  %v793 = vld [vmem:[#allocation3 + $0x98] sm:$0xff]
  %v794 = vld [vmem:[#allocation3 + $0xa0] sm:$0xff]
  %v795 = vld [vmem:[#allocation3 + $0xa8] sm:$0xff]
  %v796 = vld [vmem:[#allocation3 + $0xb0] sm:$0xff]
  %v797 = vld [vmem:[#allocation3 + $0xb8] sm:$0xff]
  %v798 = vld [vmem:[#allocation3 + $0xc0] sm:$0xff]
  %v799 = vld [vmem:[#allocation3 + $0xc8] sm:$0xff]
  %v800 = vld [vmem:[#allocation3 + $0xd0] sm:$0xff]
  %v801 = vld [vmem:[#allocation3 + $0xd8] sm:$0xff]
  %v802 = vld [vmem:[#allocation3 + $0xe0] sm:$0xff]
  %v803 = vld [vmem:[#allocation3 + $0xe8] sm:$0xff]
  %v804 = vld [vmem:[#allocation3 + $0xf0] sm:$0xff]
  %v805 = vld [vmem:[#allocation3 + $0xf8] sm:$0xff]
  %v838 = vunpack.c.l.b16 %v774
  %v839 = vunpack.c.h.b16 %v774
  %v840 = vunpack.c.l.b16 %v775
  %v841 = vunpack.c.h.b16 %v775
  %v842 = vunpack.c.l.b16 %v776
  %v843 = vunpack.c.h.b16 %v776
  %v844 = vunpack.c.l.b16 %v777
  %v845 = vunpack.c.h.b16 %v777
  %v846 = vunpack.c.l.b16 %v778
  %v847 = vunpack.c.h.b16 %v778
  %v848 = vunpack.c.l.b16 %v779
  %v849 = vunpack.c.h.b16 %v779
  %v850 = vunpack.c.l.b16 %v780
  %v851 = vunpack.c.h.b16 %v780
  %v852 = vunpack.c.l.b16 %v781
  %v853 = vunpack.c.h.b16 %v781
  %v854 = vunpack.c.l.b16 %v782
  %v855 = vunpack.c.h.b16 %v782
  %v856 = vunpack.c.l.b16 %v783
  %v857 = vunpack.c.h.b16 %v783
  %v858 = vunpack.c.l.b16 %v784
  %v859 = vunpack.c.h.b16 %v784
  %v860 = vunpack.c.l.b16 %v785
  %v861 = vunpack.c.h.b16 %v785
  %v862 = vunpack.c.l.b16 %v786
  %v863 = vunpack.c.h.b16 %v786
  %v864 = vunpack.c.l.b16 %v787
  %v865 = vunpack.c.h.b16 %v787
  %v866 = vunpack.c.l.b16 %v788
  %v867 = vunpack.c.h.b16 %v788
  %v868 = vunpack.c.l.b16 %v789
  %v869 = vunpack.c.h.b16 %v789
  %v870 = vunpack.c.l.b16 %v790
  %v871 = vunpack.c.h.b16 %v790
  %v872 = vunpack.c.l.b16 %v791
  %v873 = vunpack.c.h.b16 %v791
  %v874 = vunpack.c.l.b16 %v792
  %v875 = vunpack.c.h.b16 %v792
  %v876 = vunpack.c.l.b16 %v793
  %v877 = vunpack.c.h.b16 %v793
  %v878 = vunpack.c.l.b16 %v794
  %v879 = vunpack.c.h.b16 %v794
  %v880 = vunpack.c.l.b16 %v795
  %v881 = vunpack.c.h.b16 %v795
  %v882 = vunpack.c.l.b16 %v796
  %v883 = vunpack.c.h.b16 %v796
  %v884 = vunpack.c.l.b16 %v797
  %v885 = vunpack.c.h.b16 %v797
  %v886 = vunpack.c.l.b16 %v798
  %v887 = vunpack.c.h.b16 %v798
  %v888 = vunpack.c.l.b16 %v799
  %v889 = vunpack.c.h.b16 %v799
  %v890 = vunpack.c.l.b16 %v800
  %v891 = vunpack.c.h.b16 %v800
  %v892 = vunpack.c.l.b16 %v801
  %v893 = vunpack.c.h.b16 %v801
  %v894 = vunpack.c.l.b16 %v802
  %v895 = vunpack.c.h.b16 %v802
  %v896 = vunpack.c.l.b16 %v803
  %v897 = vunpack.c.h.b16 %v803
  %v898 = vunpack.c.l.b16 %v804
  %v899 = vunpack.c.h.b16 %v804
  %v900 = vunpack.c.l.b16 %v805
  %v901 = vunpack.c.h.b16 %v805
  %v902 = vpack.c.b16 %v842, %v838
  %v903 = vpack.c.b16 %v843, %v839
  %v904 = vpack.c.b16 %v844, %v840
  %v905 = vpack.c.b16 %v845, %v841
  %v906 = vpack.c.b16 %v850, %v846
  %v907 = vpack.c.b16 %v851, %v847
  %v908 = vpack.c.b16 %v852, %v848
  %v909 = vpack.c.b16 %v853, %v849
  %v910 = vpack.c.b16 %v858, %v854
  %v911 = vpack.c.b16 %v859, %v855
  %v912 = vpack.c.b16 %v860, %v856
  %v913 = vpack.c.b16 %v861, %v857
  %v914 = vpack.c.b16 %v866, %v862
  %v915 = vpack.c.b16 %v867, %v863
  %v916 = vpack.c.b16 %v868, %v864
  %v917 = vpack.c.b16 %v869, %v865
  %v918 = vpack.c.b16 %v874, %v870
  %v919 = vpack.c.b16 %v875, %v871
  %v920 = vpack.c.b16 %v876, %v872
  %v921 = vpack.c.b16 %v877, %v873
  %v922 = vpack.c.b16 %v882, %v878
  %v923 = vpack.c.b16 %v883, %v879
  %v924 = vpack.c.b16 %v884, %v880
  %v925 = vpack.c.b16 %v885, %v881
  %v926 = vpack.c.b16 %v890, %v886
  %v927 = vpack.c.b16 %v891, %v887
  %v928 = vpack.c.b16 %v892, %v888
  %v929 = vpack.c.b16 %v893, %v889
  %v930 = vpack.c.b16 %v898, %v894
  %v931 = vpack.c.b16 %v899, %v895
  %v932 = vpack.c.b16 %v900, %v896
  %v933 = vpack.c.b16 %v901, %v897
  %966 = vmatprep.subr.bf16.mxu0 %v931
  %967 = vmatpush1.bf16.msra.mxu0 %v930
  %968 = vmatprep.subr.bf16.mxu0 %v927
  %969 = vmatpush1.bf16.msra.mxu0 %v926
  %970 = vmatprep.subr.bf16.mxu0 %v923
  %971 = vmatpush1.bf16.msra.mxu0 %v922
  %972 = vmatprep.subr.bf16.mxu0 %v919
  %973 = vmatpush1.bf16.msra.mxu0 %v918
  %974 = vmatprep.subr.bf16.mxu0 %v915
  %975 = vmatpush1.bf16.msra.mxu0 %v914
  %976 = vmatprep.subr.bf16.mxu0 %v911
  %977 = vmatpush1.bf16.msra.mxu0 %v910
  %978 = vmatprep.subr.bf16.mxu0 %v907
  %979 = vmatpush1.bf16.msra.mxu0 %v906
  %980 = vmatprep.subr.bf16.mxu0 %v903
  %981 = vmatpush1.bf16.msra.mxu0 %v902
  %982 = vmatprep.subr.bf16.mxu0 0
  %983 = vmatpush2.bf16.msra.mxu0 0
  %984 = vmatprep.subr.bf16.mxu0 0
  %985 = vmatpush2.bf16.msra.mxu0 0
  %986 = vmatprep.subr.bf16.mxu0 0
  %987 = vmatpush2.bf16.msra.mxu0 0
  %988 = vmatprep.subr.bf16.mxu0 0
  %989 = vmatpush2.bf16.msra.mxu0 0
  %990 = vmatprep.subr.bf16.mxu0 0
  %991 = vmatpush2.bf16.msra.mxu0 0
  %992 = vmatprep.subr.bf16.mxu0 0
  %993 = vmatpush2.bf16.msra.mxu0 0
  %994 = vmatprep.subr.bf16.mxu0 0
  %995 = vmatpush2.bf16.msra.mxu0 0
  %996 = vmatprep.subr.bf16.mxu0 0
  %997 = vmatpush2.bf16.msra.mxu0 0
  %998 = vmatprep.mubr.bf16.mxu0 0
  %999 = vmatmul.mubr.bf16.gmra.mxu0 %v773
  %v1000 = vpop.f32.mrf.mxu0
  %v1001 = vadd.f32 0.0, %v1000
  %v1002 = vpop.f32.mrf.mxu0
  %v1003 = vadd.f32 0.0, %v1002
  %v1004 = vpop.f32.mrf.mxu0
  %v1005 = vpop.f32.mrf.mxu0
  %1006 = vdwg.mxu0
  %1007 = vmatprep.subr.bf16.mxu0 %v933
  %1008 = vmatpush1.bf16.msra.mxu0 %v932
  %1009 = vmatprep.subr.bf16.mxu0 %v929
  %1010 = vmatpush1.bf16.msra.mxu0 %v928
  %1011 = vmatprep.subr.bf16.mxu0 %v925
  %1012 = vmatpush1.bf16.msra.mxu0 %v924
  %1013 = vmatprep.subr.bf16.mxu0 %v921
  %1014 = vmatpush1.bf16.msra.mxu0 %v920
  %1015 = vmatprep.subr.bf16.mxu0 %v917
  %1016 = vmatpush1.bf16.msra.mxu0 %v916
  %1017 = vmatprep.subr.bf16.mxu0 %v913
  %1018 = vmatpush1.bf16.msra.mxu0 %v912
  %1019 = vmatprep.subr.bf16.mxu0 %v909
  %1020 = vmatpush1.bf16.msra.mxu0 %v908
  %1021 = vmatprep.subr.bf16.mxu0 %v905
  %1022 = vmatpush1.bf16.msra.mxu0 %v904
  %1023 = vmatprep.subr.bf16.mxu0 0
  %1024 = vmatpush2.bf16.msra.mxu0 0
  %1025 = vmatprep.subr.bf16.mxu0 0
  %1026 = vmatpush2.bf16.msra.mxu0 0
  %1027 = vmatprep.subr.bf16.mxu0 0
  %1028 = vmatpush2.bf16.msra.mxu0 0
  %1029 = vmatprep.subr.bf16.mxu0 0
  %1030 = vmatpush2.bf16.msra.mxu0 0
  %1031 = vmatprep.subr.bf16.mxu0 0
  %1032 = vmatpush2.bf16.msra.mxu0 0
  %1033 = vmatprep.subr.bf16.mxu0 0
  %1034 = vmatpush2.bf16.msra.mxu0 0
  %1035 = vmatprep.subr.bf16.mxu0 0
  %1036 = vmatpush2.bf16.msra.mxu0 0
  %1037 = vmatprep.subr.bf16.mxu0 0
  %1038 = vmatpush2.bf16.msra.mxu0 0
  %1039 = vmatprep.mubr.bf16.mxu0 0
  %1040 = vmatmul.mubr.bf16.gmra.mxu0 %v773
  %v1041 = vpop.f32.mrf.mxu0
  %v1042 = vadd.f32 0.0, %v1041
  %v1043 = vpop.f32.mrf.mxu0
  %v1044 = vadd.f32 0.0, %v1043
  %v1045 = vpop.f32.mrf.mxu0
  %v1046 = vpop.f32.mrf.mxu0
  %1047 = vdwg.mxu0
  %v1048 = vadd.f32 %v769, %v1001
  %v1049 = vadd.f32 %v770, %v1003
  %v1050 = vadd.f32 %v771, %v1042
  %v1051 = vadd.f32 %v772, %v1044
  %v1052 = vxor.u32 %v1048, 2147483648
  %v1053 = vmul.f32 %v1052, 1.442695
  %v1054 = vpow.pop %v1053
  %v1055 = vadd.f32 %v1054, 1.0
  %v1056 = vrcp.pop %v1055
  %v1057 = vmul.f32 1.0, %v1056
  %v1058 = vxor.u32 %v1049, 2147483648
  %v1059 = vmul.f32 %v1058, 1.442695
  %v1060 = vpow.pop %v1059
  %v1061 = vadd.f32 %v1060, 1.0
  %v1062 = vrcp.pop %v1061
  %v1063 = vmul.f32 1.0, %v1062
  %v1064 = vtanh.pop %v1050
  %v1065 = vxor.u32 %v1051, 2147483648
  %v1066 = vmul.f32 %v1065, 1.442695
  %v1067 = vpow.pop %v1066
  %v1068 = vadd.f32 %v1067, 1.0
  %v1069 = vrcp.pop %v1068
  %v1070 = vmul.f32 1.0, %v1069
  %v1071 = vmul.f32 %v1063, %v762
  %v1072 = vmul.f32 %v1057, %v1064
  %v1073 = vadd.f32 %v1071, %v1072
  %v1074 = vtanh.pop %v1073
  %v1075 = vmul.f32 %v1070, %v1074
  %s1076 = scalar_lea.vmem %s4, 8
  %1077 = vst [vmem:[%s1076] sm:$0xff] %v1075
  %s1078 = smul.u32 2, 4
  %s1079 = smul.addr %s1078, 8
  %s1080 = scalar_lea.vmem [#allocation4], %s1079
  %v1081 = vld [vmem:[%s1080] sm:$0xff]
  %v1082 = vld [vmem:[%s1080 + $0x8] sm:$0xff]
  %v1083 = vld [vmem:[%s1080 + $0x10] sm:$0xff]
  %v1084 = vld [vmem:[%s1080 + $0x18] sm:$0xff]
  %v1085 = vpack.c.bf16 %v1075, %v1075
  %v1086 = vld [vmem:[#allocation3] sm:$0xff]
  %v1087 = vld [vmem:[#allocation3 + $0x8] sm:$0xff]
  %v1088 = vld [vmem:[#allocation3 + $0x10] sm:$0xff]
  %v1089 = vld [vmem:[#allocation3 + $0x18] sm:$0xff]
  %v1090 = vld [vmem:[#allocation3 + $0x20] sm:$0xff]
  %v1091 = vld [vmem:[#allocation3 + $0x28] sm:$0xff]
  %v1092 = vld [vmem:[#allocation3 + $0x30] sm:$0xff]
  %v1093 = vld [vmem:[#allocation3 + $0x38] sm:$0xff]
  %v1094 = vld [vmem:[#allocation3 + $0x40] sm:$0xff]
  %v1095 = vld [vmem:[#allocation3 + $0x48] sm:$0xff]
  %v1096 = vld [vmem:[#allocation3 + $0x50] sm:$0xff]
  %v1097 = vld [vmem:[#allocation3 + $0x58] sm:$0xff]
  %v1098 = vld [vmem:[#allocation3 + $0x60] sm:$0xff]
  %v1099 = vld [vmem:[#allocation3 + $0x68] sm:$0xff]
  %v1100 = vld [vmem:[#allocation3 + $0x70] sm:$0xff]
  %v1101 = vld [vmem:[#allocation3 + $0x78] sm:$0xff]
  %v1102 = vld [vmem:[#allocation3 + $0x80] sm:$0xff]
  %v1103 = vld [vmem:[#allocation3 + $0x88] sm:$0xff]
  %v1104 = vld [vmem:[#allocation3 + $0x90] sm:$0xff]
  %v1105 = vld [vmem:[#allocation3 + $0x98] sm:$0xff]
  %v1106 = vld [vmem:[#allocation3 + $0xa0] sm:$0xff]
  %v1107 = vld [vmem:[#allocation3 + $0xa8] sm:$0xff]
  %v1108 = vld [vmem:[#allocation3 + $0xb0] sm:$0xff]
  %v1109 = vld [vmem:[#allocation3 + $0xb8] sm:$0xff]
  %v1110 = vld [vmem:[#allocation3 + $0xc0] sm:$0xff]
  %v1111 = vld [vmem:[#allocation3 + $0xc8] sm:$0xff]
  %v1112 = vld [vmem:[#allocation3 + $0xd0] sm:$0xff]
  %v1113 = vld [vmem:[#allocation3 + $0xd8] sm:$0xff]
  %v1114 = vld [vmem:[#allocation3 + $0xe0] sm:$0xff]
  %v1115 = vld [vmem:[#allocation3 + $0xe8] sm:$0xff]
  %v1116 = vld [vmem:[#allocation3 + $0xf0] sm:$0xff]
  %v1117 = vld [vmem:[#allocation3 + $0xf8] sm:$0xff]
  %v1150 = vunpack.c.l.b16 %v1086
  %v1151 = vunpack.c.h.b16 %v1086
  %v1152 = vunpack.c.l.b16 %v1087
  %v1153 = vunpack.c.h.b16 %v1087
  %v1154 = vunpack.c.l.b16 %v1088
  %v1155 = vunpack.c.h.b16 %v1088
  %v1156 = vunpack.c.l.b16 %v1089
  %v1157 = vunpack.c.h.b16 %v1089
  %v1158 = vunpack.c.l.b16 %v1090
  %v1159 = vunpack.c.h.b16 %v1090
  %v1160 = vunpack.c.l.b16 %v1091
  %v1161 = vunpack.c.h.b16 %v1091
  %v1162 = vunpack.c.l.b16 %v1092
  %v1163 = vunpack.c.h.b16 %v1092
  %v1164 = vunpack.c.l.b16 %v1093
  %v1165 = vunpack.c.h.b16 %v1093
  %v1166 = vunpack.c.l.b16 %v1094
  %v1167 = vunpack.c.h.b16 %v1094
  %v1168 = vunpack.c.l.b16 %v1095
  %v1169 = vunpack.c.h.b16 %v1095
  %v1170 = vunpack.c.l.b16 %v1096
  %v1171 = vunpack.c.h.b16 %v1096
  %v1172 = vunpack.c.l.b16 %v1097
  %v1173 = vunpack.c.h.b16 %v1097
  %v1174 = vunpack.c.l.b16 %v1098
  %v1175 = vunpack.c.h.b16 %v1098
  %v1176 = vunpack.c.l.b16 %v1099
  %v1177 = vunpack.c.h.b16 %v1099
  %v1178 = vunpack.c.l.b16 %v1100
  %v1179 = vunpack.c.h.b16 %v1100
  %v1180 = vunpack.c.l.b16 %v1101
  %v1181 = vunpack.c.h.b16 %v1101
  %v1182 = vunpack.c.l.b16 %v1102
  %v1183 = vunpack.c.h.b16 %v1102
  %v1184 = vunpack.c.l.b16 %v1103
  %v1185 = vunpack.c.h.b16 %v1103
  %v1186 = vunpack.c.l.b16 %v1104
  %v1187 = vunpack.c.h.b16 %v1104
  %v1188 = vunpack.c.l.b16 %v1105
  %v1189 = vunpack.c.h.b16 %v1105
  %v1190 = vunpack.c.l.b16 %v1106
  %v1191 = vunpack.c.h.b16 %v1106
  %v1192 = vunpack.c.l.b16 %v1107
  %v1193 = vunpack.c.h.b16 %v1107
  %v1194 = vunpack.c.l.b16 %v1108
  %v1195 = vunpack.c.h.b16 %v1108
  %v1196 = vunpack.c.l.b16 %v1109
  %v1197 = vunpack.c.h.b16 %v1109
  %v1198 = vunpack.c.l.b16 %v1110
  %v1199 = vunpack.c.h.b16 %v1110
  %v1200 = vunpack.c.l.b16 %v1111
  %v1201 = vunpack.c.h.b16 %v1111
  %v1202 = vunpack.c.l.b16 %v1112
  %v1203 = vunpack.c.h.b16 %v1112
  %v1204 = vunpack.c.l.b16 %v1113
  %v1205 = vunpack.c.h.b16 %v1113
  %v1206 = vunpack.c.l.b16 %v1114
  %v1207 = vunpack.c.h.b16 %v1114
  %v1208 = vunpack.c.l.b16 %v1115
  %v1209 = vunpack.c.h.b16 %v1115
  %v1210 = vunpack.c.l.b16 %v1116
  %v1211 = vunpack.c.h.b16 %v1116
  %v1212 = vunpack.c.l.b16 %v1117
  %v1213 = vunpack.c.h.b16 %v1117
  %v1214 = vpack.c.b16 %v1154, %v1150
  %v1215 = vpack.c.b16 %v1155, %v1151
  %v1216 = vpack.c.b16 %v1156, %v1152
  %v1217 = vpack.c.b16 %v1157, %v1153
  %v1218 = vpack.c.b16 %v1162, %v1158
  %v1219 = vpack.c.b16 %v1163, %v1159
  %v1220 = vpack.c.b16 %v1164, %v1160
  %v1221 = vpack.c.b16 %v1165, %v1161
  %v1222 = vpack.c.b16 %v1170, %v1166
  %v1223 = vpack.c.b16 %v1171, %v1167
  %v1224 = vpack.c.b16 %v1172, %v1168
  %v1225 = vpack.c.b16 %v1173, %v1169
  %v1226 = vpack.c.b16 %v1178, %v1174
  %v1227 = vpack.c.b16 %v1179, %v1175
  %v1228 = vpack.c.b16 %v1180, %v1176
  %v1229 = vpack.c.b16 %v1181, %v1177
  %v1230 = vpack.c.b16 %v1186, %v1182
  %v1231 = vpack.c.b16 %v1187, %v1183
  %v1232 = vpack.c.b16 %v1188, %v1184
  %v1233 = vpack.c.b16 %v1189, %v1185
  %v1234 = vpack.c.b16 %v1194, %v1190
  %v1235 = vpack.c.b16 %v1195, %v1191
  %v1236 = vpack.c.b16 %v1196, %v1192
  %v1237 = vpack.c.b16 %v1197, %v1193
  %v1238 = vpack.c.b16 %v1202, %v1198
  %v1239 = vpack.c.b16 %v1203, %v1199
  %v1240 = vpack.c.b16 %v1204, %v1200
  %v1241 = vpack.c.b16 %v1205, %v1201
  %v1242 = vpack.c.b16 %v1210, %v1206
  %v1243 = vpack.c.b16 %v1211, %v1207
  %v1244 = vpack.c.b16 %v1212, %v1208
  %v1245 = vpack.c.b16 %v1213, %v1209
  %1278 = vmatprep.subr.bf16.mxu0 %v1243
  %1279 = vmatpush1.bf16.msra.mxu0 %v1242
  %1280 = vmatprep.subr.bf16.mxu0 %v1239
  %1281 = vmatpush1.bf16.msra.mxu0 %v1238
  %1282 = vmatprep.subr.bf16.mxu0 %v1235
  %1283 = vmatpush1.bf16.msra.mxu0 %v1234
  %1284 = vmatprep.subr.bf16.mxu0 %v1231
  %1285 = vmatpush1.bf16.msra.mxu0 %v1230
  %1286 = vmatprep.subr.bf16.mxu0 %v1227
  %1287 = vmatpush1.bf16.msra.mxu0 %v1226
  %1288 = vmatprep.subr.bf16.mxu0 %v1223
  %1289 = vmatpush1.bf16.msra.mxu0 %v1222
  %1290 = vmatprep.subr.bf16.mxu0 %v1219
  %1291 = vmatpush1.bf16.msra.mxu0 %v1218
  %1292 = vmatprep.subr.bf16.mxu0 %v1215
  %1293 = vmatpush1.bf16.msra.mxu0 %v1214
  %1294 = vmatprep.subr.bf16.mxu0 0
  %1295 = vmatpush2.bf16.msra.mxu0 0
  %1296 = vmatprep.subr.bf16.mxu0 0
  %1297 = vmatpush2.bf16.msra.mxu0 0
  %1298 = vmatprep.subr.bf16.mxu0 0
  %1299 = vmatpush2.bf16.msra.mxu0 0
  %1300 = vmatprep.subr.bf16.mxu0 0
  %1301 = vmatpush2.bf16.msra.mxu0 0
  %1302 = vmatprep.subr.bf16.mxu0 0
  %1303 = vmatpush2.bf16.msra.mxu0 0
  %1304 = vmatprep.subr.bf16.mxu0 0
  %1305 = vmatpush2.bf16.msra.mxu0 0
  %1306 = vmatprep.subr.bf16.mxu0 0
  %1307 = vmatpush2.bf16.msra.mxu0 0
  %1308 = vmatprep.subr.bf16.mxu0 0
  %1309 = vmatpush2.bf16.msra.mxu0 0
  %1310 = vmatprep.mubr.bf16.mxu0 0
  %1311 = vmatmul.mubr.bf16.gmra.mxu0 %v1085
  %v1312 = vpop.f32.mrf.mxu0
  %v1313 = vadd.f32 0.0, %v1312
  %v1314 = vpop.f32.mrf.mxu0
  %v1315 = vadd.f32 0.0, %v1314
  %v1316 = vpop.f32.mrf.mxu0
  %v1317 = vpop.f32.mrf.mxu0
  %1318 = vdwg.mxu0
  %1319 = vmatprep.subr.bf16.mxu0 %v1245
  %1320 = vmatpush1.bf16.msra.mxu0 %v1244
  %1321 = vmatprep.subr.bf16.mxu0 %v1241
  %1322 = vmatpush1.bf16.msra.mxu0 %v1240
  %1323 = vmatprep.subr.bf16.mxu0 %v1237
  %1324 = vmatpush1.bf16.msra.mxu0 %v1236
  %1325 = vmatprep.subr.bf16.mxu0 %v1233
  %1326 = vmatpush1.bf16.msra.mxu0 %v1232
  %1327 = vmatprep.subr.bf16.mxu0 %v1229
  %1328 = vmatpush1.bf16.msra.mxu0 %v1228
  %1329 = vmatprep.subr.bf16.mxu0 %v1225
  %1330 = vmatpush1.bf16.msra.mxu0 %v1224
  %1331 = vmatprep.subr.bf16.mxu0 %v1221
  %1332 = vmatpush1.bf16.msra.mxu0 %v1220
  %1333 = vmatprep.subr.bf16.mxu0 %v1217
  %1334 = vmatpush1.bf16.msra.mxu0 %v1216
  %1335 = vmatprep.subr.bf16.mxu0 0
  %1336 = vmatpush2.bf16.msra.mxu0 0
  %1337 = vmatprep.subr.bf16.mxu0 0
  %1338 = vmatpush2.bf16.msra.mxu0 0
  %1339 = vmatprep.subr.bf16.mxu0 0
  %1340 = vmatpush2.bf16.msra.mxu0 0
  %1341 = vmatprep.subr.bf16.mxu0 0
  %1342 = vmatpush2.bf16.msra.mxu0 0
  %1343 = vmatprep.subr.bf16.mxu0 0
  %1344 = vmatpush2.bf16.msra.mxu0 0
  %1345 = vmatprep.subr.bf16.mxu0 0
  %1346 = vmatpush2.bf16.msra.mxu0 0
  %1347 = vmatprep.subr.bf16.mxu0 0
  %1348 = vmatpush2.bf16.msra.mxu0 0
  %1349 = vmatprep.subr.bf16.mxu0 0
  %1350 = vmatpush2.bf16.msra.mxu0 0
  %1351 = vmatprep.mubr.bf16.mxu0 0
  %1352 = vmatmul.mubr.bf16.gmra.mxu0 %v1085
  %v1353 = vpop.f32.mrf.mxu0
  %v1354 = vadd.f32 0.0, %v1353
  %v1355 = vpop.f32.mrf.mxu0
  %v1356 = vadd.f32 0.0, %v1355
  %v1357 = vpop.f32.mrf.mxu0
  %v1358 = vpop.f32.mrf.mxu0
  %1359 = vdwg.mxu0
  %v1360 = vadd.f32 %v1081, %v1313
  %v1361 = vadd.f32 %v1082, %v1315
  %v1362 = vadd.f32 %v1083, %v1354
  %v1363 = vadd.f32 %v1084, %v1356
  %v1364 = vxor.u32 %v1360, 2147483648
  %v1365 = vmul.f32 %v1364, 1.442695
  %v1366 = vpow.pop %v1365
  %v1367 = vadd.f32 %v1366, 1.0
  %v1368 = vrcp.pop %v1367
  %v1369 = vmul.f32 1.0, %v1368
  %v1370 = vxor.u32 %v1361, 2147483648
  %v1371 = vmul.f32 %v1370, 1.442695
  %v1372 = vpow.pop %v1371
  %v1373 = vadd.f32 %v1372, 1.0
  %v1374 = vrcp.pop %v1373
  %v1375 = vmul.f32 1.0, %v1374
  %v1376 = vtanh.pop %v1362
  %v1377 = vxor.u32 %v1363, 2147483648
  %v1378 = vmul.f32 %v1377, 1.442695
  %v1379 = vpow.pop %v1378
  %v1380 = vadd.f32 %v1379, 1.0
  %v1381 = vrcp.pop %v1380
  %v1382 = vmul.f32 1.0, %v1381
  %v1383 = vmul.f32 %v1375, %v1073
  %v1384 = vmul.f32 %v1369, %v1376
  %v1385 = vadd.f32 %v1383, %v1384
  %v1386 = vtanh.pop %v1385
  %v1387 = vmul.f32 %v1382, %v1386
  %s1388 = scalar_lea.vmem %s4, 16
  %1389 = vst [vmem:[%s1388] sm:$0xff] %v1387
  %s1390 = smul.u32 3, 4
  %s1391 = smul.addr %s1390, 8
  %s1392 = scalar_lea.vmem [#allocation4], %s1391
  %v1393 = vld [vmem:[%s1392] sm:$0xff]
  %v1394 = vld [vmem:[%s1392 + $0x8] sm:$0xff]
  %v1395 = vld [vmem:[%s1392 + $0x10] sm:$0xff]
  %v1396 = vld [vmem:[%s1392 + $0x18] sm:$0xff]
  %v1397 = vpack.c.bf16 %v1387, %v1387
  %v1398 = vld [vmem:[#allocation3] sm:$0xff]
  %v1399 = vld [vmem:[#allocation3 + $0x8] sm:$0xff]
  %v1400 = vld [vmem:[#allocation3 + $0x10] sm:$0xff]
  %v1401 = vld [vmem:[#allocation3 + $0x18] sm:$0xff]
  %v1402 = vld [vmem:[#allocation3 + $0x20] sm:$0xff]
  %v1403 = vld [vmem:[#allocation3 + $0x28] sm:$0xff]
  %v1404 = vld [vmem:[#allocation3 + $0x30] sm:$0xff]
  %v1405 = vld [vmem:[#allocation3 + $0x38] sm:$0xff]
  %v1406 = vld [vmem:[#allocation3 + $0x40] sm:$0xff]
  %v1407 = vld [vmem:[#allocation3 + $0x48] sm:$0xff]
  %v1408 = vld [vmem:[#allocation3 + $0x50] sm:$0xff]
  %v1409 = vld [vmem:[#allocation3 + $0x58] sm:$0xff]
  %v1410 = vld [vmem:[#allocation3 + $0x60] sm:$0xff]
  %v1411 = vld [vmem:[#allocation3 + $0x68] sm:$0xff]
  %v1412 = vld [vmem:[#allocation3 + $0x70] sm:$0xff]
  %v1413 = vld [vmem:[#allocation3 + $0x78] sm:$0xff]
  %v1414 = vld [vmem:[#allocation3 + $0x80] sm:$0xff]
  %v1415 = vld [vmem:[#allocation3 + $0x88] sm:$0xff]
  %v1416 = vld [vmem:[#allocation3 + $0x90] sm:$0xff]
  %v1417 = vld [vmem:[#allocation3 + $0x98] sm:$0xff]
  %v1418 = vld [vmem:[#allocation3 + $0xa0] sm:$0xff]
  %v1419 = vld [vmem:[#allocation3 + $0xa8] sm:$0xff]
  %v1420 = vld [vmem:[#allocation3 + $0xb0] sm:$0xff]
  %v1421 = vld [vmem:[#allocation3 + $0xb8] sm:$0xff]
  %v1422 = vld [vmem:[#allocation3 + $0xc0] sm:$0xff]
  %v1423 = vld [vmem:[#allocation3 + $0xc8] sm:$0xff]
  %v1424 = vld [vmem:[#allocation3 + $0xd0] sm:$0xff]
  %v1425 = vld [vmem:[#allocation3 + $0xd8] sm:$0xff]
  %v1426 = vld [vmem:[#allocation3 + $0xe0] sm:$0xff]
  %v1427 = vld [vmem:[#allocation3 + $0xe8] sm:$0xff]
  %v1428 = vld [vmem:[#allocation3 + $0xf0] sm:$0xff]
  %v1429 = vld [vmem:[#allocation3 + $0xf8] sm:$0xff]
  %v1462 = vunpack.c.l.b16 %v1398
  %v1463 = vunpack.c.h.b16 %v1398
  %v1464 = vunpack.c.l.b16 %v1399
  %v1465 = vunpack.c.h.b16 %v1399
  %v1466 = vunpack.c.l.b16 %v1400
  %v1467 = vunpack.c.h.b16 %v1400
  %v1468 = vunpack.c.l.b16 %v1401
  %v1469 = vunpack.c.h.b16 %v1401
  %v1470 = vunpack.c.l.b16 %v1402
  %v1471 = vunpack.c.h.b16 %v1402
  %v1472 = vunpack.c.l.b16 %v1403
  %v1473 = vunpack.c.h.b16 %v1403
  %v1474 = vunpack.c.l.b16 %v1404
  %v1475 = vunpack.c.h.b16 %v1404
  %v1476 = vunpack.c.l.b16 %v1405
  %v1477 = vunpack.c.h.b16 %v1405
  %v1478 = vunpack.c.l.b16 %v1406
  %v1479 = vunpack.c.h.b16 %v1406
  %v1480 = vunpack.c.l.b16 %v1407
  %v1481 = vunpack.c.h.b16 %v1407
  %v1482 = vunpack.c.l.b16 %v1408
  %v1483 = vunpack.c.h.b16 %v1408
  %v1484 = vunpack.c.l.b16 %v1409
  %v1485 = vunpack.c.h.b16 %v1409
  %v1486 = vunpack.c.l.b16 %v1410
  %v1487 = vunpack.c.h.b16 %v1410
  %v1488 = vunpack.c.l.b16 %v1411
  %v1489 = vunpack.c.h.b16 %v1411
  %v1490 = vunpack.c.l.b16 %v1412
  %v1491 = vunpack.c.h.b16 %v1412
  %v1492 = vunpack.c.l.b16 %v1413
  %v1493 = vunpack.c.h.b16 %v1413
  %v1494 = vunpack.c.l.b16 %v1414
  %v1495 = vunpack.c.h.b16 %v1414
  %v1496 = vunpack.c.l.b16 %v1415
  %v1497 = vunpack.c.h.b16 %v1415
  %v1498 = vunpack.c.l.b16 %v1416
  %v1499 = vunpack.c.h.b16 %v1416
  %v1500 = vunpack.c.l.b16 %v1417
  %v1501 = vunpack.c.h.b16 %v1417
  %v1502 = vunpack.c.l.b16 %v1418
  %v1503 = vunpack.c.h.b16 %v1418
  %v1504 = vunpack.c.l.b16 %v1419
  %v1505 = vunpack.c.h.b16 %v1419
  %v1506 = vunpack.c.l.b16 %v1420
  %v1507 = vunpack.c.h.b16 %v1420
  %v1508 = vunpack.c.l.b16 %v1421
  %v1509 = vunpack.c.h.b16 %v1421
  %v1510 = vunpack.c.l.b16 %v1422
  %v1511 = vunpack.c.h.b16 %v1422
  %v1512 = vunpack.c.l.b16 %v1423
  %v1513 = vunpack.c.h.b16 %v1423
  %v1514 = vunpack.c.l.b16 %v1424
  %v1515 = vunpack.c.h.b16 %v1424
  %v1516 = vunpack.c.l.b16 %v1425
  %v1517 = vunpack.c.h.b16 %v1425
  %v1518 = vunpack.c.l.b16 %v1426
  %v1519 = vunpack.c.h.b16 %v1426
  %v1520 = vunpack.c.l.b16 %v1427
  %v1521 = vunpack.c.h.b16 %v1427
  %v1522 = vunpack.c.l.b16 %v1428
  %v1523 = vunpack.c.h.b16 %v1428
  %v1524 = vunpack.c.l.b16 %v1429
  %v1525 = vunpack.c.h.b16 %v1429
  %v1526 = vpack.c.b16 %v1466, %v1462
  %v1527 = vpack.c.b16 %v1467, %v1463
  %v1528 = vpack.c.b16 %v1468, %v1464
  %v1529 = vpack.c.b16 %v1469, %v1465
  %v1530 = vpack.c.b16 %v1474, %v1470
  %v1531 = vpack.c.b16 %v1475, %v1471
  %v1532 = vpack.c.b16 %v1476, %v1472
  %v1533 = vpack.c.b16 %v1477, %v1473
  %v1534 = vpack.c.b16 %v1482, %v1478
  %v1535 = vpack.c.b16 %v1483, %v1479
  %v1536 = vpack.c.b16 %v1484, %v1480
  %v1537 = vpack.c.b16 %v1485, %v1481
  %v1538 = vpack.c.b16 %v1490, %v1486
  %v1539 = vpack.c.b16 %v1491, %v1487
  %v1540 = vpack.c.b16 %v1492, %v1488
  %v1541 = vpack.c.b16 %v1493, %v1489
  %v1542 = vpack.c.b16 %v1498, %v1494
  %v1543 = vpack.c.b16 %v1499, %v1495
  %v1544 = vpack.c.b16 %v1500, %v1496
  %v1545 = vpack.c.b16 %v1501, %v1497
  %v1546 = vpack.c.b16 %v1506, %v1502
  %v1547 = vpack.c.b16 %v1507, %v1503
  %v1548 = vpack.c.b16 %v1508, %v1504
  %v1549 = vpack.c.b16 %v1509, %v1505
  %v1550 = vpack.c.b16 %v1514, %v1510
  %v1551 = vpack.c.b16 %v1515, %v1511
  %v1552 = vpack.c.b16 %v1516, %v1512
  %v1553 = vpack.c.b16 %v1517, %v1513
  %v1554 = vpack.c.b16 %v1522, %v1518
  %v1555 = vpack.c.b16 %v1523, %v1519
  %v1556 = vpack.c.b16 %v1524, %v1520
  %v1557 = vpack.c.b16 %v1525, %v1521
  %1590 = vmatprep.subr.bf16.mxu0 %v1555
  %1591 = vmatpush1.bf16.msra.mxu0 %v1554
  %1592 = vmatprep.subr.bf16.mxu0 %v1551
  %1593 = vmatpush1.bf16.msra.mxu0 %v1550
  %1594 = vmatprep.subr.bf16.mxu0 %v1547
  %1595 = vmatpush1.bf16.msra.mxu0 %v1546
  %1596 = vmatprep.subr.bf16.mxu0 %v1543
  %1597 = vmatpush1.bf16.msra.mxu0 %v1542
  %1598 = vmatprep.subr.bf16.mxu0 %v1539
  %1599 = vmatpush1.bf16.msra.mxu0 %v1538
  %1600 = vmatprep.subr.bf16.mxu0 %v1535
  %1601 = vmatpush1.bf16.msra.mxu0 %v1534
  %1602 = vmatprep.subr.bf16.mxu0 %v1531
  %1603 = vmatpush1.bf16.msra.mxu0 %v1530
  %1604 = vmatprep.subr.bf16.mxu0 %v1527
  %1605 = vmatpush1.bf16.msra.mxu0 %v1526
  %1606 = vmatprep.subr.bf16.mxu0 0
  %1607 = vmatpush2.bf16.msra.mxu0 0
  %1608 = vmatprep.subr.bf16.mxu0 0
  %1609 = vmatpush2.bf16.msra.mxu0 0
  %1610 = vmatprep.subr.bf16.mxu0 0
  %1611 = vmatpush2.bf16.msra.mxu0 0
  %1612 = vmatprep.subr.bf16.mxu0 0
  %1613 = vmatpush2.bf16.msra.mxu0 0
  %1614 = vmatprep.subr.bf16.mxu0 0
  %1615 = vmatpush2.bf16.msra.mxu0 0
  %1616 = vmatprep.subr.bf16.mxu0 0
  %1617 = vmatpush2.bf16.msra.mxu0 0
  %1618 = vmatprep.subr.bf16.mxu0 0
  %1619 = vmatpush2.bf16.msra.mxu0 0
  %1620 = vmatprep.subr.bf16.mxu0 0
  %1621 = vmatpush2.bf16.msra.mxu0 0
  %1622 = vmatprep.mubr.bf16.mxu0 0
  %1623 = vmatmul.mubr.bf16.gmra.mxu0 %v1397
  %v1624 = vpop.f32.mrf.mxu0
  %v1625 = vadd.f32 0.0, %v1624
  %v1626 = vpop.f32.mrf.mxu0
  %v1627 = vadd.f32 0.0, %v1626
  %v1628 = vpop.f32.mrf.mxu0
  %v1629 = vpop.f32.mrf.mxu0
  %1630 = vdwg.mxu0
  %1631 = vmatprep.subr.bf16.mxu0 %v1557
  %1632 = vmatpush1.bf16.msra.mxu0 %v1556
  %1633 = vmatprep.subr.bf16.mxu0 %v1553
  %1634 = vmatpush1.bf16.msra.mxu0 %v1552
  %1635 = vmatprep.subr.bf16.mxu0 %v1549
  %1636 = vmatpush1.bf16.msra.mxu0 %v1548
  %1637 = vmatprep.subr.bf16.mxu0 %v1545
  %1638 = vmatpush1.bf16.msra.mxu0 %v1544
  %1639 = vmatprep.subr.bf16.mxu0 %v1541
  %1640 = vmatpush1.bf16.msra.mxu0 %v1540
  %1641 = vmatprep.subr.bf16.mxu0 %v1537
  %1642 = vmatpush1.bf16.msra.mxu0 %v1536
  %1643 = vmatprep.subr.bf16.mxu0 %v1533
  %1644 = vmatpush1.bf16.msra.mxu0 %v1532
  %1645 = vmatprep.subr.bf16.mxu0 %v1529
  %1646 = vmatpush1.bf16.msra.mxu0 %v1528
  %1647 = vmatprep.subr.bf16.mxu0 0
  %1648 = vmatpush2.bf16.msra.mxu0 0
  %1649 = vmatprep.subr.bf16.mxu0 0
  %1650 = vmatpush2.bf16.msra.mxu0 0
  %1651 = vmatprep.subr.bf16.mxu0 0
  %1652 = vmatpush2.bf16.msra.mxu0 0
  %1653 = vmatprep.subr.bf16.mxu0 0
  %1654 = vmatpush2.bf16.msra.mxu0 0
  %1655 = vmatprep.subr.bf16.mxu0 0
  %1656 = vmatpush2.bf16.msra.mxu0 0
  %1657 = vmatprep.subr.bf16.mxu0 0
  %1658 = vmatpush2.bf16.msra.mxu0 0
  %1659 = vmatprep.subr.bf16.mxu0 0
  %1660 = vmatpush2.bf16.msra.mxu0 0
  %1661 = vmatprep.subr.bf16.mxu0 0
  %1662 = vmatpush2.bf16.msra.mxu0 0
  %1663 = vmatprep.mubr.bf16.mxu0 0
  %1664 = vmatmul.mubr.bf16.gmra.mxu0 %v1397
  %v1665 = vpop.f32.mrf.mxu0
  %v1666 = vadd.f32 0.0, %v1665
  %v1667 = vpop.f32.mrf.mxu0
  %v1668 = vadd.f32 0.0, %v1667
  %v1669 = vpop.f32.mrf.mxu0
  %v1670 = vpop.f32.mrf.mxu0
  %1671 = vdwg.mxu0
  %v1672 = vadd.f32 %v1393, %v1625
  %v1673 = vadd.f32 %v1394, %v1627
  %v1674 = vadd.f32 %v1395, %v1666
  %v1675 = vadd.f32 %v1396, %v1668
  %v1676 = vxor.u32 %v1672, 2147483648
  %v1677 = vmul.f32 %v1676, 1.442695
  %v1678 = vpow.pop %v1677
  %v1679 = vadd.f32 %v1678, 1.0
  %v1680 = vrcp.pop %v1679
  %v1681 = vmul.f32 1.0, %v1680
  %v1682 = vxor.u32 %v1673, 2147483648
  %v1683 = vmul.f32 %v1682, 1.442695
  %v1684 = vpow.pop %v1683
  %v1685 = vadd.f32 %v1684, 1.0
  %v1686 = vrcp.pop %v1685
  %v1687 = vmul.f32 1.0, %v1686
  %v1688 = vtanh.pop %v1674
  %v1689 = vxor.u32 %v1675, 2147483648
  %v1690 = vmul.f32 %v1689, 1.442695
  %v1691 = vpow.pop %v1690
  %v1692 = vadd.f32 %v1691, 1.0
  %v1693 = vrcp.pop %v1692
  %v1694 = vmul.f32 1.0, %v1693
  %v1695 = vmul.f32 %v1687, %v1385
  %v1696 = vmul.f32 %v1681, %v1688
  %v1697 = vadd.f32 %v1695, %v1696
  %v1698 = vtanh.pop %v1697
  %v1699 = vmul.f32 %v1694, %v1698
  %s1700 = scalar_lea.vmem %s4, 24
  %1701 = vst [vmem:[%s1700] sm:$0xff] %v1699
  %s1702 = smul.u32 4, 4
  %s1703 = smul.addr %s1702, 8
  %s1704 = scalar_lea.vmem [#allocation4], %s1703
  %v1705 = vld [vmem:[%s1704] sm:$0xff]
  %v1706 = vld [vmem:[%s1704 + $0x8] sm:$0xff]
  %v1707 = vld [vmem:[%s1704 + $0x10] sm:$0xff]
  %v1708 = vld [vmem:[%s1704 + $0x18] sm:$0xff]
  %v1709 = vpack.c.bf16 %v1699, %v1699
  %v1710 = vld [vmem:[#allocation3] sm:$0xff]
  %v1711 = vld [vmem:[#allocation3 + $0x8] sm:$0xff]
  %v1712 = vld [vmem:[#allocation3 + $0x10] sm:$0xff]
  %v1713 = vld [vmem:[#allocation3 + $0x18] sm:$0xff]
  %v1714 = vld [vmem:[#allocation3 + $0x20] sm:$0xff]
  %v1715 = vld [vmem:[#allocation3 + $0x28] sm:$0xff]
  %v1716 = vld [vmem:[#allocation3 + $0x30] sm:$0xff]
  %v1717 = vld [vmem:[#allocation3 + $0x38] sm:$0xff]
  %v1718 = vld [vmem:[#allocation3 + $0x40] sm:$0xff]
  %v1719 = vld [vmem:[#allocation3 + $0x48] sm:$0xff]
  %v1720 = vld [vmem:[#allocation3 + $0x50] sm:$0xff]
  %v1721 = vld [vmem:[#allocation3 + $0x58] sm:$0xff]
  %v1722 = vld [vmem:[#allocation3 + $0x60] sm:$0xff]
  %v1723 = vld [vmem:[#allocation3 + $0x68] sm:$0xff]
  %v1724 = vld [vmem:[#allocation3 + $0x70] sm:$0xff]
  %v1725 = vld [vmem:[#allocation3 + $0x78] sm:$0xff]
  %v1726 = vld [vmem:[#allocation3 + $0x80] sm:$0xff]
  %v1727 = vld [vmem:[#allocation3 + $0x88] sm:$0xff]
  %v1728 = vld [vmem:[#allocation3 + $0x90] sm:$0xff]
  %v1729 = vld [vmem:[#allocation3 + $0x98] sm:$0xff]
  %v1730 = vld [vmem:[#allocation3 + $0xa0] sm:$0xff]
  %v1731 = vld [vmem:[#allocation3 + $0xa8] sm:$0xff]
  %v1732 = vld [vmem:[#allocation3 + $0xb0] sm:$0xff]
  %v1733 = vld [vmem:[#allocation3 + $0xb8] sm:$0xff]
  %v1734 = vld [vmem:[#allocation3 + $0xc0] sm:$0xff]
  %v1735 = vld [vmem:[#allocation3 + $0xc8] sm:$0xff]
  %v1736 = vld [vmem:[#allocation3 + $0xd0] sm:$0xff]
  %v1737 = vld [vmem:[#allocation3 + $0xd8] sm:$0xff]
  %v1738 = vld [vmem:[#allocation3 + $0xe0] sm:$0xff]
  %v1739 = vld [vmem:[#allocation3 + $0xe8] sm:$0xff]
  %v1740 = vld [vmem:[#allocation3 + $0xf0] sm:$0xff]
  %v1741 = vld [vmem:[#allocation3 + $0xf8] sm:$0xff]
  %v1774 = vunpack.c.l.b16 %v1710
  %v1775 = vunpack.c.h.b16 %v1710
  %v1776 = vunpack.c.l.b16 %v1711
  %v1777 = vunpack.c.h.b16 %v1711
  %v1778 = vunpack.c.l.b16 %v1712
  %v1779 = vunpack.c.h.b16 %v1712
  %v1780 = vunpack.c.l.b16 %v1713
  %v1781 = vunpack.c.h.b16 %v1713
  %v1782 = vunpack.c.l.b16 %v1714
  %v1783 = vunpack.c.h.b16 %v1714
  %v1784 = vunpack.c.l.b16 %v1715
  %v1785 = vunpack.c.h.b16 %v1715
  %v1786 = vunpack.c.l.b16 %v1716
  %v1787 = vunpack.c.h.b16 %v1716
  %v1788 = vunpack.c.l.b16 %v1717
  %v1789 = vunpack.c.h.b16 %v1717
  %v1790 = vunpack.c.l.b16 %v1718
  %v1791 = vunpack.c.h.b16 %v1718
  %v1792 = vunpack.c.l.b16 %v1719
  %v1793 = vunpack.c.h.b16 %v1719
  %v1794 = vunpack.c.l.b16 %v1720
  %v1795 = vunpack.c.h.b16 %v1720
  %v1796 = vunpack.c.l.b16 %v1721
  %v1797 = vunpack.c.h.b16 %v1721
  %v1798 = vunpack.c.l.b16 %v1722
  %v1799 = vunpack.c.h.b16 %v1722
  %v1800 = vunpack.c.l.b16 %v1723
  %v1801 = vunpack.c.h.b16 %v1723
  %v1802 = vunpack.c.l.b16 %v1724
  %v1803 = vunpack.c.h.b16 %v1724
  %v1804 = vunpack.c.l.b16 %v1725
  %v1805 = vunpack.c.h.b16 %v1725
  %v1806 = vunpack.c.l.b16 %v1726
  %v1807 = vunpack.c.h.b16 %v1726
  %v1808 = vunpack.c.l.b16 %v1727
  %v1809 = vunpack.c.h.b16 %v1727
  %v1810 = vunpack.c.l.b16 %v1728
  %v1811 = vunpack.c.h.b16 %v1728
  %v1812 = vunpack.c.l.b16 %v1729
  %v1813 = vunpack.c.h.b16 %v1729
  %v1814 = vunpack.c.l.b16 %v1730
  %v1815 = vunpack.c.h.b16 %v1730
  %v1816 = vunpack.c.l.b16 %v1731
  %v1817 = vunpack.c.h.b16 %v1731
  %v1818 = vunpack.c.l.b16 %v1732
  %v1819 = vunpack.c.h.b16 %v1732
  %v1820 = vunpack.c.l.b16 %v1733
  %v1821 = vunpack.c.h.b16 %v1733
  %v1822 = vunpack.c.l.b16 %v1734
  %v1823 = vunpack.c.h.b16 %v1734
  %v1824 = vunpack.c.l.b16 %v1735
  %v1825 = vunpack.c.h.b16 %v1735
  %v1826 = vunpack.c.l.b16 %v1736
  %v1827 = vunpack.c.h.b16 %v1736
  %v1828 = vunpack.c.l.b16 %v1737
  %v1829 = vunpack.c.h.b16 %v1737
  %v1830 = vunpack.c.l.b16 %v1738
  %v1831 = vunpack.c.h.b16 %v1738
  %v1832 = vunpack.c.l.b16 %v1739
  %v1833 = vunpack.c.h.b16 %v1739
  %v1834 = vunpack.c.l.b16 %v1740
  %v1835 = vunpack.c.h.b16 %v1740
  %v1836 = vunpack.c.l.b16 %v1741
  %v1837 = vunpack.c.h.b16 %v1741
  %v1838 = vpack.c.b16 %v1778, %v1774
  %v1839 = vpack.c.b16 %v1779, %v1775
  %v1840 = vpack.c.b16 %v1780, %v1776
  %v1841 = vpack.c.b16 %v1781, %v1777
  %v1842 = vpack.c.b16 %v1786, %v1782
  %v1843 = vpack.c.b16 %v1787, %v1783
  %v1844 = vpack.c.b16 %v1788, %v1784
  %v1845 = vpack.c.b16 %v1789, %v1785
  %v1846 = vpack.c.b16 %v1794, %v1790
  %v1847 = vpack.c.b16 %v1795, %v1791
  %v1848 = vpack.c.b16 %v1796, %v1792
  %v1849 = vpack.c.b16 %v1797, %v1793
  %v1850 = vpack.c.b16 %v1802, %v1798
  %v1851 = vpack.c.b16 %v1803, %v1799
  %v1852 = vpack.c.b16 %v1804, %v1800
  %v1853 = vpack.c.b16 %v1805, %v1801
  %v1854 = vpack.c.b16 %v1810, %v1806
  %v1855 = vpack.c.b16 %v1811, %v1807
  %v1856 = vpack.c.b16 %v1812, %v1808
  %v1857 = vpack.c.b16 %v1813, %v1809
  %v1858 = vpack.c.b16 %v1818, %v1814
  %v1859 = vpack.c.b16 %v1819, %v1815
  %v1860 = vpack.c.b16 %v1820, %v1816
  %v1861 = vpack.c.b16 %v1821, %v1817
  %v1862 = vpack.c.b16 %v1826, %v1822
  %v1863 = vpack.c.b16 %v1827, %v1823
  %v1864 = vpack.c.b16 %v1828, %v1824
  %v1865 = vpack.c.b16 %v1829, %v1825
  %v1866 = vpack.c.b16 %v1834, %v1830
  %v1867 = vpack.c.b16 %v1835, %v1831
  %v1868 = vpack.c.b16 %v1836, %v1832
  %v1869 = vpack.c.b16 %v1837, %v1833
  %1902 = vmatprep.subr.bf16.mxu0 %v1867
  %1903 = vmatpush1.bf16.msra.mxu0 %v1866
  %1904 = vmatprep.subr.bf16.mxu0 %v1863
  %1905 = vmatpush1.bf16.msra.mxu0 %v1862
  %1906 = vmatprep.subr.bf16.mxu0 %v1859
  %1907 = vmatpush1.bf16.msra.mxu0 %v1858
  %1908 = vmatprep.subr.bf16.mxu0 %v1855
  %1909 = vmatpush1.bf16.msra.mxu0 %v1854
  %1910 = vmatprep.subr.bf16.mxu0 %v1851
  %1911 = vmatpush1.bf16.msra.mxu0 %v1850
  %1912 = vmatprep.subr.bf16.mxu0 %v1847
  %1913 = vmatpush1.bf16.msra.mxu0 %v1846
  %1914 = vmatprep.subr.bf16.mxu0 %v1843
  %1915 = vmatpush1.bf16.msra.mxu0 %v1842
  %1916 = vmatprep.subr.bf16.mxu0 %v1839
  %1917 = vmatpush1.bf16.msra.mxu0 %v1838
  %1918 = vmatprep.subr.bf16.mxu0 0
  %1919 = vmatpush2.bf16.msra.mxu0 0
  %1920 = vmatprep.subr.bf16.mxu0 0
  %1921 = vmatpush2.bf16.msra.mxu0 0
  %1922 = vmatprep.subr.bf16.mxu0 0
  %1923 = vmatpush2.bf16.msra.mxu0 0
  %1924 = vmatprep.subr.bf16.mxu0 0
  %1925 = vmatpush2.bf16.msra.mxu0 0
  %1926 = vmatprep.subr.bf16.mxu0 0
  %1927 = vmatpush2.bf16.msra.mxu0 0
  %1928 = vmatprep.subr.bf16.mxu0 0
  %1929 = vmatpush2.bf16.msra.mxu0 0
  %1930 = vmatprep.subr.bf16.mxu0 0
  %1931 = vmatpush2.bf16.msra.mxu0 0
  %1932 = vmatprep.subr.bf16.mxu0 0
  %1933 = vmatpush2.bf16.msra.mxu0 0
  %1934 = vmatprep.mubr.bf16.mxu0 0
  %1935 = vmatmul.mubr.bf16.gmra.mxu0 %v1709
  %v1936 = vpop.f32.mrf.mxu0
  %v1937 = vadd.f32 0.0, %v1936
  %v1938 = vpop.f32.mrf.mxu0
  %v1939 = vadd.f32 0.0, %v1938
  %v1940 = vpop.f32.mrf.mxu0
  %v1941 = vpop.f32.mrf.mxu0
  %1942 = vdwg.mxu0
  %1943 = vmatprep.subr.bf16.mxu0 %v1869
  %1944 = vmatpush1.bf16.msra.mxu0 %v1868
  %1945 = vmatprep.subr.bf16.mxu0 %v1865
  %1946 = vmatpush1.bf16.msra.mxu0 %v1864
  %1947 = vmatprep.subr.bf16.mxu0 %v1861
  %1948 = vmatpush1.bf16.msra.mxu0 %v1860
  %1949 = vmatprep.subr.bf16.mxu0 %v1857
  %1950 = vmatpush1.bf16.msra.mxu0 %v1856
  %1951 = vmatprep.subr.bf16.mxu0 %v1853
  %1952 = vmatpush1.bf16.msra.mxu0 %v1852
  %1953 = vmatprep.subr.bf16.mxu0 %v1849
  %1954 = vmatpush1.bf16.msra.mxu0 %v1848
  %1955 = vmatprep.subr.bf16.mxu0 %v1845
  %1956 = vmatpush1.bf16.msra.mxu0 %v1844
  %1957 = vmatprep.subr.bf16.mxu0 %v1841
  %1958 = vmatpush1.bf16.msra.mxu0 %v1840
  %1959 = vmatprep.subr.bf16.mxu0 0
  %1960 = vmatpush2.bf16.msra.mxu0 0
  %1961 = vmatprep.subr.bf16.mxu0 0
  %1962 = vmatpush2.bf16.msra.mxu0 0
  %1963 = vmatprep.subr.bf16.mxu0 0
  %1964 = vmatpush2.bf16.msra.mxu0 0
  %1965 = vmatprep.subr.bf16.mxu0 0
  %1966 = vmatpush2.bf16.msra.mxu0 0
  %1967 = vmatprep.subr.bf16.mxu0 0
  %1968 = vmatpush2.bf16.msra.mxu0 0
  %1969 = vmatprep.subr.bf16.mxu0 0
  %1970 = vmatpush2.bf16.msra.mxu0 0
  %1971 = vmatprep.subr.bf16.mxu0 0
  %1972 = vmatpush2.bf16.msra.mxu0 0
  %1973 = vmatprep.subr.bf16.mxu0 0
  %1974 = vmatpush2.bf16.msra.mxu0 0
  %1975 = vmatprep.mubr.bf16.mxu0 0
  %1976 = vmatmul.mubr.bf16.gmra.mxu0 %v1709
  %v1977 = vpop.f32.mrf.mxu0
  %v1978 = vadd.f32 0.0, %v1977
  %v1979 = vpop.f32.mrf.mxu0
  %v1980 = vadd.f32 0.0, %v1979
  %v1981 = vpop.f32.mrf.mxu0
  %v1982 = vpop.f32.mrf.mxu0
  %1983 = vdwg.mxu0
  %v1984 = vadd.f32 %v1705, %v1937
  %v1985 = vadd.f32 %v1706, %v1939
  %v1986 = vadd.f32 %v1707, %v1978
  %v1987 = vadd.f32 %v1708, %v1980
  %v1988 = vxor.u32 %v1984, 2147483648
  %v1989 = vmul.f32 %v1988, 1.442695
  %v1990 = vpow.pop %v1989
  %v1991 = vadd.f32 %v1990, 1.0
  %v1992 = vrcp.pop %v1991
  %v1993 = vmul.f32 1.0, %v1992
  %v1994 = vxor.u32 %v1985, 2147483648
  %v1995 = vmul.f32 %v1994, 1.442695
  %v1996 = vpow.pop %v1995
  %v1997 = vadd.f32 %v1996, 1.0
  %v1998 = vrcp.pop %v1997
  %v1999 = vmul.f32 1.0, %v1998
  %v2000 = vtanh.pop %v1986
  %v2001 = vxor.u32 %v1987, 2147483648
  %v2002 = vmul.f32 %v2001, 1.442695
  %v2003 = vpow.pop %v2002
  %v2004 = vadd.f32 %v2003, 1.0
  %v2005 = vrcp.pop %v2004
  %v2006 = vmul.f32 1.0, %v2005
  %v2007 = vmul.f32 %v1999, %v1697
  %v2008 = vmul.f32 %v1993, %v2000
  %v2009 = vadd.f32 %v2007, %v2008
  %v2010 = vtanh.pop %v2009
  %v2011 = vmul.f32 %v2006, %v2010
  %s2012 = scalar_lea.vmem %s4, 32
  %2013 = vst [vmem:[%s2012] sm:$0xff] %v2011
  %s2014 = smul.u32 5, 4
  %s2015 = smul.addr %s2014, 8
  %s2016 = scalar_lea.vmem [#allocation4], %s2015
  %v2017 = vld [vmem:[%s2016] sm:$0xff]
  %v2018 = vld [vmem:[%s2016 + $0x8] sm:$0xff]
  %v2019 = vld [vmem:[%s2016 + $0x10] sm:$0xff]
  %v2020 = vld [vmem:[%s2016 + $0x18] sm:$0xff]
  %v2021 = vpack.c.bf16 %v2011, %v2011
  %v2022 = vld [vmem:[#allocation3] sm:$0xff]
  %v2023 = vld [vmem:[#allocation3 + $0x8] sm:$0xff]
  %v2024 = vld [vmem:[#allocation3 + $0x10] sm:$0xff]
  %v2025 = vld [vmem:[#allocation3 + $0x18] sm:$0xff]
  %v2026 = vld [vmem:[#allocation3 + $0x20] sm:$0xff]
  %v2027 = vld [vmem:[#allocation3 + $0x28] sm:$0xff]
  %v2028 = vld [vmem:[#allocation3 + $0x30] sm:$0xff]
  %v2029 = vld [vmem:[#allocation3 + $0x38] sm:$0xff]
  %v2030 = vld [vmem:[#allocation3 + $0x40] sm:$0xff]
  %v2031 = vld [vmem:[#allocation3 + $0x48] sm:$0xff]
  %v2032 = vld [vmem:[#allocation3 + $0x50] sm:$0xff]
  %v2033 = vld [vmem:[#allocation3 + $0x58] sm:$0xff]
  %v2034 = vld [vmem:[#allocation3 + $0x60] sm:$0xff]
  %v2035 = vld [vmem:[#allocation3 + $0x68] sm:$0xff]
  %v2036 = vld [vmem:[#allocation3 + $0x70] sm:$0xff]
  %v2037 = vld [vmem:[#allocation3 + $0x78] sm:$0xff]
  %v2038 = vld [vmem:[#allocation3 + $0x80] sm:$0xff]
  %v2039 = vld [vmem:[#allocation3 + $0x88] sm:$0xff]
  %v2040 = vld [vmem:[#allocation3 + $0x90] sm:$0xff]
  %v2041 = vld [vmem:[#allocation3 + $0x98] sm:$0xff]
  %v2042 = vld [vmem:[#allocation3 + $0xa0] sm:$0xff]
  %v2043 = vld [vmem:[#allocation3 + $0xa8] sm:$0xff]
  %v2044 = vld [vmem:[#allocation3 + $0xb0] sm:$0xff]
  %v2045 = vld [vmem:[#allocation3 + $0xb8] sm:$0xff]
  %v2046 = vld [vmem:[#allocation3 + $0xc0] sm:$0xff]
  %v2047 = vld [vmem:[#allocation3 + $0xc8] sm:$0xff]
  %v2048 = vld [vmem:[#allocation3 + $0xd0] sm:$0xff]
  %v2049 = vld [vmem:[#allocation3 + $0xd8] sm:$0xff]
  %v2050 = vld [vmem:[#allocation3 + $0xe0] sm:$0xff]
  %v2051 = vld [vmem:[#allocation3 + $0xe8] sm:$0xff]
  %v2052 = vld [vmem:[#allocation3 + $0xf0] sm:$0xff]
  %v2053 = vld [vmem:[#allocation3 + $0xf8] sm:$0xff]
  %v2086 = vunpack.c.l.b16 %v2022
  %v2087 = vunpack.c.h.b16 %v2022
  %v2088 = vunpack.c.l.b16 %v2023
  %v2089 = vunpack.c.h.b16 %v2023
  %v2090 = vunpack.c.l.b16 %v2024
  %v2091 = vunpack.c.h.b16 %v2024
  %v2092 = vunpack.c.l.b16 %v2025
  %v2093 = vunpack.c.h.b16 %v2025
  %v2094 = vunpack.c.l.b16 %v2026
  %v2095 = vunpack.c.h.b16 %v2026
  %v2096 = vunpack.c.l.b16 %v2027
  %v2097 = vunpack.c.h.b16 %v2027
  %v2098 = vunpack.c.l.b16 %v2028
  %v2099 = vunpack.c.h.b16 %v2028
  %v2100 = vunpack.c.l.b16 %v2029
  %v2101 = vunpack.c.h.b16 %v2029
  %v2102 = vunpack.c.l.b16 %v2030
  %v2103 = vunpack.c.h.b16 %v2030
  %v2104 = vunpack.c.l.b16 %v2031
  %v2105 = vunpack.c.h.b16 %v2031
  %v2106 = vunpack.c.l.b16 %v2032
  %v2107 = vunpack.c.h.b16 %v2032
  %v2108 = vunpack.c.l.b16 %v2033
  %v2109 = vunpack.c.h.b16 %v2033
  %v2110 = vunpack.c.l.b16 %v2034
  %v2111 = vunpack.c.h.b16 %v2034
  %v2112 = vunpack.c.l.b16 %v2035
  %v2113 = vunpack.c.h.b16 %v2035
  %v2114 = vunpack.c.l.b16 %v2036
  %v2115 = vunpack.c.h.b16 %v2036
  %v2116 = vunpack.c.l.b16 %v2037
  %v2117 = vunpack.c.h.b16 %v2037
  %v2118 = vunpack.c.l.b16 %v2038
  %v2119 = vunpack.c.h.b16 %v2038
  %v2120 = vunpack.c.l.b16 %v2039
  %v2121 = vunpack.c.h.b16 %v2039
  %v2122 = vunpack.c.l.b16 %v2040
  %v2123 = vunpack.c.h.b16 %v2040
  %v2124 = vunpack.c.l.b16 %v2041
  %v2125 = vunpack.c.h.b16 %v2041
  %v2126 = vunpack.c.l.b16 %v2042
  %v2127 = vunpack.c.h.b16 %v2042
  %v2128 = vunpack.c.l.b16 %v2043
  %v2129 = vunpack.c.h.b16 %v2043
  %v2130 = vunpack.c.l.b16 %v2044
  %v2131 = vunpack.c.h.b16 %v2044
  %v2132 = vunpack.c.l.b16 %v2045
  %v2133 = vunpack.c.h.b16 %v2045
  %v2134 = vunpack.c.l.b16 %v2046
  %v2135 = vunpack.c.h.b16 %v2046
  %v2136 = vunpack.c.l.b16 %v2047
  %v2137 = vunpack.c.h.b16 %v2047
  %v2138 = vunpack.c.l.b16 %v2048
  %v2139 = vunpack.c.h.b16 %v2048
  %v2140 = vunpack.c.l.b16 %v2049
  %v2141 = vunpack.c.h.b16 %v2049
  %v2142 = vunpack.c.l.b16 %v2050
  %v2143 = vunpack.c.h.b16 %v2050
  %v2144 = vunpack.c.l.b16 %v2051
  %v2145 = vunpack.c.h.b16 %v2051
  %v2146 = vunpack.c.l.b16 %v2052
  %v2147 = vunpack.c.h.b16 %v2052
  %v2148 = vunpack.c.l.b16 %v2053
  %v2149 = vunpack.c.h.b16 %v2053
  %v2150 = vpack.c.b16 %v2090, %v2086
  %v2151 = vpack.c.b16 %v2091, %v2087
  %v2152 = vpack.c.b16 %v2092, %v2088
  %v2153 = vpack.c.b16 %v2093, %v2089
  %v2154 = vpack.c.b16 %v2098, %v2094
  %v2155 = vpack.c.b16 %v2099, %v2095
  %v2156 = vpack.c.b16 %v2100, %v2096
  %v2157 = vpack.c.b16 %v2101, %v2097
  %v2158 = vpack.c.b16 %v2106, %v2102
  %v2159 = vpack.c.b16 %v2107, %v2103
  %v2160 = vpack.c.b16 %v2108, %v2104
  %v2161 = vpack.c.b16 %v2109, %v2105
  %v2162 = vpack.c.b16 %v2114, %v2110
  %v2163 = vpack.c.b16 %v2115, %v2111
  %v2164 = vpack.c.b16 %v2116, %v2112
  %v2165 = vpack.c.b16 %v2117, %v2113
  %v2166 = vpack.c.b16 %v2122, %v2118
  %v2167 = vpack.c.b16 %v2123, %v2119
  %v2168 = vpack.c.b16 %v2124, %v2120
  %v2169 = vpack.c.b16 %v2125, %v2121
  %v2170 = vpack.c.b16 %v2130, %v2126
  %v2171 = vpack.c.b16 %v2131, %v2127
  %v2172 = vpack.c.b16 %v2132, %v2128
  %v2173 = vpack.c.b16 %v2133, %v2129
  %v2174 = vpack.c.b16 %v2138, %v2134
  %v2175 = vpack.c.b16 %v2139, %v2135
  %v2176 = vpack.c.b16 %v2140, %v2136
  %v2177 = vpack.c.b16 %v2141, %v2137
  %v2178 = vpack.c.b16 %v2146, %v2142
  %v2179 = vpack.c.b16 %v2147, %v2143
  %v2180 = vpack.c.b16 %v2148, %v2144
  %v2181 = vpack.c.b16 %v2149, %v2145
  %2214 = vmatprep.subr.bf16.mxu0 %v2179
  %2215 = vmatpush1.bf16.msra.mxu0 %v2178
  %2216 = vmatprep.subr.bf16.mxu0 %v2175
  %2217 = vmatpush1.bf16.msra.mxu0 %v2174
  %2218 = vmatprep.subr.bf16.mxu0 %v2171
  %2219 = vmatpush1.bf16.msra.mxu0 %v2170
  %2220 = vmatprep.subr.bf16.mxu0 %v2167
  %2221 = vmatpush1.bf16.msra.mxu0 %v2166
  %2222 = vmatprep.subr.bf16.mxu0 %v2163
  %2223 = vmatpush1.bf16.msra.mxu0 %v2162
  %2224 = vmatprep.subr.bf16.mxu0 %v2159
  %2225 = vmatpush1.bf16.msra.mxu0 %v2158
  %2226 = vmatprep.subr.bf16.mxu0 %v2155
  %2227 = vmatpush1.bf16.msra.mxu0 %v2154
  %2228 = vmatprep.subr.bf16.mxu0 %v2151
  %2229 = vmatpush1.bf16.msra.mxu0 %v2150
  %2230 = vmatprep.subr.bf16.mxu0 0
  %2231 = vmatpush2.bf16.msra.mxu0 0
  %2232 = vmatprep.subr.bf16.mxu0 0
  %2233 = vmatpush2.bf16.msra.mxu0 0
  %2234 = vmatprep.subr.bf16.mxu0 0
  %2235 = vmatpush2.bf16.msra.mxu0 0
  %2236 = vmatprep.subr.bf16.mxu0 0
  %2237 = vmatpush2.bf16.msra.mxu0 0
  %2238 = vmatprep.subr.bf16.mxu0 0
  %2239 = vmatpush2.bf16.msra.mxu0 0
  %2240 = vmatprep.subr.bf16.mxu0 0
  %2241 = vmatpush2.bf16.msra.mxu0 0
  %2242 = vmatprep.subr.bf16.mxu0 0
  %2243 = vmatpush2.bf16.msra.mxu0 0
  %2244 = vmatprep.subr.bf16.mxu0 0
  %2245 = vmatpush2.bf16.msra.mxu0 0
  %2246 = vmatprep.mubr.bf16.mxu0 0
  %2247 = vmatmul.mubr.bf16.gmra.mxu0 %v2021
  %v2248 = vpop.f32.mrf.mxu0
  %v2249 = vadd.f32 0.0, %v2248
  %v2250 = vpop.f32.mrf.mxu0
  %v2251 = vadd.f32 0.0, %v2250
  %v2252 = vpop.f32.mrf.mxu0
  %v2253 = vpop.f32.mrf.mxu0
  %2254 = vdwg.mxu0
  %2255 = vmatprep.subr.bf16.mxu0 %v2181
  %2256 = vmatpush1.bf16.msra.mxu0 %v2180
  %2257 = vmatprep.subr.bf16.mxu0 %v2177
  %2258 = vmatpush1.bf16.msra.mxu0 %v2176
  %2259 = vmatprep.subr.bf16.mxu0 %v2173
  %2260 = vmatpush1.bf16.msra.mxu0 %v2172
  %2261 = vmatprep.subr.bf16.mxu0 %v2169
  %2262 = vmatpush1.bf16.msra.mxu0 %v2168
  %2263 = vmatprep.subr.bf16.mxu0 %v2165
  %2264 = vmatpush1.bf16.msra.mxu0 %v2164
  %2265 = vmatprep.subr.bf16.mxu0 %v2161
  %2266 = vmatpush1.bf16.msra.mxu0 %v2160
  %2267 = vmatprep.subr.bf16.mxu0 %v2157
  %2268 = vmatpush1.bf16.msra.mxu0 %v2156
  %2269 = vmatprep.subr.bf16.mxu0 %v2153
  %2270 = vmatpush1.bf16.msra.mxu0 %v2152
  %2271 = vmatprep.subr.bf16.mxu0 0
  %2272 = vmatpush2.bf16.msra.mxu0 0
  %2273 = vmatprep.subr.bf16.mxu0 0
  %2274 = vmatpush2.bf16.msra.mxu0 0
  %2275 = vmatprep.subr.bf16.mxu0 0
  %2276 = vmatpush2.bf16.msra.mxu0 0
  %2277 = vmatprep.subr.bf16.mxu0 0
  %2278 = vmatpush2.bf16.msra.mxu0 0
  %2279 = vmatprep.subr.bf16.mxu0 0
  %2280 = vmatpush2.bf16.msra.mxu0 0
  %2281 = vmatprep.subr.bf16.mxu0 0
  %2282 = vmatpush2.bf16.msra.mxu0 0
  %2283 = vmatprep.subr.bf16.mxu0 0
  %2284 = vmatpush2.bf16.msra.mxu0 0
  %2285 = vmatprep.subr.bf16.mxu0 0
  %2286 = vmatpush2.bf16.msra.mxu0 0
  %2287 = vmatprep.mubr.bf16.mxu0 0
  %2288 = vmatmul.mubr.bf16.gmra.mxu0 %v2021
  %v2289 = vpop.f32.mrf.mxu0
  %v2290 = vadd.f32 0.0, %v2289
  %v2291 = vpop.f32.mrf.mxu0
  %v2292 = vadd.f32 0.0, %v2291
  %v2293 = vpop.f32.mrf.mxu0
  %v2294 = vpop.f32.mrf.mxu0
  %2295 = vdwg.mxu0
  %v2296 = vadd.f32 %v2017, %v2249
  %v2297 = vadd.f32 %v2018, %v2251
  %v2298 = vadd.f32 %v2019, %v2290
  %v2299 = vadd.f32 %v2020, %v2292
  %v2300 = vxor.u32 %v2296, 2147483648
  %v2301 = vmul.f32 %v2300, 1.442695
  %v2302 = vpow.pop %v2301
  %v2303 = vadd.f32 %v2302, 1.0
  %v2304 = vrcp.pop %v2303
  %v2305 = vmul.f32 1.0, %v2304
  %v2306 = vxor.u32 %v2297, 2147483648
  %v2307 = vmul.f32 %v2306, 1.442695
  %v2308 = vpow.pop %v2307
  %v2309 = vadd.f32 %v2308, 1.0
  %v2310 = vrcp.pop %v2309
  %v2311 = vmul.f32 1.0, %v2310
  %v2312 = vtanh.pop %v2298
  %v2313 = vxor.u32 %v2299, 2147483648
  %v2314 = vmul.f32 %v2313, 1.442695
  %v2315 = vpow.pop %v2314
  %v2316 = vadd.f32 %v2315, 1.0
  %v2317 = vrcp.pop %v2316
  %v2318 = vmul.f32 1.0, %v2317
  %v2319 = vmul.f32 %v2311, %v2009
  %v2320 = vmul.f32 %v2305, %v2312
  %v2321 = vadd.f32 %v2319, %v2320
  %v2322 = vtanh.pop %v2321
  %v2323 = vmul.f32 %v2318, %v2322
  %s2324 = scalar_lea.vmem %s4, 40
  %2325 = vst [vmem:[%s2324] sm:$0xff] %v2323
  %s2326 = smul.u32 6, 4
  %s2327 = smul.addr %s2326, 8
  %s2328 = scalar_lea.vmem [#allocation4], %s2327
  %v2329 = vld [vmem:[%s2328] sm:$0xff]
  %v2330 = vld [vmem:[%s2328 + $0x8] sm:$0xff]
  %v2331 = vld [vmem:[%s2328 + $0x10] sm:$0xff]
  %v2332 = vld [vmem:[%s2328 + $0x18] sm:$0xff]
  %v2333 = vpack.c.bf16 %v2323, %v2323
  %v2334 = vld [vmem:[#allocation3] sm:$0xff]
  %v2335 = vld [vmem:[#allocation3 + $0x8] sm:$0xff]
  %v2336 = vld [vmem:[#allocation3 + $0x10] sm:$0xff]
  %v2337 = vld [vmem:[#allocation3 + $0x18] sm:$0xff]
  %v2338 = vld [vmem:[#allocation3 + $0x20] sm:$0xff]
  %v2339 = vld [vmem:[#allocation3 + $0x28] sm:$0xff]
  %v2340 = vld [vmem:[#allocation3 + $0x30] sm:$0xff]
  %v2341 = vld [vmem:[#allocation3 + $0x38] sm:$0xff]
  %v2342 = vld [vmem:[#allocation3 + $0x40] sm:$0xff]
  %v2343 = vld [vmem:[#allocation3 + $0x48] sm:$0xff]
  %v2344 = vld [vmem:[#allocation3 + $0x50] sm:$0xff]
  %v2345 = vld [vmem:[#allocation3 + $0x58] sm:$0xff]
  %v2346 = vld [vmem:[#allocation3 + $0x60] sm:$0xff]
  %v2347 = vld [vmem:[#allocation3 + $0x68] sm:$0xff]
  %v2348 = vld [vmem:[#allocation3 + $0x70] sm:$0xff]
  %v2349 = vld [vmem:[#allocation3 + $0x78] sm:$0xff]
  %v2350 = vld [vmem:[#allocation3 + $0x80] sm:$0xff]
  %v2351 = vld [vmem:[#allocation3 + $0x88] sm:$0xff]
  %v2352 = vld [vmem:[#allocation3 + $0x90] sm:$0xff]
  %v2353 = vld [vmem:[#allocation3 + $0x98] sm:$0xff]
  %v2354 = vld [vmem:[#allocation3 + $0xa0] sm:$0xff]
  %v2355 = vld [vmem:[#allocation3 + $0xa8] sm:$0xff]
  %v2356 = vld [vmem:[#allocation3 + $0xb0] sm:$0xff]
  %v2357 = vld [vmem:[#allocation3 + $0xb8] sm:$0xff]
  %v2358 = vld [vmem:[#allocation3 + $0xc0] sm:$0xff]
  %v2359 = vld [vmem:[#allocation3 + $0xc8] sm:$0xff]
  %v2360 = vld [vmem:[#allocation3 + $0xd0] sm:$0xff]
  %v2361 = vld [vmem:[#allocation3 + $0xd8] sm:$0xff]
  %v2362 = vld [vmem:[#allocation3 + $0xe0] sm:$0xff]
  %v2363 = vld [vmem:[#allocation3 + $0xe8] sm:$0xff]
  %v2364 = vld [vmem:[#allocation3 + $0xf0] sm:$0xff]
  %v2365 = vld [vmem:[#allocation3 + $0xf8] sm:$0xff]
  %v2398 = vunpack.c.l.b16 %v2334
  %v2399 = vunpack.c.h.b16 %v2334
  %v2400 = vunpack.c.l.b16 %v2335
  %v2401 = vunpack.c.h.b16 %v2335
  %v2402 = vunpack.c.l.b16 %v2336
  %v2403 = vunpack.c.h.b16 %v2336
  %v2404 = vunpack.c.l.b16 %v2337
  %v2405 = vunpack.c.h.b16 %v2337
  %v2406 = vunpack.c.l.b16 %v2338
  %v2407 = vunpack.c.h.b16 %v2338
  %v2408 = vunpack.c.l.b16 %v2339
  %v2409 = vunpack.c.h.b16 %v2339
  %v2410 = vunpack.c.l.b16 %v2340
  %v2411 = vunpack.c.h.b16 %v2340
  %v2412 = vunpack.c.l.b16 %v2341
  %v2413 = vunpack.c.h.b16 %v2341
  %v2414 = vunpack.c.l.b16 %v2342
  %v2415 = vunpack.c.h.b16 %v2342
  %v2416 = vunpack.c.l.b16 %v2343
  %v2417 = vunpack.c.h.b16 %v2343
  %v2418 = vunpack.c.l.b16 %v2344
  %v2419 = vunpack.c.h.b16 %v2344
  %v2420 = vunpack.c.l.b16 %v2345
  %v2421 = vunpack.c.h.b16 %v2345
  %v2422 = vunpack.c.l.b16 %v2346
  %v2423 = vunpack.c.h.b16 %v2346
  %v2424 = vunpack.c.l.b16 %v2347
  %v2425 = vunpack.c.h.b16 %v2347
  %v2426 = vunpack.c.l.b16 %v2348
  %v2427 = vunpack.c.h.b16 %v2348
  %v2428 = vunpack.c.l.b16 %v2349
  %v2429 = vunpack.c.h.b16 %v2349
  %v2430 = vunpack.c.l.b16 %v2350
  %v2431 = vunpack.c.h.b16 %v2350
  %v2432 = vunpack.c.l.b16 %v2351
  %v2433 = vunpack.c.h.b16 %v2351
  %v2434 = vunpack.c.l.b16 %v2352
  %v2435 = vunpack.c.h.b16 %v2352
  %v2436 = vunpack.c.l.b16 %v2353
  %v2437 = vunpack.c.h.b16 %v2353
  %v2438 = vunpack.c.l.b16 %v2354
  %v2439 = vunpack.c.h.b16 %v2354
  %v2440 = vunpack.c.l.b16 %v2355
  %v2441 = vunpack.c.h.b16 %v2355
  %v2442 = vunpack.c.l.b16 %v2356
  %v2443 = vunpack.c.h.b16 %v2356
  %v2444 = vunpack.c.l.b16 %v2357
  %v2445 = vunpack.c.h.b16 %v2357
  %v2446 = vunpack.c.l.b16 %v2358
  %v2447 = vunpack.c.h.b16 %v2358
  %v2448 = vunpack.c.l.b16 %v2359
  %v2449 = vunpack.c.h.b16 %v2359
  %v2450 = vunpack.c.l.b16 %v2360
  %v2451 = vunpack.c.h.b16 %v2360
  %v2452 = vunpack.c.l.b16 %v2361
  %v2453 = vunpack.c.h.b16 %v2361
  %v2454 = vunpack.c.l.b16 %v2362
  %v2455 = vunpack.c.h.b16 %v2362
  %v2456 = vunpack.c.l.b16 %v2363
  %v2457 = vunpack.c.h.b16 %v2363
  %v2458 = vunpack.c.l.b16 %v2364
  %v2459 = vunpack.c.h.b16 %v2364
  %v2460 = vunpack.c.l.b16 %v2365
  %v2461 = vunpack.c.h.b16 %v2365
  %v2462 = vpack.c.b16 %v2402, %v2398
  %v2463 = vpack.c.b16 %v2403, %v2399
  %v2464 = vpack.c.b16 %v2404, %v2400
  %v2465 = vpack.c.b16 %v2405, %v2401
  %v2466 = vpack.c.b16 %v2410, %v2406
  %v2467 = vpack.c.b16 %v2411, %v2407
  %v2468 = vpack.c.b16 %v2412, %v2408
  %v2469 = vpack.c.b16 %v2413, %v2409
  %v2470 = vpack.c.b16 %v2418, %v2414
  %v2471 = vpack.c.b16 %v2419, %v2415
  %v2472 = vpack.c.b16 %v2420, %v2416
  %v2473 = vpack.c.b16 %v2421, %v2417
  %v2474 = vpack.c.b16 %v2426, %v2422
  %v2475 = vpack.c.b16 %v2427, %v2423
  %v2476 = vpack.c.b16 %v2428, %v2424
  %v2477 = vpack.c.b16 %v2429, %v2425
  %v2478 = vpack.c.b16 %v2434, %v2430
  %v2479 = vpack.c.b16 %v2435, %v2431
  %v2480 = vpack.c.b16 %v2436, %v2432
  %v2481 = vpack.c.b16 %v2437, %v2433
  %v2482 = vpack.c.b16 %v2442, %v2438
  %v2483 = vpack.c.b16 %v2443, %v2439
  %v2484 = vpack.c.b16 %v2444, %v2440
  %v2485 = vpack.c.b16 %v2445, %v2441
  %v2486 = vpack.c.b16 %v2450, %v2446
  %v2487 = vpack.c.b16 %v2451, %v2447
  %v2488 = vpack.c.b16 %v2452, %v2448
  %v2489 = vpack.c.b16 %v2453, %v2449
  %v2490 = vpack.c.b16 %v2458, %v2454
  %v2491 = vpack.c.b16 %v2459, %v2455
  %v2492 = vpack.c.b16 %v2460, %v2456
  %v2493 = vpack.c.b16 %v2461, %v2457
  %2526 = vmatprep.subr.bf16.mxu0 %v2491
  %2527 = vmatpush1.bf16.msra.mxu0 %v2490
  %2528 = vmatprep.subr.bf16.mxu0 %v2487
  %2529 = vmatpush1.bf16.msra.mxu0 %v2486
  %2530 = vmatprep.subr.bf16.mxu0 %v2483
  %2531 = vmatpush1.bf16.msra.mxu0 %v2482
  %2532 = vmatprep.subr.bf16.mxu0 %v2479
  %2533 = vmatpush1.bf16.msra.mxu0 %v2478
  %2534 = vmatprep.subr.bf16.mxu0 %v2475
  %2535 = vmatpush1.bf16.msra.mxu0 %v2474
  %2536 = vmatprep.subr.bf16.mxu0 %v2471
  %2537 = vmatpush1.bf16.msra.mxu0 %v2470
  %2538 = vmatprep.subr.bf16.mxu0 %v2467
  %2539 = vmatpush1.bf16.msra.mxu0 %v2466
  %2540 = vmatprep.subr.bf16.mxu0 %v2463
  %2541 = vmatpush1.bf16.msra.mxu0 %v2462
  %2542 = vmatprep.subr.bf16.mxu0 0
  %2543 = vmatpush2.bf16.msra.mxu0 0
  %2544 = vmatprep.subr.bf16.mxu0 0
  %2545 = vmatpush2.bf16.msra.mxu0 0
  %2546 = vmatprep.subr.bf16.mxu0 0
  %2547 = vmatpush2.bf16.msra.mxu0 0
  %2548 = vmatprep.subr.bf16.mxu0 0
  %2549 = vmatpush2.bf16.msra.mxu0 0
  %2550 = vmatprep.subr.bf16.mxu0 0
  %2551 = vmatpush2.bf16.msra.mxu0 0
  %2552 = vmatprep.subr.bf16.mxu0 0
  %2553 = vmatpush2.bf16.msra.mxu0 0
  %2554 = vmatprep.subr.bf16.mxu0 0
  %2555 = vmatpush2.bf16.msra.mxu0 0
  %2556 = vmatprep.subr.bf16.mxu0 0
  %2557 = vmatpush2.bf16.msra.mxu0 0
  %2558 = vmatprep.mubr.bf16.mxu0 0
  %2559 = vmatmul.mubr.bf16.gmra.mxu0 %v2333
  %v2560 = vpop.f32.mrf.mxu0
  %v2561 = vadd.f32 0.0, %v2560
  %v2562 = vpop.f32.mrf.mxu0
  %v2563 = vadd.f32 0.0, %v2562
  %v2564 = vpop.f32.mrf.mxu0
  %v2565 = vpop.f32.mrf.mxu0
  %2566 = vdwg.mxu0
  %2567 = vmatprep.subr.bf16.mxu0 %v2493
  %2568 = vmatpush1.bf16.msra.mxu0 %v2492
  %2569 = vmatprep.subr.bf16.mxu0 %v2489
  %2570 = vmatpush1.bf16.msra.mxu0 %v2488
  %2571 = vmatprep.subr.bf16.mxu0 %v2485
  %2572 = vmatpush1.bf16.msra.mxu0 %v2484
  %2573 = vmatprep.subr.bf16.mxu0 %v2481
  %2574 = vmatpush1.bf16.msra.mxu0 %v2480
  %2575 = vmatprep.subr.bf16.mxu0 %v2477
  %2576 = vmatpush1.bf16.msra.mxu0 %v2476
  %2577 = vmatprep.subr.bf16.mxu0 %v2473
  %2578 = vmatpush1.bf16.msra.mxu0 %v2472
  %2579 = vmatprep.subr.bf16.mxu0 %v2469
  %2580 = vmatpush1.bf16.msra.mxu0 %v2468
  %2581 = vmatprep.subr.bf16.mxu0 %v2465
  %2582 = vmatpush1.bf16.msra.mxu0 %v2464
  %2583 = vmatprep.subr.bf16.mxu0 0
  %2584 = vmatpush2.bf16.msra.mxu0 0
  %2585 = vmatprep.subr.bf16.mxu0 0
  %2586 = vmatpush2.bf16.msra.mxu0 0
  %2587 = vmatprep.subr.bf16.mxu0 0
  %2588 = vmatpush2.bf16.msra.mxu0 0
  %2589 = vmatprep.subr.bf16.mxu0 0
  %2590 = vmatpush2.bf16.msra.mxu0 0
  %2591 = vmatprep.subr.bf16.mxu0 0
  %2592 = vmatpush2.bf16.msra.mxu0 0
  %2593 = vmatprep.subr.bf16.mxu0 0
  %2594 = vmatpush2.bf16.msra.mxu0 0
  %2595 = vmatprep.subr.bf16.mxu0 0
  %2596 = vmatpush2.bf16.msra.mxu0 0
  %2597 = vmatprep.subr.bf16.mxu0 0
  %2598 = vmatpush2.bf16.msra.mxu0 0
  %2599 = vmatprep.mubr.bf16.mxu0 0
  %2600 = vmatmul.mubr.bf16.gmra.mxu0 %v2333
  %v2601 = vpop.f32.mrf.mxu0
  %v2602 = vadd.f32 0.0, %v2601
  %v2603 = vpop.f32.mrf.mxu0
  %v2604 = vadd.f32 0.0, %v2603
  %v2605 = vpop.f32.mrf.mxu0
  %v2606 = vpop.f32.mrf.mxu0
  %2607 = vdwg.mxu0
  %v2608 = vadd.f32 %v2329, %v2561
  %v2609 = vadd.f32 %v2330, %v2563
  %v2610 = vadd.f32 %v2331, %v2602
  %v2611 = vadd.f32 %v2332, %v2604
  %v2612 = vxor.u32 %v2608, 2147483648
  %v2613 = vmul.f32 %v2612, 1.442695
  %v2614 = vpow.pop %v2613
  %v2615 = vadd.f32 %v2614, 1.0
  %v2616 = vrcp.pop %v2615
  %v2617 = vmul.f32 1.0, %v2616
  %v2618 = vxor.u32 %v2609, 2147483648
  %v2619 = vmul.f32 %v2618, 1.442695
  %v2620 = vpow.pop %v2619
  %v2621 = vadd.f32 %v2620, 1.0
  %v2622 = vrcp.pop %v2621
  %v2623 = vmul.f32 1.0, %v2622
  %v2624 = vtanh.pop %v2610
  %v2625 = vxor.u32 %v2611, 2147483648
  %v2626 = vmul.f32 %v2625, 1.442695
  %v2627 = vpow.pop %v2626
  %v2628 = vadd.f32 %v2627, 1.0
  %v2629 = vrcp.pop %v2628
  %v2630 = vmul.f32 1.0, %v2629
  %v2631 = vmul.f32 %v2623, %v2321
  %v2632 = vmul.f32 %v2617, %v2624
  %v2633 = vadd.f32 %v2631, %v2632
  %v2634 = vtanh.pop %v2633
  %v2635 = vmul.f32 %v2630, %v2634
  %s2636 = scalar_lea.vmem %s4, 48
  %2637 = vst [vmem:[%s2636] sm:$0xff] %v2635
  %s2638 = smul.u32 7, 4
  %s2639 = smul.addr %s2638, 8
  %s2640 = scalar_lea.vmem [#allocation4], %s2639
  %v2641 = vld [vmem:[%s2640] sm:$0xff]
  %v2642 = vld [vmem:[%s2640 + $0x8] sm:$0xff]
  %v2643 = vld [vmem:[%s2640 + $0x10] sm:$0xff]
  %v2644 = vld [vmem:[%s2640 + $0x18] sm:$0xff]
  %v2645 = vpack.c.bf16 %v2635, %v2635
  %v2646 = vld [vmem:[#allocation3] sm:$0xff]
  %v2647 = vld [vmem:[#allocation3 + $0x8] sm:$0xff]
  %v2648 = vld [vmem:[#allocation3 + $0x10] sm:$0xff]
  %v2649 = vld [vmem:[#allocation3 + $0x18] sm:$0xff]
  %v2650 = vld [vmem:[#allocation3 + $0x20] sm:$0xff]
  %v2651 = vld [vmem:[#allocation3 + $0x28] sm:$0xff]
  %v2652 = vld [vmem:[#allocation3 + $0x30] sm:$0xff]
  %v2653 = vld [vmem:[#allocation3 + $0x38] sm:$0xff]
  %v2654 = vld [vmem:[#allocation3 + $0x40] sm:$0xff]
  %v2655 = vld [vmem:[#allocation3 + $0x48] sm:$0xff]
  %v2656 = vld [vmem:[#allocation3 + $0x50] sm:$0xff]
  %v2657 = vld [vmem:[#allocation3 + $0x58] sm:$0xff]
  %v2658 = vld [vmem:[#allocation3 + $0x60] sm:$0xff]
  %v2659 = vld [vmem:[#allocation3 + $0x68] sm:$0xff]
  %v2660 = vld [vmem:[#allocation3 + $0x70] sm:$0xff]
  %v2661 = vld [vmem:[#allocation3 + $0x78] sm:$0xff]
  %v2662 = vld [vmem:[#allocation3 + $0x80] sm:$0xff]
  %v2663 = vld [vmem:[#allocation3 + $0x88] sm:$0xff]
  %v2664 = vld [vmem:[#allocation3 + $0x90] sm:$0xff]
  %v2665 = vld [vmem:[#allocation3 + $0x98] sm:$0xff]
  %v2666 = vld [vmem:[#allocation3 + $0xa0] sm:$0xff]
  %v2667 = vld [vmem:[#allocation3 + $0xa8] sm:$0xff]
  %v2668 = vld [vmem:[#allocation3 + $0xb0] sm:$0xff]
  %v2669 = vld [vmem:[#allocation3 + $0xb8] sm:$0xff]
  %v2670 = vld [vmem:[#allocation3 + $0xc0] sm:$0xff]
  %v2671 = vld [vmem:[#allocation3 + $0xc8] sm:$0xff]
  %v2672 = vld [vmem:[#allocation3 + $0xd0] sm:$0xff]
  %v2673 = vld [vmem:[#allocation3 + $0xd8] sm:$0xff]
  %v2674 = vld [vmem:[#allocation3 + $0xe0] sm:$0xff]
  %v2675 = vld [vmem:[#allocation3 + $0xe8] sm:$0xff]
  %v2676 = vld [vmem:[#allocation3 + $0xf0] sm:$0xff]
  %v2677 = vld [vmem:[#allocation3 + $0xf8] sm:$0xff]
  %v2710 = vunpack.c.l.b16 %v2646
  %v2711 = vunpack.c.h.b16 %v2646
  %v2712 = vunpack.c.l.b16 %v2647
  %v2713 = vunpack.c.h.b16 %v2647
  %v2714 = vunpack.c.l.b16 %v2648
  %v2715 = vunpack.c.h.b16 %v2648
  %v2716 = vunpack.c.l.b16 %v2649
  %v2717 = vunpack.c.h.b16 %v2649
  %v2718 = vunpack.c.l.b16 %v2650
  %v2719 = vunpack.c.h.b16 %v2650
  %v2720 = vunpack.c.l.b16 %v2651
  %v2721 = vunpack.c.h.b16 %v2651
  %v2722 = vunpack.c.l.b16 %v2652
  %v2723 = vunpack.c.h.b16 %v2652
  %v2724 = vunpack.c.l.b16 %v2653
  %v2725 = vunpack.c.h.b16 %v2653
  %v2726 = vunpack.c.l.b16 %v2654
  %v2727 = vunpack.c.h.b16 %v2654
  %v2728 = vunpack.c.l.b16 %v2655
  %v2729 = vunpack.c.h.b16 %v2655
  %v2730 = vunpack.c.l.b16 %v2656
  %v2731 = vunpack.c.h.b16 %v2656
  %v2732 = vunpack.c.l.b16 %v2657
  %v2733 = vunpack.c.h.b16 %v2657
  %v2734 = vunpack.c.l.b16 %v2658
  %v2735 = vunpack.c.h.b16 %v2658
  %v2736 = vunpack.c.l.b16 %v2659
  %v2737 = vunpack.c.h.b16 %v2659
  %v2738 = vunpack.c.l.b16 %v2660
  %v2739 = vunpack.c.h.b16 %v2660
  %v2740 = vunpack.c.l.b16 %v2661
  %v2741 = vunpack.c.h.b16 %v2661
  %v2742 = vunpack.c.l.b16 %v2662
  %v2743 = vunpack.c.h.b16 %v2662
  %v2744 = vunpack.c.l.b16 %v2663
  %v2745 = vunpack.c.h.b16 %v2663
  %v2746 = vunpack.c.l.b16 %v2664
  %v2747 = vunpack.c.h.b16 %v2664
  %v2748 = vunpack.c.l.b16 %v2665
  %v2749 = vunpack.c.h.b16 %v2665
  %v2750 = vunpack.c.l.b16 %v2666
  %v2751 = vunpack.c.h.b16 %v2666
  %v2752 = vunpack.c.l.b16 %v2667
  %v2753 = vunpack.c.h.b16 %v2667
  %v2754 = vunpack.c.l.b16 %v2668
  %v2755 = vunpack.c.h.b16 %v2668
  %v2756 = vunpack.c.l.b16 %v2669
  %v2757 = vunpack.c.h.b16 %v2669
  %v2758 = vunpack.c.l.b16 %v2670
  %v2759 = vunpack.c.h.b16 %v2670
  %v2760 = vunpack.c.l.b16 %v2671
  %v2761 = vunpack.c.h.b16 %v2671
  %v2762 = vunpack.c.l.b16 %v2672
  %v2763 = vunpack.c.h.b16 %v2672
  %v2764 = vunpack.c.l.b16 %v2673
  %v2765 = vunpack.c.h.b16 %v2673
  %v2766 = vunpack.c.l.b16 %v2674
  %v2767 = vunpack.c.h.b16 %v2674
  %v2768 = vunpack.c.l.b16 %v2675
  %v2769 = vunpack.c.h.b16 %v2675
  %v2770 = vunpack.c.l.b16 %v2676
  %v2771 = vunpack.c.h.b16 %v2676
  %v2772 = vunpack.c.l.b16 %v2677
  %v2773 = vunpack.c.h.b16 %v2677
  %v2774 = vpack.c.b16 %v2714, %v2710
  %v2775 = vpack.c.b16 %v2715, %v2711
  %v2776 = vpack.c.b16 %v2716, %v2712
  %v2777 = vpack.c.b16 %v2717, %v2713
  %v2778 = vpack.c.b16 %v2722, %v2718
  %v2779 = vpack.c.b16 %v2723, %v2719
  %v2780 = vpack.c.b16 %v2724, %v2720
  %v2781 = vpack.c.b16 %v2725, %v2721
  %v2782 = vpack.c.b16 %v2730, %v2726
  %v2783 = vpack.c.b16 %v2731, %v2727
  %v2784 = vpack.c.b16 %v2732, %v2728
  %v2785 = vpack.c.b16 %v2733, %v2729
  %v2786 = vpack.c.b16 %v2738, %v2734
  %v2787 = vpack.c.b16 %v2739, %v2735
  %v2788 = vpack.c.b16 %v2740, %v2736
  %v2789 = vpack.c.b16 %v2741, %v2737
  %v2790 = vpack.c.b16 %v2746, %v2742
  %v2791 = vpack.c.b16 %v2747, %v2743
  %v2792 = vpack.c.b16 %v2748, %v2744
  %v2793 = vpack.c.b16 %v2749, %v2745
  %v2794 = vpack.c.b16 %v2754, %v2750
  %v2795 = vpack.c.b16 %v2755, %v2751
  %v2796 = vpack.c.b16 %v2756, %v2752
  %v2797 = vpack.c.b16 %v2757, %v2753
  %v2798 = vpack.c.b16 %v2762, %v2758
  %v2799 = vpack.c.b16 %v2763, %v2759
  %v2800 = vpack.c.b16 %v2764, %v2760
  %v2801 = vpack.c.b16 %v2765, %v2761
  %v2802 = vpack.c.b16 %v2770, %v2766
  %v2803 = vpack.c.b16 %v2771, %v2767
  %v2804 = vpack.c.b16 %v2772, %v2768
  %v2805 = vpack.c.b16 %v2773, %v2769
  %2838 = vmatprep.subr.bf16.mxu0 %v2803
  %2839 = vmatpush1.bf16.msra.mxu0 %v2802
  %2840 = vmatprep.subr.bf16.mxu0 %v2799
  %2841 = vmatpush1.bf16.msra.mxu0 %v2798
  %2842 = vmatprep.subr.bf16.mxu0 %v2795
  %2843 = vmatpush1.bf16.msra.mxu0 %v2794
  %2844 = vmatprep.subr.bf16.mxu0 %v2791
  %2845 = vmatpush1.bf16.msra.mxu0 %v2790
  %2846 = vmatprep.subr.bf16.mxu0 %v2787
  %2847 = vmatpush1.bf16.msra.mxu0 %v2786
  %2848 = vmatprep.subr.bf16.mxu0 %v2783
  %2849 = vmatpush1.bf16.msra.mxu0 %v2782
  %2850 = vmatprep.subr.bf16.mxu0 %v2779
  %2851 = vmatpush1.bf16.msra.mxu0 %v2778
  %2852 = vmatprep.subr.bf16.mxu0 %v2775
  %2853 = vmatpush1.bf16.msra.mxu0 %v2774
  %2854 = vmatprep.subr.bf16.mxu0 0
  %2855 = vmatpush2.bf16.msra.mxu0 0
  %2856 = vmatprep.subr.bf16.mxu0 0
  %2857 = vmatpush2.bf16.msra.mxu0 0
  %2858 = vmatprep.subr.bf16.mxu0 0
  %2859 = vmatpush2.bf16.msra.mxu0 0
  %2860 = vmatprep.subr.bf16.mxu0 0
  %2861 = vmatpush2.bf16.msra.mxu0 0
  %2862 = vmatprep.subr.bf16.mxu0 0
  %2863 = vmatpush2.bf16.msra.mxu0 0
  %2864 = vmatprep.subr.bf16.mxu0 0
  %2865 = vmatpush2.bf16.msra.mxu0 0
  %2866 = vmatprep.subr.bf16.mxu0 0
  %2867 = vmatpush2.bf16.msra.mxu0 0
  %2868 = vmatprep.subr.bf16.mxu0 0
  %2869 = vmatpush2.bf16.msra.mxu0 0
  %2870 = vmatprep.mubr.bf16.mxu0 0
  %2871 = vmatmul.mubr.bf16.gmra.mxu0 %v2645
  %v2872 = vpop.f32.mrf.mxu0
  %v2873 = vadd.f32 0.0, %v2872
  %v2874 = vpop.f32.mrf.mxu0
  %v2875 = vadd.f32 0.0, %v2874
  %v2876 = vpop.f32.mrf.mxu0
  %v2877 = vpop.f32.mrf.mxu0
  %2878 = vdwg.mxu0
  %2879 = vmatprep.subr.bf16.mxu0 %v2805
  %2880 = vmatpush1.bf16.msra.mxu0 %v2804
  %2881 = vmatprep.subr.bf16.mxu0 %v2801
  %2882 = vmatpush1.bf16.msra.mxu0 %v2800
  %2883 = vmatprep.subr.bf16.mxu0 %v2797
  %2884 = vmatpush1.bf16.msra.mxu0 %v2796
  %2885 = vmatprep.subr.bf16.mxu0 %v2793
  %2886 = vmatpush1.bf16.msra.mxu0 %v2792
  %2887 = vmatprep.subr.bf16.mxu0 %v2789
  %2888 = vmatpush1.bf16.msra.mxu0 %v2788
  %2889 = vmatprep.subr.bf16.mxu0 %v2785
  %2890 = vmatpush1.bf16.msra.mxu0 %v2784
  %2891 = vmatprep.subr.bf16.mxu0 %v2781
  %2892 = vmatpush1.bf16.msra.mxu0 %v2780
  %2893 = vmatprep.subr.bf16.mxu0 %v2777
  %2894 = vmatpush1.bf16.msra.mxu0 %v2776
  %2895 = vmatprep.subr.bf16.mxu0 0
  %2896 = vmatpush2.bf16.msra.mxu0 0
  %2897 = vmatprep.subr.bf16.mxu0 0
  %2898 = vmatpush2.bf16.msra.mxu0 0
  %2899 = vmatprep.subr.bf16.mxu0 0
  %2900 = vmatpush2.bf16.msra.mxu0 0
  %2901 = vmatprep.subr.bf16.mxu0 0
  %2902 = vmatpush2.bf16.msra.mxu0 0
  %2903 = vmatprep.subr.bf16.mxu0 0
  %2904 = vmatpush2.bf16.msra.mxu0 0
  %2905 = vmatprep.subr.bf16.mxu0 0
  %2906 = vmatpush2.bf16.msra.mxu0 0
  %2907 = vmatprep.subr.bf16.mxu0 0
  %2908 = vmatpush2.bf16.msra.mxu0 0
  %2909 = vmatprep.subr.bf16.mxu0 0
  %2910 = vmatpush2.bf16.msra.mxu0 0
  %2911 = vmatprep.mubr.bf16.mxu0 0
  %2912 = vmatmul.mubr.bf16.gmra.mxu0 %v2645
  %v2913 = vpop.f32.mrf.mxu0
  %v2914 = vadd.f32 0.0, %v2913
  %v2915 = vpop.f32.mrf.mxu0
  %v2916 = vadd.f32 0.0, %v2915
  %v2917 = vpop.f32.mrf.mxu0
  %v2918 = vpop.f32.mrf.mxu0
  %2919 = vdwg.mxu0
  %v2920 = vadd.f32 %v2641, %v2873
  %v2921 = vadd.f32 %v2642, %v2875
  %v2922 = vadd.f32 %v2643, %v2914
  %v2923 = vadd.f32 %v2644, %v2916
  %v2924 = vxor.u32 %v2920, 2147483648
  %v2925 = vmul.f32 %v2924, 1.442695
  %v2926 = vpow.pop %v2925
  %v2927 = vadd.f32 %v2926, 1.0
  %v2928 = vrcp.pop %v2927
  %v2929 = vmul.f32 1.0, %v2928
  %v2930 = vxor.u32 %v2921, 2147483648
  %v2931 = vmul.f32 %v2930, 1.442695
  %v2932 = vpow.pop %v2931
  %v2933 = vadd.f32 %v2932, 1.0
  %v2934 = vrcp.pop %v2933
  %v2935 = vmul.f32 1.0, %v2934
  %v2936 = vtanh.pop %v2922
  %v2937 = vxor.u32 %v2923, 2147483648
  %v2938 = vmul.f32 %v2937, 1.442695
  %v2939 = vpow.pop %v2938
  %v2940 = vadd.f32 %v2939, 1.0
  %v2941 = vrcp.pop %v2940
  %v2942 = vmul.f32 1.0, %v2941
  %v2943 = vmul.f32 %v2935, %v2633
  %v2944 = vmul.f32 %v2929, %v2936
  %v2945 = vadd.f32 %v2943, %v2944
  %v2946 = vtanh.pop %v2945
  %v2947 = vmul.f32 %v2942, %v2946
  %s2948 = scalar_lea.vmem %s4, 56
  %2949 = vst [vmem:[%s2948] sm:$0xff] %v2947
  %2950 = vst [vmem:[#allocation5] sm:$0xff] %v2947
  %2951 = vst [vmem:[#allocation6] sm:$0xff] %v2945
  // Predicated region
  $region22: #{lstm_model_forward.2} parent=0 // pred_check
    _
  $region23: #{lstm_model_forward.2} parent=0 // pred_check_branch
    %2953 = sbr.rel (0) target = $region25
  $region24: #{lstm_model_forward.2} parent=0 // pred_region
    _
  $region25: #{lstm_model_forward.2} parent=0 // pred_fallthru
    _
  // Predicated region
  $region26: #{lstm_model_forward.2} parent=0 // pred_check
    _
  $region27: #{lstm_model_forward.2} parent=0 // pred_check_branch
    %2955 = sbr.rel (0) target = $region29
  $region28: #{lstm_model_forward.2} parent=0 // pred_region
    _
  $region29: #{lstm_model_forward.2} parent=0 // pred_fallthru
    _
  %2956 = vsyncmov [#allocation7]
  %s2957 = vpop.sfrf %2956
  %p2958 = scmp.eq.s32.totalorder %s2957, 0
  %p2959 = pneg %p2958
  %2961 = shalt.err (%p2959)
  %s2962 = scalar_lea.sflag [#allocation7], 1
  %2963 = vsyncmov %s2962
  %s2964 = vpop.sfrf %2963
  %p2965 = scmp.eq.s32.totalorder %s2964, 0
  %p2966 = pneg %p2965
  %2968 = shalt.err (%p2966)

</llo_original>
